<compile_context>
chip_gen: v7x
topology: tpu7x:2x2x1
jax: 0.10.0
libtpu: 0.0.40
codegen_flags: <defaults>
</compile_context>

<pallas_src>
import functools

import jax
import jax.numpy as jnp
from jax.experimental import pallas as pl
from jax.experimental.pallas import tpu as pltpu


# ----------------------------- in-kernel helpers ----------------------------------------------

def _layernorm(x, gamma, beta, eps=1e-5):
    mean = jnp.mean(x, axis=-1, keepdims=True)
    xc = x - mean
    var = jnp.mean(xc * xc, axis=-1, keepdims=True)
    return xc * jax.lax.rsqrt(var + eps) * gamma + beta


# ----------------------------- fused forward kernel -------------------------------------------

def wave_function_kernel(tok_ref, emb_ref,
                         wqkv_ref, bqkv_ref, wo_ref, bo_ref,
                         g1_ref, be1_ref, w1_ref, b1_ref, w2_ref, b2_ref,
                         g2_ref, be2_ref,
                         tg_ref, tbe_ref, tw1_ref, tb1_ref, tw2_ref, tb2_ref,
                         out_ref, *, heads_num):
    f32 = jnp.float32
    bf16 = jnp.bfloat16

    BT, S = tok_ref.shape                       # batch tile, sites
    P = emb_ref.shape[0]                        # physical dim (leading axis)
    E = emb_ref.shape[2]
    depth = wqkv_ref.shape[0]
    H = heads_num
    dh = E // H
    scale = 1.0 / float(dh) ** 0.5

    # ---- learned-embedding gather: physical dim indexed on a leading axis ---------------------
    tok = tok_ref[...]                                            # (BT, S) int32
    if P == 2:
        e0 = emb_ref[0]                                           # (S, E)
        e1 = emb_ref[1]
        h = e0[None, :, :] + tok.astype(f32)[:, :, None] * (e1 - e0)[None, :, :]
    else:
        h = jnp.zeros((BT, S, E), f32)
        for p in range(P):                                        # tiny static loop
            h = h + (tok[:, :, None] == p).astype(f32) * emb_ref[p][None, :, :]
    h = h.reshape(BT * S, E)                                      # lane-dense token slab

    # ---- per-head column masks (hoisted out of the depth loop) --------------------------------
    col = jax.lax.broadcasted_iota(jnp.int32, (1, 1, E), 2)
    head_masks = [((col >= hh * dh) & (col < (hh + 1) * dh)).astype(f32) for hh in range(H)]

    # ---- transformer encoder layers (post-LN), weights resident in VMEM -----------------------
    for d in range(depth):                                        # static layer loop
        h_b = h.astype(bf16)
        # q/k/v from three leading-dim-indexed (E, E) matmuls -> no lane slicing of a 3E slab
        q = jnp.dot(h_b, wqkv_ref[d, 0].astype(bf16), preferred_element_type=f32) + bqkv_ref[d, 0]
        k = jnp.dot(h_b, wqkv_ref[d, 1].astype(bf16), preferred_element_type=f32) + bqkv_ref[d, 1]
        v = jnp.dot(h_b, wqkv_ref[d, 2].astype(bf16), preferred_element_type=f32) + bqkv_ref[d, 2]

        q3 = (q * scale).reshape(BT, S, E)                        # fold 1/sqrt(dh) into Q
        k3 = k.reshape(BT, S, E).astype(bf16)
        v3 = v.reshape(BT, S, E).astype(bf16)

        # masked-head attention: full-E contractions, zeroed columns kill cross-head terms.
        ctx = jnp.zeros((BT, S, E), f32)
        for hh in range(H):                                       # static head loop, no slicing
            m = head_masks[hh]                                    # (1, 1, E)
            s = jnp.einsum('bqe,bke->bqk', (q3 * m).astype(bf16), k3,
                           preferred_element_type=f32)            # (BT, S, S) == Q_h K_h^T
            s = s - jnp.max(s, axis=-1, keepdims=True)
            p = jnp.exp(s)
            p = p / jnp.sum(p, axis=-1, keepdims=True)            # exact divide (numerics)
            c = jnp.einsum('bqk,bke->bqe', p.astype(bf16), v3,
                           preferred_element_type=f32)            # (BT, S, E)
            ctx = ctx + c * m                                     # keep only this head's columns
        # single output projection with K = E (== concat(heads) @ Wo)
        attn = jnp.dot(ctx.reshape(BT * S, E).astype(bf16), wo_ref[d].astype(bf16),
                       preferred_element_type=f32) + bo_ref[d]

        y = _layernorm(h + attn, g1_ref[d], be1_ref[d])

        f = jnp.dot(y.astype(bf16), w1_ref[d].astype(bf16), preferred_element_type=f32) + b1_ref[d]
        # TODO(synk): activation assumed GELU(tanh); reference Transformers source missing.
        f = jax.nn.gelu(f, approximate=True)
        f = jnp.dot(f.astype(bf16), w2_ref[d].astype(bf16), preferred_element_type=f32) + b2_ref[d]

        h = _layernorm(y + f, g2_ref[d], be2_ref[d])

    # ---- RealTail head: mean-pool over sites -> LayerNorm -> MLP -> scalar ---------------------
    pooled = jnp.mean(h.reshape(BT, S, E), axis=1)                # (BT, E)
    y = _layernorm(pooled, tg_ref[...], tbe_ref[...])
    t = jnp.dot(y, tw1_ref[...], preferred_element_type=f32) + tb1_ref[...]
    t = jax.nn.silu(t)
    # Last-dim-1 output -> masked partial store; negligible at (BT, 1). If the head ever grows
    # (ComplexTail / per-site outputs), stage through a lane-dense (BT, 128) slab instead.
    out_ref[...] = jnp.dot(t, tw2_ref[...], preferred_element_type=f32) + tb2_ref[...]


# ----------------------------- wrapper ----------------------------------------------------------

_PARAM_ORDER = ("embedding",
                "wqkv", "bqkv", "wo", "bo",
                "g1", "be1", "w1", "b1", "w2", "b2", "g2", "be2",
                "tg", "tbe", "tw1", "tb1", "tw2", "tb2")


def _choose_b_tile(batch, seq, target_rows=512):
    """~256-512 rows/step for v6e/v7x's 256x256 MXU; pass b_tile explicitly for v5e (128-256)."""
    bt = max(1, target_rows // max(seq, 1))
    if bt >= batch:
        return batch                                   # single step (e.g. toy B=2)
    return max(8, (bt // 8) * 8)                       # keep the batch block sublane-aligned


def wave_function_forward(x_indices, params, *, heads_num, b_tile=None, vmem_limit_bytes=None):
    # x_indices: (B, L1, L2, orbit_num) int configuration, values in [0, physical_dim)
    B = x_indices.shape[0]
    tokens = x_indices.reshape(B, -1).astype(jnp.int32)           # (B, S) row-major sites
    S = tokens.shape[1]
    if b_tile is None:
        b_tile = _choose_b_tile(B, S)
    grid = (pl.cdiv(B, b_tile),)

    weight_args = [params[k] for k in _PARAM_ORDER]

    def _const_spec(a):
        zero_idx = (0,) * a.ndim                       # same block every step -> DMA'd once
        return pl.BlockSpec(a.shape, lambda b, _z=zero_idx: _z,
                            memory_space=pltpu.MemorySpace.VMEM)

    in_specs = [pl.BlockSpec((b_tile, S), lambda b: (b, 0),
                             memory_space=pltpu.MemorySpace.VMEM)]
    in_specs += [_const_spec(a) for a in weight_args]
    out_specs = pl.BlockSpec((b_tile, 1), lambda b: (b, 0),
                             memory_space=pltpu.MemorySpace.VMEM)

    if vmem_limit_bytes is None:
        E = params["embedding"].shape[-1]
        F = params["w1"].shape[-1]
        weight_bytes = sum(int(a.size) * a.dtype.itemsize for a in weight_args)
        rows = b_tile * S
        act_bytes = rows * (8 * E + 2 * F + 2 * S) * 4            # rough f32 per-step slab bound
        # bounded for v7x (64 MiB physical VMEM); demo sizes end up at the 16 MiB floor.
        vmem_limit_bytes = int(min(48 * 1024 * 1024,
                                   max(16 * 1024 * 1024, 4 * (weight_bytes + act_bytes))))

    return pl.pallas_call(
        functools.partial(wave_function_kernel, heads_num=heads_num),
        grid=grid,
        in_specs=in_specs,
        out_specs=out_specs,
        out_shape=jax.ShapeDtypeStruct((B, 1), jnp.float32),
        compiler_params=pltpu.CompilerParams(
            dimension_semantics=("parallel",),        # v7x: two TensorCores split the batch axis
            vmem_limit_bytes=vmem_limit_bytes),
    )(tokens, *weight_args)


# ----------------------------- parameter construction ------------------------------------------

def init_params(key, *, L1, L2, orbit_num, physical_dim, embedding_dim,
                heads_num, feed_forward_dim, tail_dim, depth):
    E, F, T = embedding_dim, feed_forward_dim, tail_dim
    S = L1 * L2 * orbit_num
    keys = iter(jax.random.split(key, 8 + 8 * depth))

    def nrm(shape, scale=0.02):
        return (scale * jax.random.normal(next(keys), shape)).astype(jnp.float32)

    zeros = lambda *s: jnp.zeros(s, jnp.float32)
    ones = lambda *s: jnp.ones(s, jnp.float32)

    # Embedding.parameter = randn([L1, L2, orbit_num, P, E]) -> (S, P, E) -> (P, S, E)
    # so the kernel indexes the physical dim on a leading axis (no strided sublane reads).
    emb = jax.random.normal(
        next(keys), (L1, L2, orbit_num, physical_dim, E)).astype(jnp.float32)
    emb = jnp.transpose(emb.reshape(S, physical_dim, E), (1, 0, 2))

    stack = lambda shape: jnp.stack([nrm(shape) for _ in range(depth)])

    params = {
        "embedding": emb,                                          # (P, S, E) f32
        # f32 master weights; cast to bf16 only at each matmul inside the kernel.
        "wqkv": jnp.stack([jnp.stack([nrm((E, E)) for _ in range(3)])
                           for _ in range(depth)]),                # (depth, 3, E, E)
        "bqkv": zeros(depth, 3, 1, E),
        "wo":   stack((E, E)),          "bo":   zeros(depth, 1, E),
        "g1":   ones(depth, 1, E),      "be1":  zeros(depth, 1, E),
        "w1":   stack((E, F)),          "b1":   zeros(depth, 1, F),
        "w2":   stack((F, E)),          "b2":   zeros(depth, 1, E),
        "g2":   ones(depth, 1, E),      "be2":  zeros(depth, 1, E),
        # RealTail head (tiny matmuls, kept f32)
        "tg":   ones(1, E),             "tbe":  zeros(1, E),
        "tw1":  nrm((E, T)),            "tb1":  zeros(1, T),
        "tw2":  nrm((T, 1)),            "tb2":  zeros(1, 1),
    }
    return params


# ----------------------------- main -------------------------------------------------------------

if __name__ == "__main__":
    cfg = dict(L1=4, L2=4, orbit_num=1, physical_dim=2, embedding_dim=32,
               heads_num=4, feed_forward_dim=64, tail_dim=16, depth=2)
    batch = 2

    key = jax.random.PRNGKey(0)
    k_param, k_x = jax.random.split(key)
    params = init_params(k_param, **cfg)

    x = jax.random.randint(
        k_x, (batch, cfg["L1"], cfg["L2"], cfg["orbit_num"]),
        minval=0, maxval=cfg["physical_dim"], dtype=jnp.int32)

    fwd = jax.jit(functools.partial(wave_function_forward, heads_num=cfg["heads_num"]))
    out = jax.block_until_ready(fwd(x, params))

    assert out.shape == (batch, 1)
    assert bool(jnp.all(jnp.isfinite(out)))
    print("KERNEL_OK")
</pallas_src>

<mosaic_0001>
module attributes {stable_mosaic.version = 11 : i64} {
  func.func @wave_function_kernel(%arg0: i32, %arg1: memref<2x16xi32, #tpu.memory_space<vmem>>, %arg2: memref<2x16x32xf32, #tpu.memory_space<vmem>>, %arg3: memref<2x3x32x32xf32, #tpu.memory_space<vmem>>, %arg4: memref<2x3x1x32xf32, #tpu.memory_space<vmem>>, %arg5: memref<2x32x32xf32, #tpu.memory_space<vmem>>, %arg6: memref<2x1x32xf32, #tpu.memory_space<vmem>>, %arg7: memref<2x1x32xf32, #tpu.memory_space<vmem>>, %arg8: memref<2x1x32xf32, #tpu.memory_space<vmem>>, %arg9: memref<2x32x64xf32, #tpu.memory_space<vmem>>, %arg10: memref<2x1x64xf32, #tpu.memory_space<vmem>>, %arg11: memref<2x64x32xf32, #tpu.memory_space<vmem>>, %arg12: memref<2x1x32xf32, #tpu.memory_space<vmem>>, %arg13: memref<2x1x32xf32, #tpu.memory_space<vmem>>, %arg14: memref<2x1x32xf32, #tpu.memory_space<vmem>>, %arg15: memref<1x32xf32, #tpu.memory_space<vmem>>, %arg16: memref<1x32xf32, #tpu.memory_space<vmem>>, %arg17: memref<32x16xf32, #tpu.memory_space<vmem>>, %arg18: memref<1x16xf32, #tpu.memory_space<vmem>>, %arg19: memref<16x1xf32, #tpu.memory_space<vmem>>, %arg20: memref<1x1xf32, #tpu.memory_space<vmem>>, %arg21: memref<2x1xf32, #tpu.memory_space<vmem>>) attributes {dimension_semantics = [#tpu.dimension_semantics<parallel>], iteration_bounds = array<i64: 1>, scalar_prefetch = 0 : i64, scratch_operands = 0 : i64, tpu.core_type = #tpu.core_type<tc>, window_params = [{transform_indices = @transform_0, window_bounds = array<i64: 2, 16>}, {pipeline_mode = #tpu.pipeline_mode<synchronous>, transform_indices = @transform_1, window_bounds = array<i64: 2, 16, 32>}, {pipeline_mode = #tpu.pipeline_mode<synchronous>, transform_indices = @transform_2, window_bounds = array<i64: 2, 3, 32, 32>}, {pipeline_mode = #tpu.pipeline_mode<synchronous>, transform_indices = @transform_3, window_bounds = array<i64: 2, 3, 1, 32>}, {pipeline_mode = #tpu.pipeline_mode<synchronous>, transform_indices = @transform_4, window_bounds = array<i64: 2, 32, 32>}, {pipeline_mode = #tpu.pipeline_mode<synchronous>, transform_indices = @transform_5, window_bounds = array<i64: 2, 1, 32>}, {pipeline_mode = #tpu.pipeline_mode<synchronous>, transform_indices = @transform_6, window_bounds = array<i64: 2, 1, 32>}, {pipeline_mode = #tpu.pipeline_mode<synchronous>, transform_indices = @transform_7, window_bounds = array<i64: 2, 1, 32>}, {pipeline_mode = #tpu.pipeline_mode<synchronous>, transform_indices = @transform_8, window_bounds = array<i64: 2, 32, 64>}, {pipeline_mode = #tpu.pipeline_mode<synchronous>, transform_indices = @transform_9, window_bounds = array<i64: 2, 1, 64>}, {pipeline_mode = #tpu.pipeline_mode<synchronous>, transform_indices = @transform_10, window_bounds = array<i64: 2, 64, 32>}, {pipeline_mode = #tpu.pipeline_mode<synchronous>, transform_indices = @transform_11, window_bounds = array<i64: 2, 1, 32>}, {pipeline_mode = #tpu.pipeline_mode<synchronous>, transform_indices = @transform_12, window_bounds = array<i64: 2, 1, 32>}, {pipeline_mode = #tpu.pipeline_mode<synchronous>, transform_indices = @transform_13, window_bounds = array<i64: 2, 1, 32>}, {pipeline_mode = #tpu.pipeline_mode<synchronous>, transform_indices = @transform_14, window_bounds = array<i64: 1, 32>}, {pipeline_mode = #tpu.pipeline_mode<synchronous>, transform_indices = @transform_15, window_bounds = array<i64: 1, 32>}, {pipeline_mode = #tpu.pipeline_mode<synchronous>, transform_indices = @transform_16, window_bounds = array<i64: 32, 16>}, {pipeline_mode = #tpu.pipeline_mode<synchronous>, transform_indices = @transform_17, window_bounds = array<i64: 1, 16>}, {pipeline_mode = #tpu.pipeline_mode<synchronous>, transform_indices = @transform_18, window_bounds = array<i64: 16, 1>}, {pipeline_mode = #tpu.pipeline_mode<synchronous>, transform_indices = @transform_19, window_bounds = array<i64: 1, 1>}, {transform_indices = @transform_20, window_bounds = array<i64: 2, 1>}]} {
    %c0 = arith.constant 0 : index
    %c0_0 = arith.constant 0 : index
    %0 = vector.load %arg1[%c0, %c0_0] : memref<2x16xi32, #tpu.memory_space<vmem>>, vector<2x16xi32>
    %c0_1 = arith.constant 0 : index
    %c0_2 = arith.constant 0 : index
    %c0_3 = arith.constant 0 : index
    %1 = vector.load %arg2[%c0_1, %c0_2, %c0_3] : memref<2x16x32xf32, #tpu.memory_space<vmem>>, vector<1x16x32xf32>
    %2 = vector.shape_cast %1 : vector<1x16x32xf32> to vector<16x32xf32>
    %c1 = arith.constant 1 : index
    %c0_4 = arith.constant 0 : index
    %c0_5 = arith.constant 0 : index
    %3 = vector.load %arg2[%c1, %c0_4, %c0_5] : memref<2x16x32xf32, #tpu.memory_space<vmem>>, vector<1x16x32xf32>
    %4 = vector.shape_cast %3 : vector<1x16x32xf32> to vector<16x32xf32>
    %5 = vector.shape_cast %2 : vector<16x32xf32> to vector<1x16x32xf32>
    %6 = arith.sitofp %0 : vector<2x16xi32> to vector<2x16xf32>
    %7 = vector.shape_cast %6 : vector<2x16xf32> to vector<2x16x1xf32>
    %8 = arith.subf %4, %2 : vector<16x32xf32>
    %9 = vector.shape_cast %8 : vector<16x32xf32> to vector<1x16x32xf32>
    %10 = vector.broadcast %7 : vector<2x16x1xf32> to vector<2x16x32xf32>
    %11 = vector.broadcast %9 : vector<1x16x32xf32> to vector<2x16x32xf32>
    %12 = arith.mulf %10, %11 : vector<2x16x32xf32>
    %13 = vector.broadcast %5 : vector<1x16x32xf32> to vector<2x16x32xf32>
    %14 = arith.addf %13, %12 : vector<2x16x32xf32>
    %15 = vector.shape_cast %14 : vector<2x16x32xf32> to vector<32x32xf32>
    %16 = tpu.iota {dimensions = array<i32: 2>} : vector<1x1x32xi32>
    %c0_i32 = arith.constant 0 : i32
    %17 = vector.broadcast %c0_i32 : i32 to vector<1x1x32xi32>
    %18 = arith.cmpi sge, %16, %17 : vector<1x1x32xi32>
    %c8_i32 = arith.constant 8 : i32
    %19 = vector.broadcast %c8_i32 : i32 to vector<1x1x32xi32>
    %20 = arith.cmpi slt, %16, %19 : vector<1x1x32xi32>
    %21 = arith.andi %18, %20 : vector<1x1x32xi1>
    %22 = arith.extui %21 : vector<1x1x32xi1> to vector<1x1x32xi32>
    %23 = arith.sitofp %22 : vector<1x1x32xi32> to vector<1x1x32xf32>
    %c8_i32_6 = arith.constant 8 : i32
    %24 = vector.broadcast %c8_i32_6 : i32 to vector<1x1x32xi32>
    %25 = arith.cmpi sge, %16, %24 : vector<1x1x32xi32>
    %c16_i32 = arith.constant 16 : i32
    %26 = vector.broadcast %c16_i32 : i32 to vector<1x1x32xi32>
    %27 = arith.cmpi slt, %16, %26 : vector<1x1x32xi32>
    %28 = arith.andi %25, %27 : vector<1x1x32xi1>
    %29 = arith.extui %28 : vector<1x1x32xi1> to vector<1x1x32xi32>
    %30 = arith.sitofp %29 : vector<1x1x32xi32> to vector<1x1x32xf32>
    %c16_i32_7 = arith.constant 16 : i32
    %31 = vector.broadcast %c16_i32_7 : i32 to vector<1x1x32xi32>
    %32 = arith.cmpi sge, %16, %31 : vector<1x1x32xi32>
    %c24_i32 = arith.constant 24 : i32
    %33 = vector.broadcast %c24_i32 : i32 to vector<1x1x32xi32>
    %34 = arith.cmpi slt, %16, %33 : vector<1x1x32xi32>
    %35 = arith.andi %32, %34 : vector<1x1x32xi1>
    %36 = arith.extui %35 : vector<1x1x32xi1> to vector<1x1x32xi32>
    %37 = arith.sitofp %36 : vector<1x1x32xi32> to vector<1x1x32xf32>
    %c24_i32_8 = arith.constant 24 : i32
    %38 = vector.broadcast %c24_i32_8 : i32 to vector<1x1x32xi32>
    %39 = arith.cmpi sge, %16, %38 : vector<1x1x32xi32>
    %c32_i32 = arith.constant 32 : i32
    %40 = vector.broadcast %c32_i32 : i32 to vector<1x1x32xi32>
    %41 = arith.cmpi slt, %16, %40 : vector<1x1x32xi32>
    %42 = arith.andi %39, %41 : vector<1x1x32xi1>
    %43 = arith.extui %42 : vector<1x1x32xi1> to vector<1x1x32xi32>
    %44 = arith.sitofp %43 : vector<1x1x32xi32> to vector<1x1x32xf32>
    %45 = arith.truncf %15 : vector<32x32xf32> to vector<32x32xbf16>
    %c0_9 = arith.constant 0 : index
    %c0_10 = arith.constant 0 : index
    %c0_11 = arith.constant 0 : index
    %c0_12 = arith.constant 0 : index
    %46 = vector.load %arg3[%c0_9, %c0_10, %c0_11, %c0_12] : memref<2x3x32x32xf32, #tpu.memory_space<vmem>>, vector<1x1x32x32xf32>
    %47 = vector.shape_cast %46 : vector<1x1x32x32xf32> to vector<32x32xf32>
    %48 = arith.truncf %47 : vector<32x32xf32> to vector<32x32xbf16>
    %cst = arith.constant dense<0.000000e+00> : vector<32x32xf32>
    %49 = tpu.matmul %45, %48, %cst {dimension_numbers = #tpu.dot_dimension_numbers<[1], [0], [0], [1], [0, 0, 1, 1], [], []>} : vector<32x32xbf16>, vector<32x32xbf16>, vector<32x32xf32> -> vector<32x32xf32>
    %c0_13 = arith.constant 0 : index
    %c0_14 = arith.constant 0 : index
    %c0_15 = arith.constant 0 : index
    %c0_16 = arith.constant 0 : index
    %50 = vector.load %arg4[%c0_13, %c0_14, %c0_15, %c0_16] : memref<2x3x1x32xf32, #tpu.memory_space<vmem>>, vector<1x1x1x32xf32>
    %51 = vector.shape_cast %50 : vector<1x1x1x32xf32> to vector<1x32xf32>
    %52 = vector.broadcast %51 : vector<1x32xf32> to vector<32x32xf32>
    %53 = arith.addf %49, %52 : vector<32x32xf32>
    %c0_17 = arith.constant 0 : index
    %c1_18 = arith.constant 1 : index
    %c0_19 = arith.constant 0 : index
    %c0_20 = arith.constant 0 : index
    %54 = vector.load %arg3[%c0_17, %c1_18, %c0_19, %c0_20] : memref<2x3x32x32xf32, #tpu.memory_space<vmem>>, vector<1x1x32x32xf32>
    %55 = vector.shape_cast %54 : vector<1x1x32x32xf32> to vector<32x32xf32>
    %56 = arith.truncf %55 : vector<32x32xf32> to vector<32x32xbf16>
    %cst_21 = arith.constant dense<0.000000e+00> : vector<32x32xf32>
    %57 = tpu.matmul %45, %56, %cst_21 {dimension_numbers = #tpu.dot_dimension_numbers<[1], [0], [0], [1], [0, 0, 1, 1], [], []>} : vector<32x32xbf16>, vector<32x32xbf16>, vector<32x32xf32> -> vector<32x32xf32>
    %c0_22 = arith.constant 0 : index
    %c1_23 = arith.constant 1 : index
    %c0_24 = arith.constant 0 : index
    %c0_25 = arith.constant 0 : index
    %58 = vector.load %arg4[%c0_22, %c1_23, %c0_24, %c0_25] : memref<2x3x1x32xf32, #tpu.memory_space<vmem>>, vector<1x1x1x32xf32>
    %59 = vector.shape_cast %58 : vector<1x1x1x32xf32> to vector<1x32xf32>
    %60 = vector.broadcast %59 : vector<1x32xf32> to vector<32x32xf32>
    %61 = arith.addf %57, %60 : vector<32x32xf32>
    %c0_26 = arith.constant 0 : index
    %c2 = arith.constant 2 : index
    %c0_27 = arith.constant 0 : index
    %c0_28 = arith.constant 0 : index
    %62 = vector.load %arg3[%c0_26, %c2, %c0_27, %c0_28] : memref<2x3x32x32xf32, #tpu.memory_space<vmem>>, vector<1x1x32x32xf32>
    %63 = vector.shape_cast %62 : vector<1x1x32x32xf32> to vector<32x32xf32>
    %64 = arith.truncf %63 : vector<32x32xf32> to vector<32x32xbf16>
    %cst_29 = arith.constant dense<0.000000e+00> : vector<32x32xf32>
    %65 = tpu.matmul %45, %64, %cst_29 {dimension_numbers = #tpu.dot_dimension_numbers<[1], [0], [0], [1], [0, 0, 1, 1], [], []>} : vector<32x32xbf16>, vector<32x32xbf16>, vector<32x32xf32> -> vector<32x32xf32>
    %c0_30 = arith.constant 0 : index
    %c2_31 = arith.constant 2 : index
    %c0_32 = arith.constant 0 : index
    %c0_33 = arith.constant 0 : index
    %66 = vector.load %arg4[%c0_30, %c2_31, %c0_32, %c0_33] : memref<2x3x1x32xf32, #tpu.memory_space<vmem>>, vector<1x1x1x32xf32>
    %67 = vector.shape_cast %66 : vector<1x1x1x32xf32> to vector<1x32xf32>
    %68 = vector.broadcast %67 : vector<1x32xf32> to vector<32x32xf32>
    %69 = arith.addf %65, %68 : vector<32x32xf32>
    %cst_34 = arith.constant 0.353553385 : f32
    %70 = vector.broadcast %cst_34 : f32 to vector<32x32xf32>
    %71 = arith.mulf %53, %70 : vector<32x32xf32>
    %72 = vector.shape_cast %71 : vector<32x32xf32> to vector<2x16x32xf32>
    %73 = vector.shape_cast %61 : vector<32x32xf32> to vector<2x16x32xf32>
    %74 = arith.truncf %73 : vector<2x16x32xf32> to vector<2x16x32xbf16>
    %75 = vector.shape_cast %69 : vector<32x32xf32> to vector<2x16x32xf32>
    %76 = arith.truncf %75 : vector<2x16x32xf32> to vector<2x16x32xbf16>
    %cst_35 = arith.constant 0.000000e+00 : f32
    %77 = vector.broadcast %cst_35 : f32 to vector<2x16x32xf32>
    %78 = vector.broadcast %23 : vector<1x1x32xf32> to vector<2x16x32xf32>
    %79 = arith.mulf %72, %78 : vector<2x16x32xf32>
    %80 = arith.truncf %79 : vector<2x16x32xf32> to vector<2x16x32xbf16>
    "tpu.trace_start"() <{level = 10 : i32, message = "bqe,bke->bqk"}> : () -> ()
    %cst_36 = arith.constant dense<0.000000e+00> : vector<2x16x16xf32>
    %81 = tpu.matmul %80, %74, %cst_36 {dimension_numbers = #tpu.dot_dimension_numbers<[2], [2], [1], [1], [0, 0, 0, 1, 1, 1], [0], [0]>} : vector<2x16x32xbf16>, vector<2x16x32xbf16>, vector<2x16x16xf32> -> vector<2x16x16xf32>
    "tpu.trace_stop"() : () -> ()
    %cst_37 = arith.constant dense<0xFF800000> : vector<2x16xf32>
    %82 = vector.multi_reduction <maximumf>, %81, %cst_37 [2] : vector<2x16x16xf32> to vector<2x16xf32>
    %83 = vector.shape_cast %82 : vector<2x16xf32> to vector<2x16x1xf32>
    %84 = vector.broadcast %83 : vector<2x16x1xf32> to vector<2x16x16xf32>
    %85 = arith.subf %81, %84 : vector<2x16x16xf32>
    %86 = math.exp %85 : vector<2x16x16xf32>
    %cst_38 = arith.constant dense<0.000000e+00> : vector<2x16xf32>
    %87 = vector.multi_reduction <add>, %86, %cst_38 [2] : vector<2x16x16xf32> to vector<2x16xf32>
    %88 = vector.shape_cast %87 : vector<2x16xf32> to vector<2x16x1xf32>
    %89 = vector.broadcast %88 : vector<2x16x1xf32> to vector<2x16x16xf32>
    %90 = arith.divf %86, %89 : vector<2x16x16xf32>
    %91 = arith.truncf %90 : vector<2x16x16xf32> to vector<2x16x16xbf16>
    "tpu.trace_start"() <{level = 10 : i32, message = "bqk,bke->bqe"}> : () -> ()
    %cst_39 = arith.constant dense<0.000000e+00> : vector<2x16x32xf32>
    %92 = tpu.matmul %91, %76, %cst_39 {dimension_numbers = #tpu.dot_dimension_numbers<[2], [1], [1], [2], [0, 0, 0, 1, 1, 2], [0], [0]>} : vector<2x16x16xbf16>, vector<2x16x32xbf16>, vector<2x16x32xf32> -> vector<2x16x32xf32>
    "tpu.trace_stop"() : () -> ()
    %93 = vector.broadcast %23 : vector<1x1x32xf32> to vector<2x16x32xf32>
    %94 = arith.mulf %92, %93 : vector<2x16x32xf32>
    %95 = arith.addf %77, %94 : vector<2x16x32xf32>
    %96 = vector.broadcast %30 : vector<1x1x32xf32> to vector<2x16x32xf32>
    %97 = arith.mulf %72, %96 : vector<2x16x32xf32>
    %98 = arith.truncf %97 : vector<2x16x32xf32> to vector<2x16x32xbf16>
    "tpu.trace_start"() <{level = 10 : i32, message = "bqe,bke->bqk"}> : () -> ()
    %cst_40 = arith.constant dense<0.000000e+00> : vector<2x16x16xf32>
    %99 = tpu.matmul %98, %74, %cst_40 {dimension_numbers = #tpu.dot_dimension_numbers<[2], [2], [1], [1], [0, 0, 0, 1, 1, 1], [0], [0]>} : vector<2x16x32xbf16>, vector<2x16x32xbf16>, vector<2x16x16xf32> -> vector<2x16x16xf32>
    "tpu.trace_stop"() : () -> ()
    %cst_41 = arith.constant dense<0xFF800000> : vector<2x16xf32>
    %100 = vector.multi_reduction <maximumf>, %99, %cst_41 [2] : vector<2x16x16xf32> to vector<2x16xf32>
    %101 = vector.shape_cast %100 : vector<2x16xf32> to vector<2x16x1xf32>
    %102 = vector.broadcast %101 : vector<2x16x1xf32> to vector<2x16x16xf32>
    %103 = arith.subf %99, %102 : vector<2x16x16xf32>
    %104 = math.exp %103 : vector<2x16x16xf32>
    %cst_42 = arith.constant dense<0.000000e+00> : vector<2x16xf32>
    %105 = vector.multi_reduction <add>, %104, %cst_42 [2] : vector<2x16x16xf32> to vector<2x16xf32>
    %106 = vector.shape_cast %105 : vector<2x16xf32> to vector<2x16x1xf32>
    %107 = vector.broadcast %106 : vector<2x16x1xf32> to vector<2x16x16xf32>
    %108 = arith.divf %104, %107 : vector<2x16x16xf32>
    %109 = arith.truncf %108 : vector<2x16x16xf32> to vector<2x16x16xbf16>
    "tpu.trace_start"() <{level = 10 : i32, message = "bqk,bke->bqe"}> : () -> ()
    %cst_43 = arith.constant dense<0.000000e+00> : vector<2x16x32xf32>
    %110 = tpu.matmul %109, %76, %cst_43 {dimension_numbers = #tpu.dot_dimension_numbers<[2], [1], [1], [2], [0, 0, 0, 1, 1, 2], [0], [0]>} : vector<2x16x16xbf16>, vector<2x16x32xbf16>, vector<2x16x32xf32> -> vector<2x16x32xf32>
    "tpu.trace_stop"() : () -> ()
    %111 = vector.broadcast %30 : vector<1x1x32xf32> to vector<2x16x32xf32>
    %112 = arith.mulf %110, %111 : vector<2x16x32xf32>
    %113 = arith.addf %95, %112 : vector<2x16x32xf32>
    %114 = vector.broadcast %37 : vector<1x1x32xf32> to vector<2x16x32xf32>
    %115 = arith.mulf %72, %114 : vector<2x16x32xf32>
    %116 = arith.truncf %115 : vector<2x16x32xf32> to vector<2x16x32xbf16>
    "tpu.trace_start"() <{level = 10 : i32, message = "bqe,bke->bqk"}> : () -> ()
    %cst_44 = arith.constant dense<0.000000e+00> : vector<2x16x16xf32>
    %117 = tpu.matmul %116, %74, %cst_44 {dimension_numbers = #tpu.dot_dimension_numbers<[2], [2], [1], [1], [0, 0, 0, 1, 1, 1], [0], [0]>} : vector<2x16x32xbf16>, vector<2x16x32xbf16>, vector<2x16x16xf32> -> vector<2x16x16xf32>
    "tpu.trace_stop"() : () -> ()
    %cst_45 = arith.constant dense<0xFF800000> : vector<2x16xf32>
    %118 = vector.multi_reduction <maximumf>, %117, %cst_45 [2] : vector<2x16x16xf32> to vector<2x16xf32>
    %119 = vector.shape_cast %118 : vector<2x16xf32> to vector<2x16x1xf32>
    %120 = vector.broadcast %119 : vector<2x16x1xf32> to vector<2x16x16xf32>
    %121 = arith.subf %117, %120 : vector<2x16x16xf32>
    %122 = math.exp %121 : vector<2x16x16xf32>
    %cst_46 = arith.constant dense<0.000000e+00> : vector<2x16xf32>
    %123 = vector.multi_reduction <add>, %122, %cst_46 [2] : vector<2x16x16xf32> to vector<2x16xf32>
    %124 = vector.shape_cast %123 : vector<2x16xf32> to vector<2x16x1xf32>
    %125 = vector.broadcast %124 : vector<2x16x1xf32> to vector<2x16x16xf32>
    %126 = arith.divf %122, %125 : vector<2x16x16xf32>
    %127 = arith.truncf %126 : vector<2x16x16xf32> to vector<2x16x16xbf16>
    "tpu.trace_start"() <{level = 10 : i32, message = "bqk,bke->bqe"}> : () -> ()
    %cst_47 = arith.constant dense<0.000000e+00> : vector<2x16x32xf32>
    %128 = tpu.matmul %127, %76, %cst_47 {dimension_numbers = #tpu.dot_dimension_numbers<[2], [1], [1], [2], [0, 0, 0, 1, 1, 2], [0], [0]>} : vector<2x16x16xbf16>, vector<2x16x32xbf16>, vector<2x16x32xf32> -> vector<2x16x32xf32>
    "tpu.trace_stop"() : () -> ()
    %129 = vector.broadcast %37 : vector<1x1x32xf32> to vector<2x16x32xf32>
    %130 = arith.mulf %128, %129 : vector<2x16x32xf32>
    %131 = arith.addf %113, %130 : vector<2x16x32xf32>
    %132 = vector.broadcast %44 : vector<1x1x32xf32> to vector<2x16x32xf32>
    %133 = arith.mulf %72, %132 : vector<2x16x32xf32>
    %134 = arith.truncf %133 : vector<2x16x32xf32> to vector<2x16x32xbf16>
    "tpu.trace_start"() <{level = 10 : i32, message = "bqe,bke->bqk"}> : () -> ()
    %cst_48 = arith.constant dense<0.000000e+00> : vector<2x16x16xf32>
    %135 = tpu.matmul %134, %74, %cst_48 {dimension_numbers = #tpu.dot_dimension_numbers<[2], [2], [1], [1], [0, 0, 0, 1, 1, 1], [0], [0]>} : vector<2x16x32xbf16>, vector<2x16x32xbf16>, vector<2x16x16xf32> -> vector<2x16x16xf32>
    "tpu.trace_stop"() : () -> ()
    %cst_49 = arith.constant dense<0xFF800000> : vector<2x16xf32>
    %136 = vector.multi_reduction <maximumf>, %135, %cst_49 [2] : vector<2x16x16xf32> to vector<2x16xf32>
    %137 = vector.shape_cast %136 : vector<2x16xf32> to vector<2x16x1xf32>
    %138 = vector.broadcast %137 : vector<2x16x1xf32> to vector<2x16x16xf32>
    %139 = arith.subf %135, %138 : vector<2x16x16xf32>
    %140 = math.exp %139 : vector<2x16x16xf32>
    %cst_50 = arith.constant dense<0.000000e+00> : vector<2x16xf32>
    %141 = vector.multi_reduction <add>, %140, %cst_50 [2] : vector<2x16x16xf32> to vector<2x16xf32>
    %142 = vector.shape_cast %141 : vector<2x16xf32> to vector<2x16x1xf32>
    %143 = vector.broadcast %142 : vector<2x16x1xf32> to vector<2x16x16xf32>
    %144 = arith.divf %140, %143 : vector<2x16x16xf32>
    %145 = arith.truncf %144 : vector<2x16x16xf32> to vector<2x16x16xbf16>
    "tpu.trace_start"() <{level = 10 : i32, message = "bqk,bke->bqe"}> : () -> ()
    %cst_51 = arith.constant dense<0.000000e+00> : vector<2x16x32xf32>
    %146 = tpu.matmul %145, %76, %cst_51 {dimension_numbers = #tpu.dot_dimension_numbers<[2], [1], [1], [2], [0, 0, 0, 1, 1, 2], [0], [0]>} : vector<2x16x16xbf16>, vector<2x16x32xbf16>, vector<2x16x32xf32> -> vector<2x16x32xf32>
    "tpu.trace_stop"() : () -> ()
    %147 = vector.broadcast %44 : vector<1x1x32xf32> to vector<2x16x32xf32>
    %148 = arith.mulf %146, %147 : vector<2x16x32xf32>
    %149 = arith.addf %131, %148 : vector<2x16x32xf32>
    %150 = vector.shape_cast %149 : vector<2x16x32xf32> to vector<32x32xf32>
    %151 = arith.truncf %150 : vector<32x32xf32> to vector<32x32xbf16>
    %c0_52 = arith.constant 0 : index
    %c0_53 = arith.constant 0 : index
    %c0_54 = arith.constant 0 : index
    %152 = vector.load %arg5[%c0_52, %c0_53, %c0_54] : memref<2x32x32xf32, #tpu.memory_space<vmem>>, vector<1x32x32xf32>
    %153 = vector.shape_cast %152 : vector<1x32x32xf32> to vector<32x32xf32>
    %154 = arith.truncf %153 : vector<32x32xf32> to vector<32x32xbf16>
    %cst_55 = arith.constant dense<0.000000e+00> : vector<32x32xf32>
    %155 = tpu.matmul %151, %154, %cst_55 {dimension_numbers = #tpu.dot_dimension_numbers<[1], [0], [0], [1], [0, 0, 1, 1], [], []>} : vector<32x32xbf16>, vector<32x32xbf16>, vector<32x32xf32> -> vector<32x32xf32>
    %c0_56 = arith.constant 0 : index
    %c0_57 = arith.constant 0 : index
    %c0_58 = arith.constant 0 : index
    %156 = vector.load %arg6[%c0_56, %c0_57, %c0_58] : memref<2x1x32xf32, #tpu.memory_space<vmem>>, vector<1x1x32xf32>
    %157 = vector.shape_cast %156 : vector<1x1x32xf32> to vector<1x32xf32>
    %158 = vector.broadcast %157 : vector<1x32xf32> to vector<32x32xf32>
    %159 = arith.addf %155, %158 : vector<32x32xf32>
    %160 = arith.addf %15, %159 : vector<32x32xf32>
    %c0_59 = arith.constant 0 : index
    %c0_60 = arith.constant 0 : index
    %c0_61 = arith.constant 0 : index
    %161 = vector.load %arg7[%c0_59, %c0_60, %c0_61] : memref<2x1x32xf32, #tpu.memory_space<vmem>>, vector<1x1x32xf32>
    %162 = vector.shape_cast %161 : vector<1x1x32xf32> to vector<1x32xf32>
    %c0_62 = arith.constant 0 : index
    %c0_63 = arith.constant 0 : index
    %c0_64 = arith.constant 0 : index
    %163 = vector.load %arg8[%c0_62, %c0_63, %c0_64] : memref<2x1x32xf32, #tpu.memory_space<vmem>>, vector<1x1x32xf32>
    %164 = vector.shape_cast %163 : vector<1x1x32xf32> to vector<1x32xf32>
    %cst_65 = arith.constant dense<0.000000e+00> : vector<32xf32>
    %165 = vector.multi_reduction <add>, %160, %cst_65 [1] : vector<32x32xf32> to vector<32xf32>
    %166 = vector.shape_cast %165 : vector<32xf32> to vector<32x1xf32>
    %cst_66 = arith.constant 3.200000e+01 : f32
    %167 = vector.broadcast %cst_66 : f32 to vector<32x1xf32>
    %168 = arith.divf %166, %167 : vector<32x1xf32>
    %169 = vector.broadcast %168 : vector<32x1xf32> to vector<32x32xf32>
    %170 = arith.subf %160, %169 : vector<32x32xf32>
    %171 = arith.mulf %170, %170 : vector<32x32xf32>
    %cst_67 = arith.constant dense<0.000000e+00> : vector<32xf32>
    %172 = vector.multi_reduction <add>, %171, %cst_67 [1] : vector<32x32xf32> to vector<32xf32>
    %173 = vector.shape_cast %172 : vector<32xf32> to vector<32x1xf32>
    %cst_68 = arith.constant 3.200000e+01 : f32
    %174 = vector.broadcast %cst_68 : f32 to vector<32x1xf32>
    %175 = arith.divf %173, %174 : vector<32x1xf32>
    %cst_69 = arith.constant 9.99999974E-6 : f32
    %176 = vector.broadcast %cst_69 : f32 to vector<32x1xf32>
    %177 = arith.addf %175, %176 : vector<32x1xf32>
    %178 = math.rsqrt %177 : vector<32x1xf32>
    %179 = vector.broadcast %178 : vector<32x1xf32> to vector<32x32xf32>
    %180 = arith.mulf %170, %179 : vector<32x32xf32>
    %181 = vector.broadcast %162 : vector<1x32xf32> to vector<32x32xf32>
    %182 = arith.mulf %180, %181 : vector<32x32xf32>
    %183 = vector.broadcast %164 : vector<1x32xf32> to vector<32x32xf32>
    %184 = arith.addf %182, %183 : vector<32x32xf32>
    %185 = arith.truncf %184 : vector<32x32xf32> to vector<32x32xbf16>
    %c0_70 = arith.constant 0 : index
    %c0_71 = arith.constant 0 : index
    %c0_72 = arith.constant 0 : index
    %186 = vector.load %arg9[%c0_70, %c0_71, %c0_72] : memref<2x32x64xf32, #tpu.memory_space<vmem>>, vector<1x32x64xf32>
    %187 = vector.shape_cast %186 : vector<1x32x64xf32> to vector<32x64xf32>
    %188 = arith.truncf %187 : vector<32x64xf32> to vector<32x64xbf16>
    %cst_73 = arith.constant dense<0.000000e+00> : vector<32x64xf32>
    %189 = tpu.matmul %185, %188, %cst_73 {dimension_numbers = #tpu.dot_dimension_numbers<[1], [0], [0], [1], [0, 0, 1, 1], [], []>} : vector<32x32xbf16>, vector<32x64xbf16>, vector<32x64xf32> -> vector<32x64xf32>
    %c0_74 = arith.constant 0 : index
    %c0_75 = arith.constant 0 : index
    %c0_76 = arith.constant 0 : index
    %190 = vector.load %arg10[%c0_74, %c0_75, %c0_76] : memref<2x1x64xf32, #tpu.memory_space<vmem>>, vector<1x1x64xf32>
    %191 = vector.shape_cast %190 : vector<1x1x64xf32> to vector<1x64xf32>
    %192 = vector.broadcast %191 : vector<1x64xf32> to vector<32x64xf32>
    %193 = arith.addf %189, %192 : vector<32x64xf32>
    %194 = arith.mulf %193, %193 : vector<32x64xf32>
    %195 = arith.mulf %193, %194 : vector<32x64xf32>
    %cst_77 = arith.constant 4.471500e-02 : f32
    %196 = vector.broadcast %cst_77 : f32 to vector<32x64xf32>
    %197 = arith.mulf %196, %195 : vector<32x64xf32>
    %198 = arith.addf %193, %197 : vector<32x64xf32>
    %cst_78 = arith.constant 0.797884583 : f32
    %199 = vector.broadcast %cst_78 : f32 to vector<32x64xf32>
    %200 = arith.mulf %199, %198 : vector<32x64xf32>
    %201 = math.tanh %200 : vector<32x64xf32>
    %cst_79 = arith.constant 1.000000e+00 : f32
    %202 = vector.broadcast %cst_79 : f32 to vector<32x64xf32>
    %203 = arith.addf %202, %201 : vector<32x64xf32>
    %cst_80 = arith.constant 5.000000e-01 : f32
    %204 = vector.broadcast %cst_80 : f32 to vector<32x64xf32>
    %205 = arith.mulf %204, %203 : vector<32x64xf32>
    %206 = arith.mulf %193, %205 : vector<32x64xf32>
    %207 = arith.truncf %206 : vector<32x64xf32> to vector<32x64xbf16>
    %c0_81 = arith.constant 0 : index
    %c0_82 = arith.constant 0 : index
    %c0_83 = arith.constant 0 : index
    %208 = vector.load %arg11[%c0_81, %c0_82, %c0_83] : memref<2x64x32xf32, #tpu.memory_space<vmem>>, vector<1x64x32xf32>
    %209 = vector.shape_cast %208 : vector<1x64x32xf32> to vector<64x32xf32>
    %210 = arith.truncf %209 : vector<64x32xf32> to vector<64x32xbf16>
    %cst_84 = arith.constant dense<0.000000e+00> : vector<32x32xf32>
    %211 = tpu.matmul %207, %210, %cst_84 {dimension_numbers = #tpu.dot_dimension_numbers<[1], [0], [0], [1], [0, 0, 1, 1], [], []>} : vector<32x64xbf16>, vector<64x32xbf16>, vector<32x32xf32> -> vector<32x32xf32>
    %c0_85 = arith.constant 0 : index
    %c0_86 = arith.constant 0 : index
    %c0_87 = arith.constant 0 : index
    %212 = vector.load %arg12[%c0_85, %c0_86, %c0_87] : memref<2x1x32xf32, #tpu.memory_space<vmem>>, vector<1x1x32xf32>
    %213 = vector.shape_cast %212 : vector<1x1x32xf32> to vector<1x32xf32>
    %214 = vector.broadcast %213 : vector<1x32xf32> to vector<32x32xf32>
    %215 = arith.addf %211, %214 : vector<32x32xf32>
    %216 = arith.addf %184, %215 : vector<32x32xf32>
    %c0_88 = arith.constant 0 : index
    %c0_89 = arith.constant 0 : index
    %c0_90 = arith.constant 0 : index
    %217 = vector.load %arg13[%c0_88, %c0_89, %c0_90] : memref<2x1x32xf32, #tpu.memory_space<vmem>>, vector<1x1x32xf32>
    %218 = vector.shape_cast %217 : vector<1x1x32xf32> to vector<1x32xf32>
    %c0_91 = arith.constant 0 : index
    %c0_92 = arith.constant 0 : index
    %c0_93 = arith.constant 0 : index
    %219 = vector.load %arg14[%c0_91, %c0_92, %c0_93] : memref<2x1x32xf32, #tpu.memory_space<vmem>>, vector<1x1x32xf32>
    %220 = vector.shape_cast %219 : vector<1x1x32xf32> to vector<1x32xf32>
    %cst_94 = arith.constant dense<0.000000e+00> : vector<32xf32>
    %221 = vector.multi_reduction <add>, %216, %cst_94 [1] : vector<32x32xf32> to vector<32xf32>
    %222 = vector.shape_cast %221 : vector<32xf32> to vector<32x1xf32>
    %cst_95 = arith.constant 3.200000e+01 : f32
    %223 = vector.broadcast %cst_95 : f32 to vector<32x1xf32>
    %224 = arith.divf %222, %223 : vector<32x1xf32>
    %225 = vector.broadcast %224 : vector<32x1xf32> to vector<32x32xf32>
    %226 = arith.subf %216, %225 : vector<32x32xf32>
    %227 = arith.mulf %226, %226 : vector<32x32xf32>
    %cst_96 = arith.constant dense<0.000000e+00> : vector<32xf32>
    %228 = vector.multi_reduction <add>, %227, %cst_96 [1] : vector<32x32xf32> to vector<32xf32>
    %229 = vector.shape_cast %228 : vector<32xf32> to vector<32x1xf32>
    %cst_97 = arith.constant 3.200000e+01 : f32
    %230 = vector.broadcast %cst_97 : f32 to vector<32x1xf32>
    %231 = arith.divf %229, %230 : vector<32x1xf32>
    %cst_98 = arith.constant 9.99999974E-6 : f32
    %232 = vector.broadcast %cst_98 : f32 to vector<32x1xf32>
    %233 = arith.addf %231, %232 : vector<32x1xf32>
    %234 = math.rsqrt %233 : vector<32x1xf32>
    %235 = vector.broadcast %234 : vector<32x1xf32> to vector<32x32xf32>
    %236 = arith.mulf %226, %235 : vector<32x32xf32>
    %237 = vector.broadcast %218 : vector<1x32xf32> to vector<32x32xf32>
    %238 = arith.mulf %236, %237 : vector<32x32xf32>
    %239 = vector.broadcast %220 : vector<1x32xf32> to vector<32x32xf32>
    %240 = arith.addf %238, %239 : vector<32x32xf32>
    %241 = arith.truncf %240 : vector<32x32xf32> to vector<32x32xbf16>
    %c1_99 = arith.constant 1 : index
    %c0_100 = arith.constant 0 : index
    %c0_101 = arith.constant 0 : index
    %c0_102 = arith.constant 0 : index
    %242 = vector.load %arg3[%c1_99, %c0_100, %c0_101, %c0_102] : memref<2x3x32x32xf32, #tpu.memory_space<vmem>>, vector<1x1x32x32xf32>
    %243 = vector.shape_cast %242 : vector<1x1x32x32xf32> to vector<32x32xf32>
    %244 = arith.truncf %243 : vector<32x32xf32> to vector<32x32xbf16>
    %cst_103 = arith.constant dense<0.000000e+00> : vector<32x32xf32>
    %245 = tpu.matmul %241, %244, %cst_103 {dimension_numbers = #tpu.dot_dimension_numbers<[1], [0], [0], [1], [0, 0, 1, 1], [], []>} : vector<32x32xbf16>, vector<32x32xbf16>, vector<32x32xf32> -> vector<32x32xf32>
    %c1_104 = arith.constant 1 : index
    %c0_105 = arith.constant 0 : index
    %c0_106 = arith.constant 0 : index
    %c0_107 = arith.constant 0 : index
    %246 = vector.load %arg4[%c1_104, %c0_105, %c0_106, %c0_107] : memref<2x3x1x32xf32, #tpu.memory_space<vmem>>, vector<1x1x1x32xf32>
    %247 = vector.shape_cast %246 : vector<1x1x1x32xf32> to vector<1x32xf32>
    %248 = vector.broadcast %247 : vector<1x32xf32> to vector<32x32xf32>
    %249 = arith.addf %245, %248 : vector<32x32xf32>
    %c1_108 = arith.constant 1 : index
    %c1_109 = arith.constant 1 : index
    %c0_110 = arith.constant 0 : index
    %c0_111 = arith.constant 0 : index
    %250 = vector.load %arg3[%c1_108, %c1_109, %c0_110, %c0_111] : memref<2x3x32x32xf32, #tpu.memory_space<vmem>>, vector<1x1x32x32xf32>
    %251 = vector.shape_cast %250 : vector<1x1x32x32xf32> to vector<32x32xf32>
    %252 = arith.truncf %251 : vector<32x32xf32> to vector<32x32xbf16>
    %cst_112 = arith.constant dense<0.000000e+00> : vector<32x32xf32>
    %253 = tpu.matmul %241, %252, %cst_112 {dimension_numbers = #tpu.dot_dimension_numbers<[1], [0], [0], [1], [0, 0, 1, 1], [], []>} : vector<32x32xbf16>, vector<32x32xbf16>, vector<32x32xf32> -> vector<32x32xf32>
    %c1_113 = arith.constant 1 : index
    %c1_114 = arith.constant 1 : index
    %c0_115 = arith.constant 0 : index
    %c0_116 = arith.constant 0 : index
    %254 = vector.load %arg4[%c1_113, %c1_114, %c0_115, %c0_116] : memref<2x3x1x32xf32, #tpu.memory_space<vmem>>, vector<1x1x1x32xf32>
    %255 = vector.shape_cast %254 : vector<1x1x1x32xf32> to vector<1x32xf32>
    %256 = vector.broadcast %255 : vector<1x32xf32> to vector<32x32xf32>
    %257 = arith.addf %253, %256 : vector<32x32xf32>
    %c1_117 = arith.constant 1 : index
    %c2_118 = arith.constant 2 : index
    %c0_119 = arith.constant 0 : index
    %c0_120 = arith.constant 0 : index
    %258 = vector.load %arg3[%c1_117, %c2_118, %c0_119, %c0_120] : memref<2x3x32x32xf32, #tpu.memory_space<vmem>>, vector<1x1x32x32xf32>
    %259 = vector.shape_cast %258 : vector<1x1x32x32xf32> to vector<32x32xf32>
    %260 = arith.truncf %259 : vector<32x32xf32> to vector<32x32xbf16>
    %cst_121 = arith.constant dense<0.000000e+00> : vector<32x32xf32>
    %261 = tpu.matmul %241, %260, %cst_121 {dimension_numbers = #tpu.dot_dimension_numbers<[1], [0], [0], [1], [0, 0, 1, 1], [], []>} : vector<32x32xbf16>, vector<32x32xbf16>, vector<32x32xf32> -> vector<32x32xf32>
    %c1_122 = arith.constant 1 : index
    %c2_123 = arith.constant 2 : index
    %c0_124 = arith.constant 0 : index
    %c0_125 = arith.constant 0 : index
    %262 = vector.load %arg4[%c1_122, %c2_123, %c0_124, %c0_125] : memref<2x3x1x32xf32, #tpu.memory_space<vmem>>, vector<1x1x1x32xf32>
    %263 = vector.shape_cast %262 : vector<1x1x1x32xf32> to vector<1x32xf32>
    %264 = vector.broadcast %263 : vector<1x32xf32> to vector<32x32xf32>
    %265 = arith.addf %261, %264 : vector<32x32xf32>
    %cst_126 = arith.constant 0.353553385 : f32
    %266 = vector.broadcast %cst_126 : f32 to vector<32x32xf32>
    %267 = arith.mulf %249, %266 : vector<32x32xf32>
    %268 = vector.shape_cast %267 : vector<32x32xf32> to vector<2x16x32xf32>
    %269 = vector.shape_cast %257 : vector<32x32xf32> to vector<2x16x32xf32>
    %270 = arith.truncf %269 : vector<2x16x32xf32> to vector<2x16x32xbf16>
    %271 = vector.shape_cast %265 : vector<32x32xf32> to vector<2x16x32xf32>
    %272 = arith.truncf %271 : vector<2x16x32xf32> to vector<2x16x32xbf16>
    %cst_127 = arith.constant 0.000000e+00 : f32
    %273 = vector.broadcast %cst_127 : f32 to vector<2x16x32xf32>
    %274 = vector.broadcast %23 : vector<1x1x32xf32> to vector<2x16x32xf32>
    %275 = arith.mulf %268, %274 : vector<2x16x32xf32>
    %276 = arith.truncf %275 : vector<2x16x32xf32> to vector<2x16x32xbf16>
    "tpu.trace_start"() <{level = 10 : i32, message = "bqe,bke->bqk"}> : () -> ()
    %cst_128 = arith.constant dense<0.000000e+00> : vector<2x16x16xf32>
    %277 = tpu.matmul %276, %270, %cst_128 {dimension_numbers = #tpu.dot_dimension_numbers<[2], [2], [1], [1], [0, 0, 0, 1, 1, 1], [0], [0]>} : vector<2x16x32xbf16>, vector<2x16x32xbf16>, vector<2x16x16xf32> -> vector<2x16x16xf32>
    "tpu.trace_stop"() : () -> ()
    %cst_129 = arith.constant dense<0xFF800000> : vector<2x16xf32>
    %278 = vector.multi_reduction <maximumf>, %277, %cst_129 [2] : vector<2x16x16xf32> to vector<2x16xf32>
    %279 = vector.shape_cast %278 : vector<2x16xf32> to vector<2x16x1xf32>
    %280 = vector.broadcast %279 : vector<2x16x1xf32> to vector<2x16x16xf32>
    %281 = arith.subf %277, %280 : vector<2x16x16xf32>
    %282 = math.exp %281 : vector<2x16x16xf32>
    %cst_130 = arith.constant dense<0.000000e+00> : vector<2x16xf32>
    %283 = vector.multi_reduction <add>, %282, %cst_130 [2] : vector<2x16x16xf32> to vector<2x16xf32>
    %284 = vector.shape_cast %283 : vector<2x16xf32> to vector<2x16x1xf32>
    %285 = vector.broadcast %284 : vector<2x16x1xf32> to vector<2x16x16xf32>
    %286 = arith.divf %282, %285 : vector<2x16x16xf32>
    %287 = arith.truncf %286 : vector<2x16x16xf32> to vector<2x16x16xbf16>
    "tpu.trace_start"() <{level = 10 : i32, message = "bqk,bke->bqe"}> : () -> ()
    %cst_131 = arith.constant dense<0.000000e+00> : vector<2x16x32xf32>
    %288 = tpu.matmul %287, %272, %cst_131 {dimension_numbers = #tpu.dot_dimension_numbers<[2], [1], [1], [2], [0, 0, 0, 1, 1, 2], [0], [0]>} : vector<2x16x16xbf16>, vector<2x16x32xbf16>, vector<2x16x32xf32> -> vector<2x16x32xf32>
    "tpu.trace_stop"() : () -> ()
    %289 = vector.broadcast %23 : vector<1x1x32xf32> to vector<2x16x32xf32>
    %290 = arith.mulf %288, %289 : vector<2x16x32xf32>
    %291 = arith.addf %273, %290 : vector<2x16x32xf32>
    %292 = vector.broadcast %30 : vector<1x1x32xf32> to vector<2x16x32xf32>
    %293 = arith.mulf %268, %292 : vector<2x16x32xf32>
    %294 = arith.truncf %293 : vector<2x16x32xf32> to vector<2x16x32xbf16>
    "tpu.trace_start"() <{level = 10 : i32, message = "bqe,bke->bqk"}> : () -> ()
    %cst_132 = arith.constant dense<0.000000e+00> : vector<2x16x16xf32>
    %295 = tpu.matmul %294, %270, %cst_132 {dimension_numbers = #tpu.dot_dimension_numbers<[2], [2], [1], [1], [0, 0, 0, 1, 1, 1], [0], [0]>} : vector<2x16x32xbf16>, vector<2x16x32xbf16>, vector<2x16x16xf32> -> vector<2x16x16xf32>
    "tpu.trace_stop"() : () -> ()
    %cst_133 = arith.constant dense<0xFF800000> : vector<2x16xf32>
    %296 = vector.multi_reduction <maximumf>, %295, %cst_133 [2] : vector<2x16x16xf32> to vector<2x16xf32>
    %297 = vector.shape_cast %296 : vector<2x16xf32> to vector<2x16x1xf32>
    %298 = vector.broadcast %297 : vector<2x16x1xf32> to vector<2x16x16xf32>
    %299 = arith.subf %295, %298 : vector<2x16x16xf32>
    %300 = math.exp %299 : vector<2x16x16xf32>
    %cst_134 = arith.constant dense<0.000000e+00> : vector<2x16xf32>
    %301 = vector.multi_reduction <add>, %300, %cst_134 [2] : vector<2x16x16xf32> to vector<2x16xf32>
    %302 = vector.shape_cast %301 : vector<2x16xf32> to vector<2x16x1xf32>
    %303 = vector.broadcast %302 : vector<2x16x1xf32> to vector<2x16x16xf32>
    %304 = arith.divf %300, %303 : vector<2x16x16xf32>
    %305 = arith.truncf %304 : vector<2x16x16xf32> to vector<2x16x16xbf16>
    "tpu.trace_start"() <{level = 10 : i32, message = "bqk,bke->bqe"}> : () -> ()
    %cst_135 = arith.constant dense<0.000000e+00> : vector<2x16x32xf32>
    %306 = tpu.matmul %305, %272, %cst_135 {dimension_numbers = #tpu.dot_dimension_numbers<[2], [1], [1], [2], [0, 0, 0, 1, 1, 2], [0], [0]>} : vector<2x16x16xbf16>, vector<2x16x32xbf16>, vector<2x16x32xf32> -> vector<2x16x32xf32>
    "tpu.trace_stop"() : () -> ()
    %307 = vector.broadcast %30 : vector<1x1x32xf32> to vector<2x16x32xf32>
    %308 = arith.mulf %306, %307 : vector<2x16x32xf32>
    %309 = arith.addf %291, %308 : vector<2x16x32xf32>
    %310 = vector.broadcast %37 : vector<1x1x32xf32> to vector<2x16x32xf32>
    %311 = arith.mulf %268, %310 : vector<2x16x32xf32>
    %312 = arith.truncf %311 : vector<2x16x32xf32> to vector<2x16x32xbf16>
    "tpu.trace_start"() <{level = 10 : i32, message = "bqe,bke->bqk"}> : () -> ()
    %cst_136 = arith.constant dense<0.000000e+00> : vector<2x16x16xf32>
    %313 = tpu.matmul %312, %270, %cst_136 {dimension_numbers = #tpu.dot_dimension_numbers<[2], [2], [1], [1], [0, 0, 0, 1, 1, 1], [0], [0]>} : vector<2x16x32xbf16>, vector<2x16x32xbf16>, vector<2x16x16xf32> -> vector<2x16x16xf32>
    "tpu.trace_stop"() : () -> ()
    %cst_137 = arith.constant dense<0xFF800000> : vector<2x16xf32>
    %314 = vector.multi_reduction <maximumf>, %313, %cst_137 [2] : vector<2x16x16xf32> to vector<2x16xf32>
    %315 = vector.shape_cast %314 : vector<2x16xf32> to vector<2x16x1xf32>
    %316 = vector.broadcast %315 : vector<2x16x1xf32> to vector<2x16x16xf32>
    %317 = arith.subf %313, %316 : vector<2x16x16xf32>
    %318 = math.exp %317 : vector<2x16x16xf32>
    %cst_138 = arith.constant dense<0.000000e+00> : vector<2x16xf32>
    %319 = vector.multi_reduction <add>, %318, %cst_138 [2] : vector<2x16x16xf32> to vector<2x16xf32>
    %320 = vector.shape_cast %319 : vector<2x16xf32> to vector<2x16x1xf32>
    %321 = vector.broadcast %320 : vector<2x16x1xf32> to vector<2x16x16xf32>
    %322 = arith.divf %318, %321 : vector<2x16x16xf32>
    %323 = arith.truncf %322 : vector<2x16x16xf32> to vector<2x16x16xbf16>
    "tpu.trace_start"() <{level = 10 : i32, message = "bqk,bke->bqe"}> : () -> ()
    %cst_139 = arith.constant dense<0.000000e+00> : vector<2x16x32xf32>
    %324 = tpu.matmul %323, %272, %cst_139 {dimension_numbers = #tpu.dot_dimension_numbers<[2], [1], [1], [2], [0, 0, 0, 1, 1, 2], [0], [0]>} : vector<2x16x16xbf16>, vector<2x16x32xbf16>, vector<2x16x32xf32> -> vector<2x16x32xf32>
    "tpu.trace_stop"() : () -> ()
    %325 = vector.broadcast %37 : vector<1x1x32xf32> to vector<2x16x32xf32>
    %326 = arith.mulf %324, %325 : vector<2x16x32xf32>
    %327 = arith.addf %309, %326 : vector<2x16x32xf32>
    %328 = vector.broadcast %44 : vector<1x1x32xf32> to vector<2x16x32xf32>
    %329 = arith.mulf %268, %328 : vector<2x16x32xf32>
    %330 = arith.truncf %329 : vector<2x16x32xf32> to vector<2x16x32xbf16>
    "tpu.trace_start"() <{level = 10 : i32, message = "bqe,bke->bqk"}> : () -> ()
    %cst_140 = arith.constant dense<0.000000e+00> : vector<2x16x16xf32>
    %331 = tpu.matmul %330, %270, %cst_140 {dimension_numbers = #tpu.dot_dimension_numbers<[2], [2], [1], [1], [0, 0, 0, 1, 1, 1], [0], [0]>} : vector<2x16x32xbf16>, vector<2x16x32xbf16>, vector<2x16x16xf32> -> vector<2x16x16xf32>
    "tpu.trace_stop"() : () -> ()
    %cst_141 = arith.constant dense<0xFF800000> : vector<2x16xf32>
    %332 = vector.multi_reduction <maximumf>, %331, %cst_141 [2] : vector<2x16x16xf32> to vector<2x16xf32>
    %333 = vector.shape_cast %332 : vector<2x16xf32> to vector<2x16x1xf32>
    %334 = vector.broadcast %333 : vector<2x16x1xf32> to vector<2x16x16xf32>
    %335 = arith.subf %331, %334 : vector<2x16x16xf32>
    %336 = math.exp %335 : vector<2x16x16xf32>
    %cst_142 = arith.constant dense<0.000000e+00> : vector<2x16xf32>
    %337 = vector.multi_reduction <add>, %336, %cst_142 [2] : vector<2x16x16xf32> to vector<2x16xf32>
    %338 = vector.shape_cast %337 : vector<2x16xf32> to vector<2x16x1xf32>
    %339 = vector.broadcast %338 : vector<2x16x1xf32> to vector<2x16x16xf32>
    %340 = arith.divf %336, %339 : vector<2x16x16xf32>
    %341 = arith.truncf %340 : vector<2x16x16xf32> to vector<2x16x16xbf16>
    "tpu.trace_start"() <{level = 10 : i32, message = "bqk,bke->bqe"}> : () -> ()
    %cst_143 = arith.constant dense<0.000000e+00> : vector<2x16x32xf32>
    %342 = tpu.matmul %341, %272, %cst_143 {dimension_numbers = #tpu.dot_dimension_numbers<[2], [1], [1], [2], [0, 0, 0, 1, 1, 2], [0], [0]>} : vector<2x16x16xbf16>, vector<2x16x32xbf16>, vector<2x16x32xf32> -> vector<2x16x32xf32>
    "tpu.trace_stop"() : () -> ()
    %343 = vector.broadcast %44 : vector<1x1x32xf32> to vector<2x16x32xf32>
    %344 = arith.mulf %342, %343 : vector<2x16x32xf32>
    %345 = arith.addf %327, %344 : vector<2x16x32xf32>
    %346 = vector.shape_cast %345 : vector<2x16x32xf32> to vector<32x32xf32>
    %347 = arith.truncf %346 : vector<32x32xf32> to vector<32x32xbf16>
    %c1_144 = arith.constant 1 : index
    %c0_145 = arith.constant 0 : index
    %c0_146 = arith.constant 0 : index
    %348 = vector.load %arg5[%c1_144, %c0_145, %c0_146] : memref<2x32x32xf32, #tpu.memory_space<vmem>>, vector<1x32x32xf32>
    %349 = vector.shape_cast %348 : vector<1x32x32xf32> to vector<32x32xf32>
    %350 = arith.truncf %349 : vector<32x32xf32> to vector<32x32xbf16>
    %cst_147 = arith.constant dense<0.000000e+00> : vector<32x32xf32>
    %351 = tpu.matmul %347, %350, %cst_147 {dimension_numbers = #tpu.dot_dimension_numbers<[1], [0], [0], [1], [0, 0, 1, 1], [], []>} : vector<32x32xbf16>, vector<32x32xbf16>, vector<32x32xf32> -> vector<32x32xf32>
    %c1_148 = arith.constant 1 : index
    %c0_149 = arith.constant 0 : index
    %c0_150 = arith.constant 0 : index
    %352 = vector.load %arg6[%c1_148, %c0_149, %c0_150] : memref<2x1x32xf32, #tpu.memory_space<vmem>>, vector<1x1x32xf32>
    %353 = vector.shape_cast %352 : vector<1x1x32xf32> to vector<1x32xf32>
    %354 = vector.broadcast %353 : vector<1x32xf32> to vector<32x32xf32>
    %355 = arith.addf %351, %354 : vector<32x32xf32>
    %356 = arith.addf %240, %355 : vector<32x32xf32>
    %c1_151 = arith.constant 1 : index
    %c0_152 = arith.constant 0 : index
    %c0_153 = arith.constant 0 : index
    %357 = vector.load %arg7[%c1_151, %c0_152, %c0_153] : memref<2x1x32xf32, #tpu.memory_space<vmem>>, vector<1x1x32xf32>
    %358 = vector.shape_cast %357 : vector<1x1x32xf32> to vector<1x32xf32>
    %c1_154 = arith.constant 1 : index
    %c0_155 = arith.constant 0 : index
    %c0_156 = arith.constant 0 : index
    %359 = vector.load %arg8[%c1_154, %c0_155, %c0_156] : memref<2x1x32xf32, #tpu.memory_space<vmem>>, vector<1x1x32xf32>
    %360 = vector.shape_cast %359 : vector<1x1x32xf32> to vector<1x32xf32>
    %cst_157 = arith.constant dense<0.000000e+00> : vector<32xf32>
    %361 = vector.multi_reduction <add>, %356, %cst_157 [1] : vector<32x32xf32> to vector<32xf32>
    %362 = vector.shape_cast %361 : vector<32xf32> to vector<32x1xf32>
    %cst_158 = arith.constant 3.200000e+01 : f32
    %363 = vector.broadcast %cst_158 : f32 to vector<32x1xf32>
    %364 = arith.divf %362, %363 : vector<32x1xf32>
    %365 = vector.broadcast %364 : vector<32x1xf32> to vector<32x32xf32>
    %366 = arith.subf %356, %365 : vector<32x32xf32>
    %367 = arith.mulf %366, %366 : vector<32x32xf32>
    %cst_159 = arith.constant dense<0.000000e+00> : vector<32xf32>
    %368 = vector.multi_reduction <add>, %367, %cst_159 [1] : vector<32x32xf32> to vector<32xf32>
    %369 = vector.shape_cast %368 : vector<32xf32> to vector<32x1xf32>
    %cst_160 = arith.constant 3.200000e+01 : f32
    %370 = vector.broadcast %cst_160 : f32 to vector<32x1xf32>
    %371 = arith.divf %369, %370 : vector<32x1xf32>
    %cst_161 = arith.constant 9.99999974E-6 : f32
    %372 = vector.broadcast %cst_161 : f32 to vector<32x1xf32>
    %373 = arith.addf %371, %372 : vector<32x1xf32>
    %374 = math.rsqrt %373 : vector<32x1xf32>
    %375 = vector.broadcast %374 : vector<32x1xf32> to vector<32x32xf32>
    %376 = arith.mulf %366, %375 : vector<32x32xf32>
    %377 = vector.broadcast %358 : vector<1x32xf32> to vector<32x32xf32>
    %378 = arith.mulf %376, %377 : vector<32x32xf32>
    %379 = vector.broadcast %360 : vector<1x32xf32> to vector<32x32xf32>
    %380 = arith.addf %378, %379 : vector<32x32xf32>
    %381 = arith.truncf %380 : vector<32x32xf32> to vector<32x32xbf16>
    %c1_162 = arith.constant 1 : index
    %c0_163 = arith.constant 0 : index
    %c0_164 = arith.constant 0 : index
    %382 = vector.load %arg9[%c1_162, %c0_163, %c0_164] : memref<2x32x64xf32, #tpu.memory_space<vmem>>, vector<1x32x64xf32>
    %383 = vector.shape_cast %382 : vector<1x32x64xf32> to vector<32x64xf32>
    %384 = arith.truncf %383 : vector<32x64xf32> to vector<32x64xbf16>
    %cst_165 = arith.constant dense<0.000000e+00> : vector<32x64xf32>
    %385 = tpu.matmul %381, %384, %cst_165 {dimension_numbers = #tpu.dot_dimension_numbers<[1], [0], [0], [1], [0, 0, 1, 1], [], []>} : vector<32x32xbf16>, vector<32x64xbf16>, vector<32x64xf32> -> vector<32x64xf32>
    %c1_166 = arith.constant 1 : index
    %c0_167 = arith.constant 0 : index
    %c0_168 = arith.constant 0 : index
    %386 = vector.load %arg10[%c1_166, %c0_167, %c0_168] : memref<2x1x64xf32, #tpu.memory_space<vmem>>, vector<1x1x64xf32>
    %387 = vector.shape_cast %386 : vector<1x1x64xf32> to vector<1x64xf32>
    %388 = vector.broadcast %387 : vector<1x64xf32> to vector<32x64xf32>
    %389 = arith.addf %385, %388 : vector<32x64xf32>
    %390 = arith.mulf %389, %389 : vector<32x64xf32>
    %391 = arith.mulf %389, %390 : vector<32x64xf32>
    %cst_169 = arith.constant 4.471500e-02 : f32
    %392 = vector.broadcast %cst_169 : f32 to vector<32x64xf32>
    %393 = arith.mulf %392, %391 : vector<32x64xf32>
    %394 = arith.addf %389, %393 : vector<32x64xf32>
    %cst_170 = arith.constant 0.797884583 : f32
    %395 = vector.broadcast %cst_170 : f32 to vector<32x64xf32>
    %396 = arith.mulf %395, %394 : vector<32x64xf32>
    %397 = math.tanh %396 : vector<32x64xf32>
    %cst_171 = arith.constant 1.000000e+00 : f32
    %398 = vector.broadcast %cst_171 : f32 to vector<32x64xf32>
    %399 = arith.addf %398, %397 : vector<32x64xf32>
    %cst_172 = arith.constant 5.000000e-01 : f32
    %400 = vector.broadcast %cst_172 : f32 to vector<32x64xf32>
    %401 = arith.mulf %400, %399 : vector<32x64xf32>
    %402 = arith.mulf %389, %401 : vector<32x64xf32>
    %403 = arith.truncf %402 : vector<32x64xf32> to vector<32x64xbf16>
    %c1_173 = arith.constant 1 : index
    %c0_174 = arith.constant 0 : index
    %c0_175 = arith.constant 0 : index
    %404 = vector.load %arg11[%c1_173, %c0_174, %c0_175] : memref<2x64x32xf32, #tpu.memory_space<vmem>>, vector<1x64x32xf32>
    %405 = vector.shape_cast %404 : vector<1x64x32xf32> to vector<64x32xf32>
    %406 = arith.truncf %405 : vector<64x32xf32> to vector<64x32xbf16>
    %cst_176 = arith.constant dense<0.000000e+00> : vector<32x32xf32>
    %407 = tpu.matmul %403, %406, %cst_176 {dimension_numbers = #tpu.dot_dimension_numbers<[1], [0], [0], [1], [0, 0, 1, 1], [], []>} : vector<32x64xbf16>, vector<64x32xbf16>, vector<32x32xf32> -> vector<32x32xf32>
    %c1_177 = arith.constant 1 : index
    %c0_178 = arith.constant 0 : index
    %c0_179 = arith.constant 0 : index
    %408 = vector.load %arg12[%c1_177, %c0_178, %c0_179] : memref<2x1x32xf32, #tpu.memory_space<vmem>>, vector<1x1x32xf32>
    %409 = vector.shape_cast %408 : vector<1x1x32xf32> to vector<1x32xf32>
    %410 = vector.broadcast %409 : vector<1x32xf32> to vector<32x32xf32>
    %411 = arith.addf %407, %410 : vector<32x32xf32>
    %412 = arith.addf %380, %411 : vector<32x32xf32>
    %c1_180 = arith.constant 1 : index
    %c0_181 = arith.constant 0 : index
    %c0_182 = arith.constant 0 : index
    %413 = vector.load %arg13[%c1_180, %c0_181, %c0_182] : memref<2x1x32xf32, #tpu.memory_space<vmem>>, vector<1x1x32xf32>
    %414 = vector.shape_cast %413 : vector<1x1x32xf32> to vector<1x32xf32>
    %c1_183 = arith.constant 1 : index
    %c0_184 = arith.constant 0 : index
    %c0_185 = arith.constant 0 : index
    %415 = vector.load %arg14[%c1_183, %c0_184, %c0_185] : memref<2x1x32xf32, #tpu.memory_space<vmem>>, vector<1x1x32xf32>
    %416 = vector.shape_cast %415 : vector<1x1x32xf32> to vector<1x32xf32>
    %cst_186 = arith.constant dense<0.000000e+00> : vector<32xf32>
    %417 = vector.multi_reduction <add>, %412, %cst_186 [1] : vector<32x32xf32> to vector<32xf32>
    %418 = vector.shape_cast %417 : vector<32xf32> to vector<32x1xf32>
    %cst_187 = arith.constant 3.200000e+01 : f32
    %419 = vector.broadcast %cst_187 : f32 to vector<32x1xf32>
    %420 = arith.divf %418, %419 : vector<32x1xf32>
    %421 = vector.broadcast %420 : vector<32x1xf32> to vector<32x32xf32>
    %422 = arith.subf %412, %421 : vector<32x32xf32>
    %423 = arith.mulf %422, %422 : vector<32x32xf32>
    %cst_188 = arith.constant dense<0.000000e+00> : vector<32xf32>
    %424 = vector.multi_reduction <add>, %423, %cst_188 [1] : vector<32x32xf32> to vector<32xf32>
    %425 = vector.shape_cast %424 : vector<32xf32> to vector<32x1xf32>
    %cst_189 = arith.constant 3.200000e+01 : f32
    %426 = vector.broadcast %cst_189 : f32 to vector<32x1xf32>
    %427 = arith.divf %425, %426 : vector<32x1xf32>
    %cst_190 = arith.constant 9.99999974E-6 : f32
    %428 = vector.broadcast %cst_190 : f32 to vector<32x1xf32>
    %429 = arith.addf %427, %428 : vector<32x1xf32>
    %430 = math.rsqrt %429 : vector<32x1xf32>
    %431 = vector.broadcast %430 : vector<32x1xf32> to vector<32x32xf32>
    %432 = arith.mulf %422, %431 : vector<32x32xf32>
    %433 = vector.broadcast %414 : vector<1x32xf32> to vector<32x32xf32>
    %434 = arith.mulf %432, %433 : vector<32x32xf32>
    %435 = vector.broadcast %416 : vector<1x32xf32> to vector<32x32xf32>
    %436 = arith.addf %434, %435 : vector<32x32xf32>
    %437 = vector.shape_cast %436 : vector<32x32xf32> to vector<2x16x32xf32>
    %cst_191 = arith.constant dense<0.000000e+00> : vector<2x32xf32>
    %438 = vector.multi_reduction <add>, %437, %cst_191 [1] : vector<2x16x32xf32> to vector<2x32xf32>
    %cst_192 = arith.constant 1.600000e+01 : f32
    %439 = vector.broadcast %cst_192 : f32 to vector<2x32xf32>
    %440 = arith.divf %438, %439 : vector<2x32xf32>
    %c0_193 = arith.constant 0 : index
    %c0_194 = arith.constant 0 : index
    %441 = vector.load %arg15[%c0_193, %c0_194] : memref<1x32xf32, #tpu.memory_space<vmem>>, vector<1x32xf32>
    %c0_195 = arith.constant 0 : index
    %c0_196 = arith.constant 0 : index
    %442 = vector.load %arg16[%c0_195, %c0_196] : memref<1x32xf32, #tpu.memory_space<vmem>>, vector<1x32xf32>
    %cst_197 = arith.constant dense<0.000000e+00> : vector<2xf32>
    %443 = vector.multi_reduction <add>, %440, %cst_197 [1] : vector<2x32xf32> to vector<2xf32>
    %444 = vector.shape_cast %443 : vector<2xf32> to vector<2x1xf32>
    %cst_198 = arith.constant 3.200000e+01 : f32
    %445 = vector.broadcast %cst_198 : f32 to vector<2x1xf32>
    %446 = arith.divf %444, %445 : vector<2x1xf32>
    %447 = vector.broadcast %446 : vector<2x1xf32> to vector<2x32xf32>
    %448 = arith.subf %440, %447 : vector<2x32xf32>
    %449 = arith.mulf %448, %448 : vector<2x32xf32>
    %cst_199 = arith.constant dense<0.000000e+00> : vector<2xf32>
    %450 = vector.multi_reduction <add>, %449, %cst_199 [1] : vector<2x32xf32> to vector<2xf32>
    %451 = vector.shape_cast %450 : vector<2xf32> to vector<2x1xf32>
    %cst_200 = arith.constant 3.200000e+01 : f32
    %452 = vector.broadcast %cst_200 : f32 to vector<2x1xf32>
    %453 = arith.divf %451, %452 : vector<2x1xf32>
    %cst_201 = arith.constant 9.99999974E-6 : f32
    %454 = vector.broadcast %cst_201 : f32 to vector<2x1xf32>
    %455 = arith.addf %453, %454 : vector<2x1xf32>
    %456 = math.rsqrt %455 : vector<2x1xf32>
    %457 = vector.broadcast %456 : vector<2x1xf32> to vector<2x32xf32>
    %458 = arith.mulf %448, %457 : vector<2x32xf32>
    %459 = vector.broadcast %441 : vector<1x32xf32> to vector<2x32xf32>
    %460 = arith.mulf %458, %459 : vector<2x32xf32>
    %461 = vector.broadcast %442 : vector<1x32xf32> to vector<2x32xf32>
    %462 = arith.addf %460, %461 : vector<2x32xf32>
    %c0_202 = arith.constant 0 : index
    %c0_203 = arith.constant 0 : index
    %463 = vector.load %arg17[%c0_202, %c0_203] : memref<32x16xf32, #tpu.memory_space<vmem>>, vector<32x16xf32>
    %cst_204 = arith.constant dense<0.000000e+00> : vector<2x16xf32>
    %464 = tpu.matmul %462, %463, %cst_204 {dimension_numbers = #tpu.dot_dimension_numbers<[1], [0], [0], [1], [0, 0, 1, 1], [], []>} : vector<2x32xf32>, vector<32x16xf32>, vector<2x16xf32> -> vector<2x16xf32>
    %c0_205 = arith.constant 0 : index
    %c0_206 = arith.constant 0 : index
    %465 = vector.load %arg18[%c0_205, %c0_206] : memref<1x16xf32, #tpu.memory_space<vmem>>, vector<1x16xf32>
    %466 = vector.broadcast %465 : vector<1x16xf32> to vector<2x16xf32>
    %467 = arith.addf %464, %466 : vector<2x16xf32>
    %468 = arith.negf %467 : vector<2x16xf32>
    %469 = math.exp %468 : vector<2x16xf32>
    %cst_207 = arith.constant 1.000000e+00 : f32
    %470 = vector.broadcast %cst_207 : f32 to vector<2x16xf32>
    %471 = arith.addf %470, %469 : vector<2x16xf32>
    %472 = arith.divf %470, %471 : vector<2x16xf32>
    %473 = arith.mulf %467, %472 : vector<2x16xf32>
    %c0_208 = arith.constant 0 : index
    %c0_209 = arith.constant 0 : index
    %474 = vector.load %arg19[%c0_208, %c0_209] : memref<16x1xf32, #tpu.memory_space<vmem>>, vector<16x1xf32>
    %cst_210 = arith.constant dense<0.000000e+00> : vector<2x1xf32>
    %475 = tpu.matmul %473, %474, %cst_210 {dimension_numbers = #tpu.dot_dimension_numbers<[1], [0], [0], [1], [0, 0, 1, 1], [], []>} : vector<2x16xf32>, vector<16x1xf32>, vector<2x1xf32> -> vector<2x1xf32>
    %c0_211 = arith.constant 0 : index
    %c0_212 = arith.constant 0 : index
    %476 = vector.load %arg20[%c0_211, %c0_212] : memref<1x1xf32, #tpu.memory_space<vmem>>, vector<1x1xf32>
    %477 = vector.broadcast %476 : vector<1x1xf32> to vector<2x1xf32>
    %478 = arith.addf %475, %477 : vector<2x1xf32>
    %c0_213 = arith.constant 0 : index
    %c0_214 = arith.constant 0 : index
    %479 = vector.load %arg21[%c0_213, %c0_214] : memref<2x1xf32, #tpu.memory_space<vmem>>, vector<2x1xf32>
    tpu.vector_store %arg21[%c0_213, %c0_214], %478 {strides = array<i32>} : memref<2x1xf32, #tpu.memory_space<vmem>>, vector<2x1xf32>,
    return
  }
  func.func @transform_0(%arg0: i32) -> (i32, i32) {
    %c0_i32 = arith.constant 0 : i32
    %c0_i32_0 = arith.constant 0 : i32
    return %arg0, %c0_i32 : i32, i32
  }
  func.func @transform_1(%arg0: i32) -> (i32, i32, i32) {
    %c0_i32 = arith.constant 0 : i32
    %c0_i32_0 = arith.constant 0 : i32
    %c0_i32_1 = arith.constant 0 : i32
    %c0_i32_2 = arith.constant 0 : i32
    return %c0_i32, %c0_i32_0, %c0_i32_1 : i32, i32, i32
  }
  func.func @transform_2(%arg0: i32) -> (i32, i32, i32, i32) {
    %c0_i32 = arith.constant 0 : i32
    %c0_i32_0 = arith.constant 0 : i32
    %c0_i32_1 = arith.constant 0 : i32
    %c0_i32_2 = arith.constant 0 : i32
    %c0_i32_3 = arith.constant 0 : i32
    return %c0_i32, %c0_i32_0, %c0_i32_1, %c0_i32_2 : i32, i32, i32, i32
  }
  func.func @transform_3(%arg0: i32) -> (i32, i32, i32, i32) {
    %c0_i32 = arith.constant 0 : i32
    %c0_i32_0 = arith.constant 0 : i32
    %c0_i32_1 = arith.constant 0 : i32
    %c0_i32_2 = arith.constant 0 : i32
    %c0_i32_3 = arith.constant 0 : i32
    return %c0_i32, %c0_i32_0, %c0_i32_1, %c0_i32_2 : i32, i32, i32, i32
  }
  func.func @transform_4(%arg0: i32) -> (i32, i32, i32) {
    %c0_i32 = arith.constant 0 : i32
    %c0_i32_0 = arith.constant 0 : i32
    %c0_i32_1 = arith.constant 0 : i32
    %c0_i32_2 = arith.constant 0 : i32
    return %c0_i32, %c0_i32_0, %c0_i32_1 : i32, i32, i32
  }
  func.func @transform_5(%arg0: i32) -> (i32, i32, i32) {
    %c0_i32 = arith.constant 0 : i32
    %c0_i32_0 = arith.constant 0 : i32
    %c0_i32_1 = arith.constant 0 : i32
    %c0_i32_2 = arith.constant 0 : i32
    return %c0_i32, %c0_i32_0, %c0_i32_1 : i32, i32, i32
  }
  func.func @transform_6(%arg0: i32) -> (i32, i32, i32) {
    %c0_i32 = arith.constant 0 : i32
    %c0_i32_0 = arith.constant 0 : i32
    %c0_i32_1 = arith.constant 0 : i32
    %c0_i32_2 = arith.constant 0 : i32
    return %c0_i32, %c0_i32_0, %c0_i32_1 : i32, i32, i32
  }
  func.func @transform_7(%arg0: i32) -> (i32, i32, i32) {
    %c0_i32 = arith.constant 0 : i32
    %c0_i32_0 = arith.constant 0 : i32
    %c0_i32_1 = arith.constant 0 : i32
    %c0_i32_2 = arith.constant 0 : i32
    return %c0_i32, %c0_i32_0, %c0_i32_1 : i32, i32, i32
  }
  func.func @transform_8(%arg0: i32) -> (i32, i32, i32) {
    %c0_i32 = arith.constant 0 : i32
    %c0_i32_0 = arith.constant 0 : i32
    %c0_i32_1 = arith.constant 0 : i32
    %c0_i32_2 = arith.constant 0 : i32
    return %c0_i32, %c0_i32_0, %c0_i32_1 : i32, i32, i32
  }
  func.func @transform_9(%arg0: i32) -> (i32, i32, i32) {
    %c0_i32 = arith.constant 0 : i32
    %c0_i32_0 = arith.constant 0 : i32
    %c0_i32_1 = arith.constant 0 : i32
    %c0_i32_2 = arith.constant 0 : i32
    return %c0_i32, %c0_i32_0, %c0_i32_1 : i32, i32, i32
  }
  func.func @transform_10(%arg0: i32) -> (i32, i32, i32) {
    %c0_i32 = arith.constant 0 : i32
    %c0_i32_0 = arith.constant 0 : i32
    %c0_i32_1 = arith.constant 0 : i32
    %c0_i32_2 = arith.constant 0 : i32
    return %c0_i32, %c0_i32_0, %c0_i32_1 : i32, i32, i32
  }
  func.func @transform_11(%arg0: i32) -> (i32, i32, i32) {
    %c0_i32 = arith.constant 0 : i32
    %c0_i32_0 = arith.constant 0 : i32
    %c0_i32_1 = arith.constant 0 : i32
    %c0_i32_2 = arith.constant 0 : i32
    return %c0_i32, %c0_i32_0, %c0_i32_1 : i32, i32, i32
  }
  func.func @transform_12(%arg0: i32) -> (i32, i32, i32) {
    %c0_i32 = arith.constant 0 : i32
    %c0_i32_0 = arith.constant 0 : i32
    %c0_i32_1 = arith.constant 0 : i32
    %c0_i32_2 = arith.constant 0 : i32
    return %c0_i32, %c0_i32_0, %c0_i32_1 : i32, i32, i32
  }
  func.func @transform_13(%arg0: i32) -> (i32, i32, i32) {
    %c0_i32 = arith.constant 0 : i32
    %c0_i32_0 = arith.constant 0 : i32
    %c0_i32_1 = arith.constant 0 : i32
    %c0_i32_2 = arith.constant 0 : i32
    return %c0_i32, %c0_i32_0, %c0_i32_1 : i32, i32, i32
  }
  func.func @transform_14(%arg0: i32) -> (i32, i32) {
    %c0_i32 = arith.constant 0 : i32
    %c0_i32_0 = arith.constant 0 : i32
    %c0_i32_1 = arith.constant 0 : i32
    return %c0_i32, %c0_i32_0 : i32, i32
  }
  func.func @transform_15(%arg0: i32) -> (i32, i32) {
    %c0_i32 = arith.constant 0 : i32
    %c0_i32_0 = arith.constant 0 : i32
    %c0_i32_1 = arith.constant 0 : i32
    return %c0_i32, %c0_i32_0 : i32, i32
  }
  func.func @transform_16(%arg0: i32) -> (i32, i32) {
    %c0_i32 = arith.constant 0 : i32
    %c0_i32_0 = arith.constant 0 : i32
    %c0_i32_1 = arith.constant 0 : i32
    return %c0_i32, %c0_i32_0 : i32, i32
  }
  func.func @transform_17(%arg0: i32) -> (i32, i32) {
    %c0_i32 = arith.constant 0 : i32
    %c0_i32_0 = arith.constant 0 : i32
    %c0_i32_1 = arith.constant 0 : i32
    return %c0_i32, %c0_i32_0 : i32, i32
  }
  func.func @transform_18(%arg0: i32) -> (i32, i32) {
    %c0_i32 = arith.constant 0 : i32
    %c0_i32_0 = arith.constant 0 : i32
    %c0_i32_1 = arith.constant 0 : i32
    return %c0_i32, %c0_i32_0 : i32, i32
  }
  func.func @transform_19(%arg0: i32) -> (i32, i32) {
    %c0_i32 = arith.constant 0 : i32
    %c0_i32_0 = arith.constant 0 : i32
    %c0_i32_1 = arith.constant 0 : i32
    return %c0_i32, %c0_i32_0 : i32, i32
  }
  func.func @transform_20(%arg0: i32) -> (i32, i32) {
    %c0_i32 = arith.constant 0 : i32
    %c0_i32_0 = arith.constant 0 : i32
    return %arg0, %c0_i32 : i32, i32
  }
}

</mosaic_0001>

<llo_original>
// kernel: wave_function_forward.1
$region0: #{wave_function_forward.1}
  #allocation0 [shape = 'u32[]', space=smem, size = 0x4, offset = 0x4, fixed_abs, tag = 'smem constant byte address 0x4 - core index']
  #allocation1 [shape = 'u32[144,128]{1,0:T(1,128)}', space=vmem, size = 0x12000, scoped, tag = 'internal scratch']
  #allocation2 [shape = 'f32[1,1]{1,0:T(1,128)S(1)}', space=vmem, size = 0x200, scoped, tag = 'scoped memory for wave_function_forward.1']
  %s0 = inlined_call_operand.vmem [shape: s32[2,16], index: 0, kind: input, shape index: {}]
  %s1 = inlined_call_operand.vmem [shape: f32[2,16,32], index: 1, kind: input, shape index: {}]
  %s2 = inlined_call_operand.vmem [shape: f32[2,3,32,32], index: 2, kind: input, shape index: {}]
  %s3 = inlined_call_operand.vmem [shape: f32[2,3,1,32], index: 3, kind: input, shape index: {}]
  %s4 = inlined_call_operand.vmem [shape: f32[2,32,32], index: 4, kind: input, shape index: {}]
  %s5 = inlined_call_operand.hbm [shape: f32[2,1,32], index: 5, kind: input, shape index: {}]
  %s6 = inlined_call_operand.hbm [shape: f32[2,1,32], index: 6, kind: input, shape index: {}]
  %s7 = inlined_call_operand.hbm [shape: f32[2,1,32], index: 7, kind: input, shape index: {}]
  %s8 = inlined_call_operand.vmem [shape: f32[2,32,64], index: 8, kind: input, shape index: {}]
  %s9 = inlined_call_operand.hbm [shape: f32[2,1,64], index: 9, kind: input, shape index: {}]
  %s10 = inlined_call_operand.vmem [shape: f32[2,64,32], index: 10, kind: input, shape index: {}]
  %s11 = inlined_call_operand.hbm [shape: f32[2,1,32], index: 11, kind: input, shape index: {}]
  %s12 = inlined_call_operand.hbm [shape: f32[2,1,32], index: 12, kind: input, shape index: {}]
  %s13 = inlined_call_operand.hbm [shape: f32[2,1,32], index: 13, kind: input, shape index: {}]
  %s14 = inlined_call_operand.vmem [shape: f32[1,32], index: 14, kind: input, shape index: {}]
  %s15 = inlined_call_operand.hbm [shape: f32[1,32], index: 15, kind: input, shape index: {}]
  %s16 = inlined_call_operand.vmem [shape: f32[32,16], index: 16, kind: input, shape index: {}]
  %s17 = inlined_call_operand.hbm [shape: f32[1,16], index: 17, kind: input, shape index: {}]
  %s18 = inlined_call_operand.vmem [shape: f32[16,1], index: 18, kind: input, shape index: {}]
  %s19 = inlined_call_operand.<no memory space> [shape: f32[1,1], index: 19, kind: input, shape index: {}]
  %s20 = inlined_call_operand.vmem [shape: f32[2,1], index: 20, kind: output, shape index: {}]
  %s21 = sld [smem:[#allocation0]]
  $region126: #{wave_function_forward.1} parent=0
    _
  %s23 = ssub.s32 1, %s21
  %s24 = scalar_select 0, %s23, %s21
  %v25 = vstv %s19
  %26 = vst [vmem:[#allocation2] sm:$0x1] %v25
  $region1: #{wave_function_forward.1} parent=0
    #allocation3 [shape = 'u8[1024]{0}', space=vmem, size = 0x400, scoped, tag = 'input window, operand 5, single buffered']
    #allocation4 [shape = 's32[1]{0}', space=sflag, size = 0x4, scoped, tag = 'scoped memory for wave_function_forward.1']
    #allocation5 [shape = 'u8[1024]{0}', space=vmem, size = 0x400, scoped, tag = 'input window, operand 6, single buffered']
    #allocation6 [shape = 's32[1]{0}', space=sflag, size = 0x4, scoped, tag = 'scoped memory for wave_function_forward.1']
    #allocation7 [shape = 'u8[1024]{0}', space=vmem, size = 0x400, scoped, tag = 'input window, operand 7, single buffered']
    #allocation8 [shape = 'u8[1024]{0}', space=vmem, size = 0x400, scoped, tag = 'input window, operand 9, single buffered']
    #allocation9 [shape = 's32[1]{0}', space=sflag, size = 0x4, scoped, tag = 'scoped memory for wave_function_forward.1']
    #allocation10 [shape = 'u8[1024]{0}', space=vmem, size = 0x400, scoped, tag = 'input window, operand 11, single buffered']
    #allocation11 [shape = 'u8[1024]{0}', space=vmem, size = 0x400, scoped, tag = 'input window, operand 12, single buffered']
    #allocation12 [shape = 's32[1]{0}', space=sflag, size = 0x4, scoped, tag = 'scoped memory for wave_function_forward.1']
    #allocation13 [shape = 'u8[1024]{0}', space=vmem, size = 0x400, scoped, tag = 'input window, operand 13, single buffered']
    #allocation14 [shape = 'u8[512]{0}', space=vmem, size = 0x400, scoped, tag = 'input window, operand 15, single buffered']
    #allocation15 [shape = 's32[1]{0}', space=sflag, size = 0x4, scoped, tag = 'scoped memory for wave_function_forward.1']
    #allocation16 [shape = 'u8[512]{0}', space=vmem, size = 0x400, scoped, tag = 'input window, operand 17, single buffered']
    %27 = vsyncpa [#allocation4], 0
    %28 = vsyncpa [#allocation6], 0
    %29 = vsyncpa [#allocation9], 0
    %30 = vsyncpa [#allocation12], 0
    %31 = vsyncpa [#allocation15], 0
    // Predicated region
    $region2: #{wave_function_forward.1} parent=1 // pred_check
      _
    $region3: #{wave_function_forward.1} parent=1 // pred_check_branch
      %33 = sbr.rel (0) target = $region5
    $region4: #{wave_function_forward.1} parent=1 // pred_region
      _
    $region5: #{wave_function_forward.1} parent=1 // pred_fallthru
      _
    // Predicated region
    $region6: #{wave_function_forward.1} parent=1 // pred_check
      _
    $region7: #{wave_function_forward.1} parent=1 // pred_check_branch
      %35 = sbr.rel (0) target = $region9
    $region8: #{wave_function_forward.1} parent=1 // pred_region
      _
    $region9: #{wave_function_forward.1} parent=1 // pred_fallthru
      _
    // Predicated region
    $region10: #{wave_function_forward.1} parent=1 // pred_check
      _
    $region11: #{wave_function_forward.1} parent=1 // pred_check_branch
      %37 = sbr.rel (0) target = $region13
    $region12: #{wave_function_forward.1} parent=1 // pred_region
      _
    $region13: #{wave_function_forward.1} parent=1 // pred_fallthru
      _
    // Predicated region
    $region14: #{wave_function_forward.1} parent=1 // pred_check
      _
    $region15: #{wave_function_forward.1} parent=1 // pred_check_branch
      %39 = sbr.rel (0) target = $region17
    $region16: #{wave_function_forward.1} parent=1 // pred_region
      _
    $region17: #{wave_function_forward.1} parent=1 // pred_fallthru
      _
    // Predicated region
    $region18: #{wave_function_forward.1} parent=1 // pred_check
      _
    $region19: #{wave_function_forward.1} parent=1 // pred_check_branch
      %41 = sbr.rel (0) target = $region21
    $region20: #{wave_function_forward.1} parent=1 // pred_region
      _
    $region21: #{wave_function_forward.1} parent=1 // pred_fallthru
      _
    // Predicated region
    $region22: #{wave_function_forward.1} parent=1 // pred_check
      _
    $region23: #{wave_function_forward.1} parent=1 // pred_check_branch
      %43 = sbr.rel (0) target = $region25
    $region24: #{wave_function_forward.1} parent=1 // pred_region
      %s45 = ssub.s32 32, 32
      %46 = vsyncadd [#allocation4], %s45
      %s47 = sshll.u32 [#allocation3], 4
      %s48 = int_to_ptr.vmem [resolvable:$true] %s47
      %53 = dma.hbm_to_vmem [thread:$0]  %s5, 32, %s48, [#allocation4], 16, 16, 1
    $region25: #{wave_function_forward.1} parent=1 // pred_fallthru
      _
    // Predicated region
    $region26: #{wave_function_forward.1} parent=1 // pred_check
      _
    $region27: #{wave_function_forward.1} parent=1 // pred_check_branch
      %55 = sbr.rel (0) target = $region29
    $region28: #{wave_function_forward.1} parent=1 // pred_region
      %s57 = ssub.s32 32, 32
      %58 = vsyncadd [#allocation6], %s57
      %s59 = sshll.u32 [#allocation5], 4
      %s60 = int_to_ptr.vmem [resolvable:$true] %s59
      %65 = dma.hbm_to_vmem [thread:$0]  %s6, 32, %s60, [#allocation6], 16, 16, 1
    $region29: #{wave_function_forward.1} parent=1 // pred_fallthru
      _
    // Predicated region
    $region30: #{wave_function_forward.1} parent=1 // pred_check
      _
    $region31: #{wave_function_forward.1} parent=1 // pred_check_branch
      %67 = sbr.rel (0) target = $region33
    $region32: #{wave_function_forward.1} parent=1 // pred_region
      %s69 = ssub.s32 32, 32
      %70 = vsyncadd [#allocation6], %s69
      %s71 = sshll.u32 [#allocation7], 4
      %s72 = int_to_ptr.vmem [resolvable:$true] %s71
      %77 = dma.hbm_to_vmem [thread:$0]  %s7, 32, %s72, [#allocation6], 16, 16, 1
    $region33: #{wave_function_forward.1} parent=1 // pred_fallthru
      _
    // Predicated region
    $region34: #{wave_function_forward.1} parent=1 // pred_check
      _
    $region35: #{wave_function_forward.1} parent=1 // pred_check_branch
      %79 = sbr.rel (0) target = $region37
    $region36: #{wave_function_forward.1} parent=1 // pred_region
      _
    $region37: #{wave_function_forward.1} parent=1 // pred_fallthru
      _
    // Predicated region
    $region38: #{wave_function_forward.1} parent=1 // pred_check
      _
    $region39: #{wave_function_forward.1} parent=1 // pred_check_branch
      %81 = sbr.rel (0) target = $region41
    $region40: #{wave_function_forward.1} parent=1 // pred_region
      %s83 = ssub.s32 32, 32
      %84 = vsyncadd [#allocation9], %s83
      %s85 = sshll.u32 [#allocation8], 4
      %s86 = int_to_ptr.vmem [resolvable:$true] %s85
      %91 = dma.hbm_to_vmem [thread:$0]  %s9, 32, %s86, [#allocation9], 16, 16, 1
    $region41: #{wave_function_forward.1} parent=1 // pred_fallthru
      _
    // Predicated region
    $region42: #{wave_function_forward.1} parent=1 // pred_check
      _
    $region43: #{wave_function_forward.1} parent=1 // pred_check_branch
      %93 = sbr.rel (0) target = $region45
    $region44: #{wave_function_forward.1} parent=1 // pred_region
      _
    $region45: #{wave_function_forward.1} parent=1 // pred_fallthru
      _
    // Predicated region
    $region46: #{wave_function_forward.1} parent=1 // pred_check
      _
    $region47: #{wave_function_forward.1} parent=1 // pred_check_branch
      %95 = sbr.rel (0) target = $region49
    $region48: #{wave_function_forward.1} parent=1 // pred_region
      %s97 = ssub.s32 32, 32
      %98 = vsyncadd [#allocation9], %s97
      %s99 = sshll.u32 [#allocation10], 4
      %s100 = int_to_ptr.vmem [resolvable:$true] %s99
      %105 = dma.hbm_to_vmem [thread:$0]  %s11, 32, %s100, [#allocation9], 16, 16, 1
    $region49: #{wave_function_forward.1} parent=1 // pred_fallthru
      _
    // Predicated region
    $region50: #{wave_function_forward.1} parent=1 // pred_check
      _
    $region51: #{wave_function_forward.1} parent=1 // pred_check_branch
      %107 = sbr.rel (0) target = $region53
    $region52: #{wave_function_forward.1} parent=1 // pred_region
      %s109 = ssub.s32 32, 32
      %110 = vsyncadd [#allocation12], %s109
      %s111 = sshll.u32 [#allocation11], 4
      %s112 = int_to_ptr.vmem [resolvable:$true] %s111
      %117 = dma.hbm_to_vmem [thread:$0]  %s12, 32, %s112, [#allocation12], 16, 16, 1
    $region53: #{wave_function_forward.1} parent=1 // pred_fallthru
      _
    // Predicated region
    $region54: #{wave_function_forward.1} parent=1 // pred_check
      _
    $region55: #{wave_function_forward.1} parent=1 // pred_check_branch
      %119 = sbr.rel (0) target = $region57
    $region56: #{wave_function_forward.1} parent=1 // pred_region
      %s121 = ssub.s32 32, 32
      %122 = vsyncadd [#allocation12], %s121
      %s123 = sshll.u32 [#allocation13], 4
      %s124 = int_to_ptr.vmem [resolvable:$true] %s123
      %129 = dma.hbm_to_vmem [thread:$0]  %s13, 32, %s124, [#allocation12], 16, 16, 1
    $region57: #{wave_function_forward.1} parent=1 // pred_fallthru
      _
    // Predicated region
    $region58: #{wave_function_forward.1} parent=1 // pred_check
      _
    $region59: #{wave_function_forward.1} parent=1 // pred_check_branch
      %131 = sbr.rel (0) target = $region61
    $region60: #{wave_function_forward.1} parent=1 // pred_region
      _
    $region61: #{wave_function_forward.1} parent=1 // pred_fallthru
      _
    // Predicated region
    $region62: #{wave_function_forward.1} parent=1 // pred_check
      _
    $region63: #{wave_function_forward.1} parent=1 // pred_check_branch
      %133 = sbr.rel (0) target = $region65
    $region64: #{wave_function_forward.1} parent=1 // pred_region
      %s135 = ssub.s32 16, 16
      %136 = vsyncadd [#allocation15], %s135
      %s138 = sshll.u32 [#allocation14], 4
      %s139 = int_to_ptr.vmem [resolvable:$true] %s138
      %141 = dma.hbm_to_vmem [thread:$0]  %s15, 16, %s139, [#allocation15]
    $region65: #{wave_function_forward.1} parent=1 // pred_fallthru
      _
    // Predicated region
    $region66: #{wave_function_forward.1} parent=1 // pred_check
      _
    $region67: #{wave_function_forward.1} parent=1 // pred_check_branch
      %143 = sbr.rel (0) target = $region69
    $region68: #{wave_function_forward.1} parent=1 // pred_region
      _
    $region69: #{wave_function_forward.1} parent=1 // pred_fallthru
      _
    // Predicated region
    $region70: #{wave_function_forward.1} parent=1 // pred_check
      _
    $region71: #{wave_function_forward.1} parent=1 // pred_check_branch
      %145 = sbr.rel (0) target = $region73
    $region72: #{wave_function_forward.1} parent=1 // pred_region
      %s147 = ssub.s32 16, 16
      %148 = vsyncadd [#allocation15], %s147
      %s150 = sshll.u32 [#allocation16], 4
      %s151 = int_to_ptr.vmem [resolvable:$true] %s150
      %153 = dma.hbm_to_vmem [thread:$0]  %s17, 16, %s151, [#allocation15]
    $region73: #{wave_function_forward.1} parent=1 // pred_fallthru
      _
    // Predicated region
    $region74: #{wave_function_forward.1} parent=1 // pred_check
      _
    $region75: #{wave_function_forward.1} parent=1 // pred_check_branch
      %155 = sbr.rel (0) target = $region77
    $region76: #{wave_function_forward.1} parent=1 // pred_region
      _
    $region77: #{wave_function_forward.1} parent=1 // pred_fallthru
      _
    // Predicated region
    $region78: #{wave_function_forward.1} parent=1 // pred_check
      _
    $region79: #{wave_function_forward.1} parent=1 // pred_check_branch
      %157 = sbr.rel (0) target = $region81
    $region80: #{wave_function_forward.1} parent=1 // pred_region
      _
    $region81: #{wave_function_forward.1} parent=1 // pred_fallthru
      _
    // Predicated region
    $region82: #{wave_function_forward.1} parent=1 // pred_check
      _
    $region83: #{wave_function_forward.1} parent=1 // pred_check_branch
      %159 = sbr.rel (0) target = $region85
    $region84: #{wave_function_forward.1} parent=1 // pred_region
      %160 = dma.done [#allocation4], 32
    $region85: #{wave_function_forward.1} parent=1 // pred_fallthru
      _
    // Predicated region
    $region86: #{wave_function_forward.1} parent=1 // pred_check
      _
    $region87: #{wave_function_forward.1} parent=1 // pred_check_branch
      %162 = sbr.rel (0) target = $region89
    $region88: #{wave_function_forward.1} parent=1 // pred_region
      %163 = dma.done [#allocation6], 32
    $region89: #{wave_function_forward.1} parent=1 // pred_fallthru
      _
    // Predicated region
    $region90: #{wave_function_forward.1} parent=1 // pred_check
      _
    $region91: #{wave_function_forward.1} parent=1 // pred_check_branch
      %165 = sbr.rel (0) target = $region93
    $region92: #{wave_function_forward.1} parent=1 // pred_region
      %166 = dma.done [#allocation6], 32
    $region93: #{wave_function_forward.1} parent=1 // pred_fallthru
      _
    // Predicated region
    $region94: #{wave_function_forward.1} parent=1 // pred_check
      _
    $region95: #{wave_function_forward.1} parent=1 // pred_check_branch
      %168 = sbr.rel (0) target = $region97
    $region96: #{wave_function_forward.1} parent=1 // pred_region
      %169 = dma.done [#allocation9], 32
    $region97: #{wave_function_forward.1} parent=1 // pred_fallthru
      _
    // Predicated region
    $region98: #{wave_function_forward.1} parent=1 // pred_check
      _
    $region99: #{wave_function_forward.1} parent=1 // pred_check_branch
      %171 = sbr.rel (0) target = $region101
    $region100: #{wave_function_forward.1} parent=1 // pred_region
      %172 = dma.done [#allocation9], 32
    $region101: #{wave_function_forward.1} parent=1 // pred_fallthru
      _
    // Predicated region
    $region102: #{wave_function_forward.1} parent=1 // pred_check
      _
    $region103: #{wave_function_forward.1} parent=1 // pred_check_branch
      %174 = sbr.rel (0) target = $region105
    $region104: #{wave_function_forward.1} parent=1 // pred_region
      %175 = dma.done [#allocation12], 32
    $region105: #{wave_function_forward.1} parent=1 // pred_fallthru
      _
    // Predicated region
    $region106: #{wave_function_forward.1} parent=1 // pred_check
      _
    $region107: #{wave_function_forward.1} parent=1 // pred_check_branch
      %177 = sbr.rel (0) target = $region109
    $region108: #{wave_function_forward.1} parent=1 // pred_region
      %178 = dma.done [#allocation12], 32
    $region109: #{wave_function_forward.1} parent=1 // pred_fallthru
      _
    // Predicated region
    $region110: #{wave_function_forward.1} parent=1 // pred_check
      _
    $region111: #{wave_function_forward.1} parent=1 // pred_check_branch
      %180 = sbr.rel (0) target = $region113
    $region112: #{wave_function_forward.1} parent=1 // pred_region
      %181 = dma.done [#allocation15], 16
    $region113: #{wave_function_forward.1} parent=1 // pred_fallthru
      _
    // Predicated region
    $region114: #{wave_function_forward.1} parent=1 // pred_check
      _
    $region115: #{wave_function_forward.1} parent=1 // pred_check_branch
      %183 = sbr.rel (0) target = $region117
    $region116: #{wave_function_forward.1} parent=1 // pred_region
      %184 = dma.done [#allocation15], 16
    $region117: #{wave_function_forward.1} parent=1 // pred_fallthru
      _
    %v186 = vld [vmem:[%s0] sm:$0x3]
    %v187 = vld [vmem:[%s1] sm:$0xff]
    %v188 = vld [vmem:[%s1 + $0x8] sm:$0xff]
    %s189 = scalar_lea.vmem %s1, 16
    %v190 = vld [vmem:[%s189] sm:$0xff]
    %v191 = vld [vmem:[%s189 + $0x8] sm:$0xff]
    %v192 = vcvt.s32.f32 %v186
    %v193 = vlaneseq
    %v194 = vshrl.u32 %v193, 7
    %v195 = vsub.s32 0, %v194
    %v196 = vrot.slane %v192, %v195
    %198 = vbcast.lane.b32.xlu0 %v196, 256
    %v199 = vpop.permute.xlu0 %198
    %s201 = sor.u32 256, 8
    %202 = vbcast.lane.b32.xlu0 %v196, %s201
    %v203 = vpop.permute.xlu0 %202
    %v204 = vlaneseq
    %v205 = vshrl.u32 %v204, 7
    %v206 = vsub.s32 1, %v205
    %v207 = vrot.slane %v192, %v206
    %209 = vbcast.lane.b32.xlu0 %v207, 256
    %v210 = vpop.permute.xlu0 %209
    %s212 = sor.u32 256, 8
    %213 = vbcast.lane.b32.xlu0 %v207, %s212
    %v214 = vpop.permute.xlu0 %213
    %v215 = vsub.f32 %v190, %v187
    %v216 = vsub.f32 %v191, %v188
    %v217 = vmul.f32 %v199, %v215
    %v218 = vmul.f32 %v203, %v216
    %v219 = vmul.f32 %v210, %v215
    %v220 = vmul.f32 %v214, %v216
    %v221 = vadd.f32 %v187, %v217
    %v222 = vadd.f32 %v188, %v218
    %v223 = vadd.f32 %v187, %v219
    %v224 = vadd.f32 %v188, %v220
    %v225 = vlaneseq
    %v226 = vand.u32 %v225, 127
    %vm227 = vcmp.ge.s32.totalorder %v226, 0
    %vm228 = vcmp.lt.s32.totalorder %v226, 8
    %vm229 = vmand %vm227, %vm228
    %v230 = vsel %vm229, 1, 0
    %v231 = vcvt.s32.f32 %v230
    %vm232 = vcmp.ge.s32.totalorder %v226, 8
    %vm233 = vcmp.lt.s32.totalorder %v226, 16
    %vm234 = vmand %vm232, %vm233
    %v235 = vsel %vm234, 1, 0
    %v236 = vcvt.s32.f32 %v235
    %vm237 = vcmp.ge.s32.totalorder %v226, 16
    %vm238 = vcmp.lt.s32.totalorder %v226, 24
    %vm239 = vmand %vm237, %vm238
    %v240 = vsel %vm239, 1, 0
    %v241 = vcvt.s32.f32 %v240
    %vm242 = vcmp.ge.s32.totalorder %v226, 24
    %vm243 = vcmp.lt.s32.totalorder %v226, 32
    %vm244 = vmand %vm242, %vm243
    %v245 = vsel %vm244, 1, 0
    %v246 = vcvt.s32.f32 %v245
    %v247 = vpack.c.bf16 %v222, %v221
    %v248 = vpack.c.bf16 %v224, %v223
    %v249 = vld [vmem:[%s2] sm:$0xff]
    %v250 = vld [vmem:[%s2 + $0x8] sm:$0xff]
    %v251 = vld [vmem:[%s2 + $0x10] sm:$0xff]
    %v252 = vld [vmem:[%s2 + $0x18] sm:$0xff]
    %v253 = vpack.c.bf16 %v250, %v249
    %v254 = vpack.c.bf16 %v252, %v251
    %v255 = vld [vmem:[%s3] sm:$0x1]
    %v257 = vlaneseq
    %v258 = vshrl.u32 %v257, 7
    %v259 = vsub.s32 0, %v258
    %v260 = vrot.slane %v255, %v259
    %vm262 = vcmask 261120
    %v264 = vsel %vm262, %v247, 0
    %v267 = vsel %vm262, %v248, 0
    %269 = vmatprep.subr.bf16.mxu0 0
    %270 = vmatpush1.bf16.msra.mxu0 %v253
    %271 = vmatprep.subr.bf16.mxu0 0
    %272 = vmatpush1.bf16.msra.mxu0 %v254
    %273 = vmatprep.subr.bf16.mxu0 0
    %274 = vmatpush1.bf16.msra.mxu0 0
    %275 = vmatprep.subr.bf16.mxu0 0
    %276 = vmatpush1.bf16.msra.mxu0 0
    %277 = vmatprep.subr.bf16.mxu0 0
    %278 = vmatpush1.bf16.msra.mxu0 0
    %279 = vmatprep.subr.bf16.mxu0 0
    %280 = vmatpush1.bf16.msra.mxu0 0
    %281 = vmatprep.subr.bf16.mxu0 0
    %282 = vmatpush1.bf16.msra.mxu0 0
    %283 = vmatprep.subr.bf16.mxu0 0
    %284 = vmatpush1.bf16.msra.mxu0 0
    %285 = vmatprep.subr.bf16.mxu0 0
    %286 = vmatpush1.bf16.msra.mxu0 0
    %287 = vmatprep.subr.bf16.mxu0 0
    %288 = vmatpush1.bf16.msra.mxu0 0
    %289 = vmatprep.subr.bf16.mxu0 0
    %290 = vmatpush1.bf16.msra.mxu0 0
    %291 = vmatprep.subr.bf16.mxu0 0
    %292 = vmatpush1.bf16.msra.mxu0 0
    %293 = vmatprep.subr.bf16.mxu0 0
    %294 = vmatpush1.bf16.msra.mxu0 0
    %295 = vmatprep.subr.bf16.mxu0 0
    %296 = vmatpush1.bf16.msra.mxu0 0
    %297 = vmatprep.subr.bf16.mxu0 0
    %298 = vmatpush1.bf16.msra.mxu0 0
    %299 = vmatprep.subr.bf16.mxu0 0
    %300 = vmatpush1.bf16.msra.mxu0 0
    %301 = vmatprep.mubr.bf16.mxu0 0
    %302 = vmatmul.mubr.bf16.gmra.mrb[0].mxu0 %v264
    %v303 = vpop.f32.mrb[0].mxu0
    %v304 = vadd.f32 %v260, %v303
    %v305 = vpop.f32.mrb[0].mxu0
    %v306 = vpop.f32.mrb[0].mxu0
    %v307 = vadd.f32 %v260, %v306
    %v308 = vpop.f32.mrb[0].mxu0
    %309 = vmatprep.mubr.bf16.mxu0 0
    %310 = vmatmul.mubr.bf16.gmra.mrb[0].mxu0 %v267
    %v311 = vpop.f32.mrb[0].mxu0
    %v312 = vadd.f32 %v260, %v311
    %v313 = vpop.f32.mrb[0].mxu0
    %v314 = vpop.f32.mrb[0].mxu0
    %v315 = vadd.f32 %v260, %v314
    %v316 = vpop.f32.mrb[0].mxu0
    %317 = vdwg.mxu0
    %s318 = scalar_lea.vmem %s2, 32
    %v319 = vld [vmem:[%s318] sm:$0xff]
    %v320 = vld [vmem:[%s318 + $0x8] sm:$0xff]
    %v321 = vld [vmem:[%s318 + $0x10] sm:$0xff]
    %v322 = vld [vmem:[%s318 + $0x18] sm:$0xff]
    %v323 = vpack.c.bf16 %v320, %v319
    %v324 = vpack.c.bf16 %v322, %v321
    %s325 = scalar_lea.vmem %s3, 1
    %v326 = vld [vmem:[%s325] sm:$0x1]
    %v328 = vlaneseq
    %v329 = vshrl.u32 %v328, 7
    %v330 = vsub.s32 0, %v329
    %v331 = vrot.slane %v326, %v330
    %333 = vmatprep.subr.bf16.mxu0 0
    %334 = vmatpush1.bf16.msra.mxu0 %v323
    %335 = vmatprep.subr.bf16.mxu0 0
    %336 = vmatpush1.bf16.msra.mxu0 %v324
    %337 = vmatprep.subr.bf16.mxu0 0
    %338 = vmatpush1.bf16.msra.mxu0 0
    %339 = vmatprep.subr.bf16.mxu0 0
    %340 = vmatpush1.bf16.msra.mxu0 0
    %341 = vmatprep.subr.bf16.mxu0 0
    %342 = vmatpush1.bf16.msra.mxu0 0
    %343 = vmatprep.subr.bf16.mxu0 0
    %344 = vmatpush1.bf16.msra.mxu0 0
    %345 = vmatprep.subr.bf16.mxu0 0
    %346 = vmatpush1.bf16.msra.mxu0 0
    %347 = vmatprep.subr.bf16.mxu0 0
    %348 = vmatpush1.bf16.msra.mxu0 0
    %349 = vmatprep.subr.bf16.mxu0 0
    %350 = vmatpush1.bf16.msra.mxu0 0
    %351 = vmatprep.subr.bf16.mxu0 0
    %352 = vmatpush1.bf16.msra.mxu0 0
    %353 = vmatprep.subr.bf16.mxu0 0
    %354 = vmatpush1.bf16.msra.mxu0 0
    %355 = vmatprep.subr.bf16.mxu0 0
    %356 = vmatpush1.bf16.msra.mxu0 0
    %357 = vmatprep.subr.bf16.mxu0 0
    %358 = vmatpush1.bf16.msra.mxu0 0
    %359 = vmatprep.subr.bf16.mxu0 0
    %360 = vmatpush1.bf16.msra.mxu0 0
    %361 = vmatprep.subr.bf16.mxu0 0
    %362 = vmatpush1.bf16.msra.mxu0 0
    %363 = vmatprep.subr.bf16.mxu0 0
    %364 = vmatpush1.bf16.msra.mxu0 0
    %365 = vmatprep.mubr.bf16.mxu0 0
    %366 = vmatmul.mubr.bf16.gmra.mrb[0].mxu0 %v264
    %v367 = vpop.f32.mrb[0].mxu0
    %v368 = vadd.f32 %v331, %v367
    %v369 = vpop.f32.mrb[0].mxu0
    %v370 = vpop.f32.mrb[0].mxu0
    %v371 = vadd.f32 %v331, %v370
    %v372 = vpop.f32.mrb[0].mxu0
    %373 = vmatprep.mubr.bf16.mxu0 0
    %374 = vmatmul.mubr.bf16.gmra.mrb[0].mxu0 %v267
    %v375 = vpop.f32.mrb[0].mxu0
    %v376 = vadd.f32 %v331, %v375
    %v377 = vpop.f32.mrb[0].mxu0
    %v378 = vpop.f32.mrb[0].mxu0
    %v379 = vadd.f32 %v331, %v378
    %v380 = vpop.f32.mrb[0].mxu0
    %381 = vdwg.mxu0
    %s382 = scalar_lea.vmem %s2, 64
    %v383 = vld [vmem:[%s382] sm:$0xff]
    %v384 = vld [vmem:[%s382 + $0x8] sm:$0xff]
    %v385 = vld [vmem:[%s382 + $0x10] sm:$0xff]
    %v386 = vld [vmem:[%s382 + $0x18] sm:$0xff]
    %v387 = vpack.c.bf16 %v384, %v383
    %v388 = vpack.c.bf16 %v386, %v385
    %s389 = scalar_lea.vmem %s3, 2
    %v390 = vld [vmem:[%s389] sm:$0x1]
    %v392 = vlaneseq
    %v393 = vshrl.u32 %v392, 7
    %v394 = vsub.s32 0, %v393
    %v395 = vrot.slane %v390, %v394
    %397 = vmatprep.subr.bf16.mxu0 0
    %398 = vmatpush1.bf16.msra.mxu0 %v387
    %399 = vmatprep.subr.bf16.mxu0 0
    %400 = vmatpush1.bf16.msra.mxu0 %v388
    %401 = vmatprep.subr.bf16.mxu0 0
    %402 = vmatpush1.bf16.msra.mxu0 0
    %403 = vmatprep.subr.bf16.mxu0 0
    %404 = vmatpush1.bf16.msra.mxu0 0
    %405 = vmatprep.subr.bf16.mxu0 0
    %406 = vmatpush1.bf16.msra.mxu0 0
    %407 = vmatprep.subr.bf16.mxu0 0
    %408 = vmatpush1.bf16.msra.mxu0 0
    %409 = vmatprep.subr.bf16.mxu0 0
    %410 = vmatpush1.bf16.msra.mxu0 0
    %411 = vmatprep.subr.bf16.mxu0 0
    %412 = vmatpush1.bf16.msra.mxu0 0
    %413 = vmatprep.subr.bf16.mxu0 0
    %414 = vmatpush1.bf16.msra.mxu0 0
    %415 = vmatprep.subr.bf16.mxu0 0
    %416 = vmatpush1.bf16.msra.mxu0 0
    %417 = vmatprep.subr.bf16.mxu0 0
    %418 = vmatpush1.bf16.msra.mxu0 0
    %419 = vmatprep.subr.bf16.mxu0 0
    %420 = vmatpush1.bf16.msra.mxu0 0
    %421 = vmatprep.subr.bf16.mxu0 0
    %422 = vmatpush1.bf16.msra.mxu0 0
    %423 = vmatprep.subr.bf16.mxu0 0
    %424 = vmatpush1.bf16.msra.mxu0 0
    %425 = vmatprep.subr.bf16.mxu0 0
    %426 = vmatpush1.bf16.msra.mxu0 0
    %427 = vmatprep.subr.bf16.mxu0 0
    %428 = vmatpush1.bf16.msra.mxu0 0
    %429 = vmatprep.mubr.bf16.mxu0 0
    %430 = vmatmul.mubr.bf16.gmra.mrb[0].mxu0 %v264
    %v431 = vpop.f32.mrb[0].mxu0
    %v432 = vadd.f32 %v395, %v431
    %v433 = vpop.f32.mrb[0].mxu0
    %v434 = vpop.f32.mrb[0].mxu0
    %v435 = vadd.f32 %v395, %v434
    %v436 = vpop.f32.mrb[0].mxu0
    %437 = vmatprep.mubr.bf16.mxu0 0
    %438 = vmatmul.mubr.bf16.gmra.mrb[0].mxu0 %v267
    %v439 = vpop.f32.mrb[0].mxu0
    %v440 = vadd.f32 %v395, %v439
    %v441 = vpop.f32.mrb[0].mxu0
    %v442 = vpop.f32.mrb[0].mxu0
    %v443 = vadd.f32 %v395, %v442
    %v444 = vpop.f32.mrb[0].mxu0
    %445 = vdwg.mxu0
    %v446 = vmul.f32 %v304, 0.35355338
    %v447 = vmul.f32 %v307, 0.35355338
    %v448 = vmul.f32 %v312, 0.35355338
    %v449 = vmul.f32 %v315, 0.35355338
    %v450 = vpack.c.bf16 %v371, %v368
    %v451 = vpack.c.bf16 %v379, %v376
    %v452 = vpack.c.bf16 %v435, %v432
    %v453 = vpack.c.bf16 %v443, %v440
    %v454 = vmul.f32 %v446, %v231
    %v455 = vmul.f32 %v447, %v231
    %v456 = vmul.f32 %v448, %v231
    %v457 = vmul.f32 %v449, %v231
    %v458 = vpack.c.bf16 %v455, %v454
    %v459 = vpack.c.bf16 %v457, %v456
    %v461 = vsel %vm262, %v458, 0
    %v464 = vsel %vm262, %v450, 0
    %466 = vmatprep.subr.bf16.mxu0 0
    %467 = vmatpush1.bf16.xpose.msra.mxu0 %v464
    %468 = vmatprep.subr.bf16.mxu0 0
    %469 = vmatpush1.bf16.xpose.msra.mxu0 0
    %470 = vmatprep.subr.bf16.mxu0 0
    %471 = vmatpush1.bf16.xpose.msra.mxu0 0
    %472 = vmatprep.subr.bf16.mxu0 0
    %473 = vmatpush1.bf16.xpose.msra.mxu0 0
    %474 = vmatprep.subr.bf16.mxu0 0
    %475 = vmatpush1.bf16.xpose.msra.mxu0 0
    %476 = vmatprep.subr.bf16.mxu0 0
    %477 = vmatpush1.bf16.xpose.msra.mxu0 0
    %478 = vmatprep.subr.bf16.mxu0 0
    %479 = vmatpush1.bf16.xpose.msra.mxu0 0
    %480 = vmatprep.subr.bf16.mxu0 0
    %481 = vmatpush1.bf16.xpose.msra.mxu0 0
    %482 = vmatprep.subr.bf16.mxu0 0
    %483 = vmatpush1.bf16.xpose.msra.mxu0 0
    %484 = vmatprep.subr.bf16.mxu0 0
    %485 = vmatpush1.bf16.xpose.msra.mxu0 0
    %486 = vmatprep.subr.bf16.mxu0 0
    %487 = vmatpush1.bf16.xpose.msra.mxu0 0
    %488 = vmatprep.subr.bf16.mxu0 0
    %489 = vmatpush1.bf16.xpose.msra.mxu0 0
    %490 = vmatprep.subr.bf16.mxu0 0
    %491 = vmatpush1.bf16.xpose.msra.mxu0 0
    %492 = vmatprep.subr.bf16.mxu0 0
    %493 = vmatpush1.bf16.xpose.msra.mxu0 0
    %494 = vmatprep.subr.bf16.mxu0 0
    %495 = vmatpush1.bf16.xpose.msra.mxu0 0
    %496 = vmatprep.subr.bf16.mxu0 0
    %497 = vmatpush1.bf16.xpose.msra.mxu0 0
    %498 = vmatprep.mubr.bf16.mxu0 0
    %499 = vmatmul.mubr.bf16.gmra.mrb[0].mxu0 %v461
    %v500 = vpop.f32.mrb[0].mxu0
    %v501 = vadd.f32 0.0, %v500
    %v502 = vpop.f32.mrb[0].mxu0
    %v503 = vpop.f32.mrb[0].mxu0
    %v504 = vadd.f32 0.0, %v503
    %v505 = vpop.f32.mrb[0].mxu0
    %506 = vdwg.mxu0
    %v508 = vsel %vm262, %v459, 0
    %v511 = vsel %vm262, %v451, 0
    %513 = vmatprep.subr.bf16.mxu0 0
    %514 = vmatpush1.bf16.xpose.msra.mxu0 %v511
    %515 = vmatprep.subr.bf16.mxu0 0
    %516 = vmatpush1.bf16.xpose.msra.mxu0 0
    %517 = vmatprep.subr.bf16.mxu0 0
    %518 = vmatpush1.bf16.xpose.msra.mxu0 0
    %519 = vmatprep.subr.bf16.mxu0 0
    %520 = vmatpush1.bf16.xpose.msra.mxu0 0
    %521 = vmatprep.subr.bf16.mxu0 0
    %522 = vmatpush1.bf16.xpose.msra.mxu0 0
    %523 = vmatprep.subr.bf16.mxu0 0
    %524 = vmatpush1.bf16.xpose.msra.mxu0 0
    %525 = vmatprep.subr.bf16.mxu0 0
    %526 = vmatpush1.bf16.xpose.msra.mxu0 0
    %527 = vmatprep.subr.bf16.mxu0 0
    %528 = vmatpush1.bf16.xpose.msra.mxu0 0
    %529 = vmatprep.subr.bf16.mxu0 0
    %530 = vmatpush1.bf16.xpose.msra.mxu0 0
    %531 = vmatprep.subr.bf16.mxu0 0
    %532 = vmatpush1.bf16.xpose.msra.mxu0 0
    %533 = vmatprep.subr.bf16.mxu0 0
    %534 = vmatpush1.bf16.xpose.msra.mxu0 0
    %535 = vmatprep.subr.bf16.mxu0 0
    %536 = vmatpush1.bf16.xpose.msra.mxu0 0
    %537 = vmatprep.subr.bf16.mxu0 0
    %538 = vmatpush1.bf16.xpose.msra.mxu0 0
    %539 = vmatprep.subr.bf16.mxu0 0
    %540 = vmatpush1.bf16.xpose.msra.mxu0 0
    %541 = vmatprep.subr.bf16.mxu0 0
    %542 = vmatpush1.bf16.xpose.msra.mxu0 0
    %543 = vmatprep.subr.bf16.mxu0 0
    %544 = vmatpush1.bf16.xpose.msra.mxu0 0
    %545 = vmatprep.mubr.bf16.mxu0 0
    %546 = vmatmul.mubr.bf16.gmra.mrb[0].mxu0 %v508
    %v547 = vpop.f32.mrb[0].mxu0
    %v548 = vadd.f32 0.0, %v547
    %v549 = vpop.f32.mrb[0].mxu0
    %v550 = vpop.f32.mrb[0].mxu0
    %v551 = vadd.f32 0.0, %v550
    %v552 = vpop.f32.mrb[0].mxu0
    %553 = vdwg.mxu0
    %vm554 = vcmask 130048
    %v555 = vsel %vm554, %v501, -inf
    %556 = vmax.xlane.f32.xlu0 %v555
    %v557 = vpop.xlane.xlu0 %556
    %v558 = vsel %vm554, %v504, -inf
    %559 = vmax.xlane.f32.xlu0 %v558
    %v560 = vpop.xlane.xlu0 %559
    %v561 = vsel %vm554, %v548, -inf
    %562 = vmax.xlane.f32.xlu0 %v561
    %v563 = vpop.xlane.xlu0 %562
    %v564 = vsel %vm554, %v551, -inf
    %565 = vmax.xlane.f32.xlu0 %v564
    %v566 = vpop.xlane.xlu0 %565
    %v567 = vsub.f32 %v501, %v557
    %v568 = vsub.f32 %v504, %v560
    %v569 = vsub.f32 %v548, %v563
    %v570 = vsub.f32 %v551, %v566
    %v571 = vmul.f32 %v567, 1.442695
    %v572 = vpow.pop %v571
    %v573 = vmul.f32 %v568, 1.442695
    %v574 = vpow.pop %v573
    %v575 = vmul.f32 %v569, 1.442695
    %v576 = vpow.pop %v575
    %v577 = vmul.f32 %v570, 1.442695
    %v578 = vpow.pop %v577
    %v579 = vsel %vm554, %v572, 0.0
    %580 = vadd.xlane.f32.xlu0 %v579
    %v581 = vpop.xlane.xlu0 %580
    %v582 = vsel %vm554, %v574, 0.0
    %583 = vadd.xlane.f32.xlu0 %v582
    %v584 = vpop.xlane.xlu0 %583
    %v585 = vsel %vm554, %v576, 0.0
    %586 = vadd.xlane.f32.xlu0 %v585
    %v587 = vpop.xlane.xlu0 %586
    %v588 = vsel %vm554, %v578, 0.0
    %589 = vadd.xlane.f32.xlu0 %v588
    %v590 = vpop.xlane.xlu0 %589
    %v591 = vrcp.pop %v581
    %v592 = vmul.f32 %v572, %v591
    %v593 = vrcp.pop %v584
    %v594 = vmul.f32 %v574, %v593
    %v595 = vrcp.pop %v587
    %v596 = vmul.f32 %v576, %v595
    %v597 = vrcp.pop %v590
    %v598 = vmul.f32 %v578, %v597
    %v599 = vpack.c.bf16 %v594, %v592
    %v600 = vpack.c.bf16 %v598, %v596
    %v602 = vsel %vm554, %v599, 0
    %604 = vmatprep.subr.bf16.mxu0 0
    %605 = vmatpush1.bf16.msra.mxu0 %v452
    %606 = vmatprep.subr.bf16.mxu0 0
    %607 = vmatpush1.bf16.msra.mxu0 0
    %608 = vmatprep.subr.bf16.mxu0 0
    %609 = vmatpush1.bf16.msra.mxu0 0
    %610 = vmatprep.subr.bf16.mxu0 0
    %611 = vmatpush1.bf16.msra.mxu0 0
    %612 = vmatprep.subr.bf16.mxu0 0
    %613 = vmatpush1.bf16.msra.mxu0 0
    %614 = vmatprep.subr.bf16.mxu0 0
    %615 = vmatpush1.bf16.msra.mxu0 0
    %616 = vmatprep.subr.bf16.mxu0 0
    %617 = vmatpush1.bf16.msra.mxu0 0
    %618 = vmatprep.subr.bf16.mxu0 0
    %619 = vmatpush1.bf16.msra.mxu0 0
    %620 = vmatprep.subr.bf16.mxu0 0
    %621 = vmatpush1.bf16.msra.mxu0 0
    %622 = vmatprep.subr.bf16.mxu0 0
    %623 = vmatpush1.bf16.msra.mxu0 0
    %624 = vmatprep.subr.bf16.mxu0 0
    %625 = vmatpush1.bf16.msra.mxu0 0
    %626 = vmatprep.subr.bf16.mxu0 0
    %627 = vmatpush1.bf16.msra.mxu0 0
    %628 = vmatprep.subr.bf16.mxu0 0
    %629 = vmatpush1.bf16.msra.mxu0 0
    %630 = vmatprep.subr.bf16.mxu0 0
    %631 = vmatpush1.bf16.msra.mxu0 0
    %632 = vmatprep.subr.bf16.mxu0 0
    %633 = vmatpush1.bf16.msra.mxu0 0
    %634 = vmatprep.subr.bf16.mxu0 0
    %635 = vmatpush1.bf16.msra.mxu0 0
    %636 = vmatprep.mubr.bf16.mxu0 0
    %637 = vmatmul.mubr.bf16.gmra.mrb[0].mxu0 %v602
    %v638 = vpop.f32.mrb[0].mxu0
    %v639 = vadd.f32 0.0, %v638
    %v640 = vpop.f32.mrb[0].mxu0
    %v641 = vpop.f32.mrb[0].mxu0
    %v642 = vadd.f32 0.0, %v641
    %v643 = vpop.f32.mrb[0].mxu0
    %644 = vdwg.mxu0
    %v646 = vsel %vm554, %v600, 0
    %648 = vmatprep.subr.bf16.mxu0 0
    %649 = vmatpush1.bf16.msra.mxu0 %v453
    %650 = vmatprep.subr.bf16.mxu0 0
    %651 = vmatpush1.bf16.msra.mxu0 0
    %652 = vmatprep.subr.bf16.mxu0 0
    %653 = vmatpush1.bf16.msra.mxu0 0
    %654 = vmatprep.subr.bf16.mxu0 0
    %655 = vmatpush1.bf16.msra.mxu0 0
    %656 = vmatprep.subr.bf16.mxu0 0
    %657 = vmatpush1.bf16.msra.mxu0 0
    %658 = vmatprep.subr.bf16.mxu0 0
    %659 = vmatpush1.bf16.msra.mxu0 0
    %660 = vmatprep.subr.bf16.mxu0 0
    %661 = vmatpush1.bf16.msra.mxu0 0
    %662 = vmatprep.subr.bf16.mxu0 0
    %663 = vmatpush1.bf16.msra.mxu0 0
    %664 = vmatprep.subr.bf16.mxu0 0
    %665 = vmatpush1.bf16.msra.mxu0 0
    %666 = vmatprep.subr.bf16.mxu0 0
    %667 = vmatpush1.bf16.msra.mxu0 0
    %668 = vmatprep.subr.bf16.mxu0 0
    %669 = vmatpush1.bf16.msra.mxu0 0
    %670 = vmatprep.subr.bf16.mxu0 0
    %671 = vmatpush1.bf16.msra.mxu0 0
    %672 = vmatprep.subr.bf16.mxu0 0
    %673 = vmatpush1.bf16.msra.mxu0 0
    %674 = vmatprep.subr.bf16.mxu0 0
    %675 = vmatpush1.bf16.msra.mxu0 0
    %676 = vmatprep.subr.bf16.mxu0 0
    %677 = vmatpush1.bf16.msra.mxu0 0
    %678 = vmatprep.subr.bf16.mxu0 0
    %679 = vmatpush1.bf16.msra.mxu0 0
    %680 = vmatprep.mubr.bf16.mxu0 0
    %681 = vmatmul.mubr.bf16.gmra.mrb[0].mxu0 %v646
    %v682 = vpop.f32.mrb[0].mxu0
    %v683 = vadd.f32 0.0, %v682
    %v684 = vpop.f32.mrb[0].mxu0
    %v685 = vpop.f32.mrb[0].mxu0
    %v686 = vadd.f32 0.0, %v685
    %v687 = vpop.f32.mrb[0].mxu0
    %688 = vdwg.mxu0
    %v689 = vmul.f32 %v639, %v231
    %v690 = vmul.f32 %v642, %v231
    %v691 = vmul.f32 %v683, %v231
    %v692 = vmul.f32 %v686, %v231
    %v693 = vadd.f32 %v689, 0.0
    %v694 = vadd.f32 %v690, 0.0
    %v695 = vadd.f32 %v691, 0.0
    %v696 = vadd.f32 %v692, 0.0
    %v697 = vmul.f32 %v446, %v236
    %v698 = vmul.f32 %v447, %v236
    %v699 = vmul.f32 %v448, %v236
    %v700 = vmul.f32 %v449, %v236
    %v701 = vpack.c.bf16 %v698, %v697
    %v702 = vpack.c.bf16 %v700, %v699
    %v704 = vsel %vm262, %v701, 0
    %706 = vmatprep.subr.bf16.mxu0 0
    %707 = vmatpush1.bf16.xpose.msra.mxu0 %v464
    %708 = vmatprep.subr.bf16.mxu0 0
    %709 = vmatpush1.bf16.xpose.msra.mxu0 0
    %710 = vmatprep.subr.bf16.mxu0 0
    %711 = vmatpush1.bf16.xpose.msra.mxu0 0
    %712 = vmatprep.subr.bf16.mxu0 0
    %713 = vmatpush1.bf16.xpose.msra.mxu0 0
    %714 = vmatprep.subr.bf16.mxu0 0
    %715 = vmatpush1.bf16.xpose.msra.mxu0 0
    %716 = vmatprep.subr.bf16.mxu0 0
    %717 = vmatpush1.bf16.xpose.msra.mxu0 0
    %718 = vmatprep.subr.bf16.mxu0 0
    %719 = vmatpush1.bf16.xpose.msra.mxu0 0
    %720 = vmatprep.subr.bf16.mxu0 0
    %721 = vmatpush1.bf16.xpose.msra.mxu0 0
    %722 = vmatprep.subr.bf16.mxu0 0
    %723 = vmatpush1.bf16.xpose.msra.mxu0 0
    %724 = vmatprep.subr.bf16.mxu0 0
    %725 = vmatpush1.bf16.xpose.msra.mxu0 0
    %726 = vmatprep.subr.bf16.mxu0 0
    %727 = vmatpush1.bf16.xpose.msra.mxu0 0
    %728 = vmatprep.subr.bf16.mxu0 0
    %729 = vmatpush1.bf16.xpose.msra.mxu0 0
    %730 = vmatprep.subr.bf16.mxu0 0
    %731 = vmatpush1.bf16.xpose.msra.mxu0 0
    %732 = vmatprep.subr.bf16.mxu0 0
    %733 = vmatpush1.bf16.xpose.msra.mxu0 0
    %734 = vmatprep.subr.bf16.mxu0 0
    %735 = vmatpush1.bf16.xpose.msra.mxu0 0
    %736 = vmatprep.subr.bf16.mxu0 0
    %737 = vmatpush1.bf16.xpose.msra.mxu0 0
    %738 = vmatprep.mubr.bf16.mxu0 0
    %739 = vmatmul.mubr.bf16.gmra.mrb[0].mxu0 %v704
    %v740 = vpop.f32.mrb[0].mxu0
    %v741 = vadd.f32 0.0, %v740
    %v742 = vpop.f32.mrb[0].mxu0
    %v743 = vpop.f32.mrb[0].mxu0
    %v744 = vadd.f32 0.0, %v743
    %v745 = vpop.f32.mrb[0].mxu0
    %746 = vdwg.mxu0
    %v748 = vsel %vm262, %v702, 0
    %750 = vmatprep.subr.bf16.mxu0 0
    %751 = vmatpush1.bf16.xpose.msra.mxu0 %v511
    %752 = vmatprep.subr.bf16.mxu0 0
    %753 = vmatpush1.bf16.xpose.msra.mxu0 0
    %754 = vmatprep.subr.bf16.mxu0 0
    %755 = vmatpush1.bf16.xpose.msra.mxu0 0
    %756 = vmatprep.subr.bf16.mxu0 0
    %757 = vmatpush1.bf16.xpose.msra.mxu0 0
    %758 = vmatprep.subr.bf16.mxu0 0
    %759 = vmatpush1.bf16.xpose.msra.mxu0 0
    %760 = vmatprep.subr.bf16.mxu0 0
    %761 = vmatpush1.bf16.xpose.msra.mxu0 0
    %762 = vmatprep.subr.bf16.mxu0 0
    %763 = vmatpush1.bf16.xpose.msra.mxu0 0
    %764 = vmatprep.subr.bf16.mxu0 0
    %765 = vmatpush1.bf16.xpose.msra.mxu0 0
    %766 = vmatprep.subr.bf16.mxu0 0
    %767 = vmatpush1.bf16.xpose.msra.mxu0 0
    %768 = vmatprep.subr.bf16.mxu0 0
    %769 = vmatpush1.bf16.xpose.msra.mxu0 0
    %770 = vmatprep.subr.bf16.mxu0 0
    %771 = vmatpush1.bf16.xpose.msra.mxu0 0
    %772 = vmatprep.subr.bf16.mxu0 0
    %773 = vmatpush1.bf16.xpose.msra.mxu0 0
    %774 = vmatprep.subr.bf16.mxu0 0
    %775 = vmatpush1.bf16.xpose.msra.mxu0 0
    %776 = vmatprep.subr.bf16.mxu0 0
    %777 = vmatpush1.bf16.xpose.msra.mxu0 0
    %778 = vmatprep.subr.bf16.mxu0 0
    %779 = vmatpush1.bf16.xpose.msra.mxu0 0
    %780 = vmatprep.subr.bf16.mxu0 0
    %781 = vmatpush1.bf16.xpose.msra.mxu0 0
    %782 = vmatprep.mubr.bf16.mxu0 0
    %783 = vmatmul.mubr.bf16.gmra.mrb[0].mxu0 %v748
    %v784 = vpop.f32.mrb[0].mxu0
    %v785 = vadd.f32 0.0, %v784
    %v786 = vpop.f32.mrb[0].mxu0
    %v787 = vpop.f32.mrb[0].mxu0
    %v788 = vadd.f32 0.0, %v787
    %v789 = vpop.f32.mrb[0].mxu0
    %790 = vdwg.mxu0
    %v791 = vsel %vm554, %v741, -inf
    %792 = vmax.xlane.f32.xlu0 %v791
    %v793 = vpop.xlane.xlu0 %792
    %v794 = vsel %vm554, %v744, -inf
    %795 = vmax.xlane.f32.xlu0 %v794
    %v796 = vpop.xlane.xlu0 %795
    %v797 = vsel %vm554, %v785, -inf
    %798 = vmax.xlane.f32.xlu0 %v797
    %v799 = vpop.xlane.xlu0 %798
    %v800 = vsel %vm554, %v788, -inf
    %801 = vmax.xlane.f32.xlu0 %v800
    %v802 = vpop.xlane.xlu0 %801
    %v803 = vsub.f32 %v741, %v793
    %v804 = vsub.f32 %v744, %v796
    %v805 = vsub.f32 %v785, %v799
    %v806 = vsub.f32 %v788, %v802
    %v807 = vmul.f32 %v803, 1.442695
    %v808 = vpow.pop %v807
    %v809 = vmul.f32 %v804, 1.442695
    %v810 = vpow.pop %v809
    %v811 = vmul.f32 %v805, 1.442695
    %v812 = vpow.pop %v811
    %v813 = vmul.f32 %v806, 1.442695
    %v814 = vpow.pop %v813
    %v815 = vsel %vm554, %v808, 0.0
    %816 = vadd.xlane.f32.xlu0 %v815
    %v817 = vpop.xlane.xlu0 %816
    %v818 = vsel %vm554, %v810, 0.0
    %819 = vadd.xlane.f32.xlu0 %v818
    %v820 = vpop.xlane.xlu0 %819
    %v821 = vsel %vm554, %v812, 0.0
    %822 = vadd.xlane.f32.xlu0 %v821
    %v823 = vpop.xlane.xlu0 %822
    %v824 = vsel %vm554, %v814, 0.0
    %825 = vadd.xlane.f32.xlu0 %v824
    %v826 = vpop.xlane.xlu0 %825
    %v827 = vrcp.pop %v817
    %v828 = vmul.f32 %v808, %v827
    %v829 = vrcp.pop %v820
    %v830 = vmul.f32 %v810, %v829
    %v831 = vrcp.pop %v823
    %v832 = vmul.f32 %v812, %v831
    %v833 = vrcp.pop %v826
    %v834 = vmul.f32 %v814, %v833
    %v835 = vpack.c.bf16 %v830, %v828
    %v836 = vpack.c.bf16 %v834, %v832
    %v838 = vsel %vm554, %v835, 0
    %840 = vmatprep.subr.bf16.mxu0 0
    %841 = vmatpush1.bf16.msra.mxu0 %v452
    %842 = vmatprep.subr.bf16.mxu0 0
    %843 = vmatpush1.bf16.msra.mxu0 0
    %844 = vmatprep.subr.bf16.mxu0 0
    %845 = vmatpush1.bf16.msra.mxu0 0
    %846 = vmatprep.subr.bf16.mxu0 0
    %847 = vmatpush1.bf16.msra.mxu0 0
    %848 = vmatprep.subr.bf16.mxu0 0
    %849 = vmatpush1.bf16.msra.mxu0 0
    %850 = vmatprep.subr.bf16.mxu0 0
    %851 = vmatpush1.bf16.msra.mxu0 0
    %852 = vmatprep.subr.bf16.mxu0 0
    %853 = vmatpush1.bf16.msra.mxu0 0
    %854 = vmatprep.subr.bf16.mxu0 0
    %855 = vmatpush1.bf16.msra.mxu0 0
    %856 = vmatprep.subr.bf16.mxu0 0
    %857 = vmatpush1.bf16.msra.mxu0 0
    %858 = vmatprep.subr.bf16.mxu0 0
    %859 = vmatpush1.bf16.msra.mxu0 0
    %860 = vmatprep.subr.bf16.mxu0 0
    %861 = vmatpush1.bf16.msra.mxu0 0
    %862 = vmatprep.subr.bf16.mxu0 0
    %863 = vmatpush1.bf16.msra.mxu0 0
    %864 = vmatprep.subr.bf16.mxu0 0
    %865 = vmatpush1.bf16.msra.mxu0 0
    %866 = vmatprep.subr.bf16.mxu0 0
    %867 = vmatpush1.bf16.msra.mxu0 0
    %868 = vmatprep.subr.bf16.mxu0 0
    %869 = vmatpush1.bf16.msra.mxu0 0
    %870 = vmatprep.subr.bf16.mxu0 0
    %871 = vmatpush1.bf16.msra.mxu0 0
    %872 = vmatprep.mubr.bf16.mxu0 0
    %873 = vmatmul.mubr.bf16.gmra.mrb[0].mxu0 %v838
    %v874 = vpop.f32.mrb[0].mxu0
    %v875 = vadd.f32 0.0, %v874
    %v876 = vpop.f32.mrb[0].mxu0
    %v877 = vpop.f32.mrb[0].mxu0
    %v878 = vadd.f32 0.0, %v877
    %v879 = vpop.f32.mrb[0].mxu0
    %880 = vdwg.mxu0
    %v882 = vsel %vm554, %v836, 0
    %884 = vmatprep.subr.bf16.mxu0 0
    %885 = vmatpush1.bf16.msra.mxu0 %v453
    %886 = vmatprep.subr.bf16.mxu0 0
    %887 = vmatpush1.bf16.msra.mxu0 0
    %888 = vmatprep.subr.bf16.mxu0 0
    %889 = vmatpush1.bf16.msra.mxu0 0
    %890 = vmatprep.subr.bf16.mxu0 0
    %891 = vmatpush1.bf16.msra.mxu0 0
    %892 = vmatprep.subr.bf16.mxu0 0
    %893 = vmatpush1.bf16.msra.mxu0 0
    %894 = vmatprep.subr.bf16.mxu0 0
    %895 = vmatpush1.bf16.msra.mxu0 0
    %896 = vmatprep.subr.bf16.mxu0 0
    %897 = vmatpush1.bf16.msra.mxu0 0
    %898 = vmatprep.subr.bf16.mxu0 0
    %899 = vmatpush1.bf16.msra.mxu0 0
    %900 = vmatprep.subr.bf16.mxu0 0
    %901 = vmatpush1.bf16.msra.mxu0 0
    %902 = vmatprep.subr.bf16.mxu0 0
    %903 = vmatpush1.bf16.msra.mxu0 0
    %904 = vmatprep.subr.bf16.mxu0 0
    %905 = vmatpush1.bf16.msra.mxu0 0
    %906 = vmatprep.subr.bf16.mxu0 0
    %907 = vmatpush1.bf16.msra.mxu0 0
    %908 = vmatprep.subr.bf16.mxu0 0
    %909 = vmatpush1.bf16.msra.mxu0 0
    %910 = vmatprep.subr.bf16.mxu0 0
    %911 = vmatpush1.bf16.msra.mxu0 0
    %912 = vmatprep.subr.bf16.mxu0 0
    %913 = vmatpush1.bf16.msra.mxu0 0
    %914 = vmatprep.subr.bf16.mxu0 0
    %915 = vmatpush1.bf16.msra.mxu0 0
    %916 = vmatprep.mubr.bf16.mxu0 0
    %917 = vmatmul.mubr.bf16.gmra.mrb[0].mxu0 %v882
    %v918 = vpop.f32.mrb[0].mxu0
    %v919 = vadd.f32 0.0, %v918
    %v920 = vpop.f32.mrb[0].mxu0
    %v921 = vpop.f32.mrb[0].mxu0
    %v922 = vadd.f32 0.0, %v921
    %v923 = vpop.f32.mrb[0].mxu0
    %924 = vdwg.mxu0
    %v925 = vmul.f32 %v875, %v236
    %v926 = vmul.f32 %v878, %v236
    %v927 = vmul.f32 %v919, %v236
    %v928 = vmul.f32 %v922, %v236
    %v929 = vadd.f32 %v693, %v925
    %v930 = vadd.f32 %v694, %v926
    %v931 = vadd.f32 %v695, %v927
    %v932 = vadd.f32 %v696, %v928
    %v933 = vmul.f32 %v446, %v241
    %v934 = vmul.f32 %v447, %v241
    %v935 = vmul.f32 %v448, %v241
    %v936 = vmul.f32 %v449, %v241
    %v937 = vpack.c.bf16 %v934, %v933
    %v938 = vpack.c.bf16 %v936, %v935
    %v940 = vsel %vm262, %v937, 0
    %942 = vmatprep.subr.bf16.mxu0 0
    %943 = vmatpush1.bf16.xpose.msra.mxu0 %v464
    %944 = vmatprep.subr.bf16.mxu0 0
    %945 = vmatpush1.bf16.xpose.msra.mxu0 0
    %946 = vmatprep.subr.bf16.mxu0 0
    %947 = vmatpush1.bf16.xpose.msra.mxu0 0
    %948 = vmatprep.subr.bf16.mxu0 0
    %949 = vmatpush1.bf16.xpose.msra.mxu0 0
    %950 = vmatprep.subr.bf16.mxu0 0
    %951 = vmatpush1.bf16.xpose.msra.mxu0 0
    %952 = vmatprep.subr.bf16.mxu0 0
    %953 = vmatpush1.bf16.xpose.msra.mxu0 0
    %954 = vmatprep.subr.bf16.mxu0 0
    %955 = vmatpush1.bf16.xpose.msra.mxu0 0
    %956 = vmatprep.subr.bf16.mxu0 0
    %957 = vmatpush1.bf16.xpose.msra.mxu0 0
    %958 = vmatprep.subr.bf16.mxu0 0
    %959 = vmatpush1.bf16.xpose.msra.mxu0 0
    %960 = vmatprep.subr.bf16.mxu0 0
    %961 = vmatpush1.bf16.xpose.msra.mxu0 0
    %962 = vmatprep.subr.bf16.mxu0 0
    %963 = vmatpush1.bf16.xpose.msra.mxu0 0
    %964 = vmatprep.subr.bf16.mxu0 0
    %965 = vmatpush1.bf16.xpose.msra.mxu0 0
    %966 = vmatprep.subr.bf16.mxu0 0
    %967 = vmatpush1.bf16.xpose.msra.mxu0 0
    %968 = vmatprep.subr.bf16.mxu0 0
    %969 = vmatpush1.bf16.xpose.msra.mxu0 0
    %970 = vmatprep.subr.bf16.mxu0 0
    %971 = vmatpush1.bf16.xpose.msra.mxu0 0
    %972 = vmatprep.subr.bf16.mxu0 0
    %973 = vmatpush1.bf16.xpose.msra.mxu0 0
    %974 = vmatprep.mubr.bf16.mxu0 0
    %975 = vmatmul.mubr.bf16.gmra.mrb[0].mxu0 %v940
    %v976 = vpop.f32.mrb[0].mxu0
    %v977 = vadd.f32 0.0, %v976
    %v978 = vpop.f32.mrb[0].mxu0
    %v979 = vpop.f32.mrb[0].mxu0
    %v980 = vadd.f32 0.0, %v979
    %v981 = vpop.f32.mrb[0].mxu0
    %982 = vdwg.mxu0
    %v984 = vsel %vm262, %v938, 0
    %986 = vmatprep.subr.bf16.mxu0 0
    %987 = vmatpush1.bf16.xpose.msra.mxu0 %v511
    %988 = vmatprep.subr.bf16.mxu0 0
    %989 = vmatpush1.bf16.xpose.msra.mxu0 0
    %990 = vmatprep.subr.bf16.mxu0 0
    %991 = vmatpush1.bf16.xpose.msra.mxu0 0
    %992 = vmatprep.subr.bf16.mxu0 0
    %993 = vmatpush1.bf16.xpose.msra.mxu0 0
    %994 = vmatprep.subr.bf16.mxu0 0
    %995 = vmatpush1.bf16.xpose.msra.mxu0 0
    %996 = vmatprep.subr.bf16.mxu0 0
    %997 = vmatpush1.bf16.xpose.msra.mxu0 0
    %998 = vmatprep.subr.bf16.mxu0 0
    %999 = vmatpush1.bf16.xpose.msra.mxu0 0
    %1000 = vmatprep.subr.bf16.mxu0 0
    %1001 = vmatpush1.bf16.xpose.msra.mxu0 0
    %1002 = vmatprep.subr.bf16.mxu0 0
    %1003 = vmatpush1.bf16.xpose.msra.mxu0 0
    %1004 = vmatprep.subr.bf16.mxu0 0
    %1005 = vmatpush1.bf16.xpose.msra.mxu0 0
    %1006 = vmatprep.subr.bf16.mxu0 0
    %1007 = vmatpush1.bf16.xpose.msra.mxu0 0
    %1008 = vmatprep.subr.bf16.mxu0 0
    %1009 = vmatpush1.bf16.xpose.msra.mxu0 0
    %1010 = vmatprep.subr.bf16.mxu0 0
    %1011 = vmatpush1.bf16.xpose.msra.mxu0 0
    %1012 = vmatprep.subr.bf16.mxu0 0
    %1013 = vmatpush1.bf16.xpose.msra.mxu0 0
    %1014 = vmatprep.subr.bf16.mxu0 0
    %1015 = vmatpush1.bf16.xpose.msra.mxu0 0
    %1016 = vmatprep.subr.bf16.mxu0 0
    %1017 = vmatpush1.bf16.xpose.msra.mxu0 0
    %1018 = vmatprep.mubr.bf16.mxu0 0
    %1019 = vmatmul.mubr.bf16.gmra.mrb[0].mxu0 %v984
    %v1020 = vpop.f32.mrb[0].mxu0
    %v1021 = vadd.f32 0.0, %v1020
    %v1022 = vpop.f32.mrb[0].mxu0
    %v1023 = vpop.f32.mrb[0].mxu0
    %v1024 = vadd.f32 0.0, %v1023
    %v1025 = vpop.f32.mrb[0].mxu0
    %1026 = vdwg.mxu0
    %v1027 = vsel %vm554, %v977, -inf
    %1028 = vmax.xlane.f32.xlu0 %v1027
    %v1029 = vpop.xlane.xlu0 %1028
    %v1030 = vsel %vm554, %v980, -inf
    %1031 = vmax.xlane.f32.xlu0 %v1030
    %v1032 = vpop.xlane.xlu0 %1031
    %v1033 = vsel %vm554, %v1021, -inf
    %1034 = vmax.xlane.f32.xlu0 %v1033
    %v1035 = vpop.xlane.xlu0 %1034
    %v1036 = vsel %vm554, %v1024, -inf
    %1037 = vmax.xlane.f32.xlu0 %v1036
    %v1038 = vpop.xlane.xlu0 %1037
    %v1039 = vsub.f32 %v977, %v1029
    %v1040 = vsub.f32 %v980, %v1032
    %v1041 = vsub.f32 %v1021, %v1035
    %v1042 = vsub.f32 %v1024, %v1038
    %v1043 = vmul.f32 %v1039, 1.442695
    %v1044 = vpow.pop %v1043
    %v1045 = vmul.f32 %v1040, 1.442695
    %v1046 = vpow.pop %v1045
    %v1047 = vmul.f32 %v1041, 1.442695
    %v1048 = vpow.pop %v1047
    %v1049 = vmul.f32 %v1042, 1.442695
    %v1050 = vpow.pop %v1049
    %v1051 = vsel %vm554, %v1044, 0.0
    %1052 = vadd.xlane.f32.xlu0 %v1051
    %v1053 = vpop.xlane.xlu0 %1052
    %v1054 = vsel %vm554, %v1046, 0.0
    %1055 = vadd.xlane.f32.xlu0 %v1054
    %v1056 = vpop.xlane.xlu0 %1055
    %v1057 = vsel %vm554, %v1048, 0.0
    %1058 = vadd.xlane.f32.xlu0 %v1057
    %v1059 = vpop.xlane.xlu0 %1058
    %v1060 = vsel %vm554, %v1050, 0.0
    %1061 = vadd.xlane.f32.xlu0 %v1060
    %v1062 = vpop.xlane.xlu0 %1061
    %v1063 = vrcp.pop %v1053
    %v1064 = vmul.f32 %v1044, %v1063
    %v1065 = vrcp.pop %v1056
    %v1066 = vmul.f32 %v1046, %v1065
    %v1067 = vrcp.pop %v1059
    %v1068 = vmul.f32 %v1048, %v1067
    %v1069 = vrcp.pop %v1062
    %v1070 = vmul.f32 %v1050, %v1069
    %v1071 = vpack.c.bf16 %v1066, %v1064
    %v1072 = vpack.c.bf16 %v1070, %v1068
    %v1074 = vsel %vm554, %v1071, 0
    %1076 = vmatprep.subr.bf16.mxu0 0
    %1077 = vmatpush1.bf16.msra.mxu0 %v452
    %1078 = vmatprep.subr.bf16.mxu0 0
    %1079 = vmatpush1.bf16.msra.mxu0 0
    %1080 = vmatprep.subr.bf16.mxu0 0
    %1081 = vmatpush1.bf16.msra.mxu0 0
    %1082 = vmatprep.subr.bf16.mxu0 0
    %1083 = vmatpush1.bf16.msra.mxu0 0
    %1084 = vmatprep.subr.bf16.mxu0 0
    %1085 = vmatpush1.bf16.msra.mxu0 0
    %1086 = vmatprep.subr.bf16.mxu0 0
    %1087 = vmatpush1.bf16.msra.mxu0 0
    %1088 = vmatprep.subr.bf16.mxu0 0
    %1089 = vmatpush1.bf16.msra.mxu0 0
    %1090 = vmatprep.subr.bf16.mxu0 0
    %1091 = vmatpush1.bf16.msra.mxu0 0
    %1092 = vmatprep.subr.bf16.mxu0 0
    %1093 = vmatpush1.bf16.msra.mxu0 0
    %1094 = vmatprep.subr.bf16.mxu0 0
    %1095 = vmatpush1.bf16.msra.mxu0 0
    %1096 = vmatprep.subr.bf16.mxu0 0
    %1097 = vmatpush1.bf16.msra.mxu0 0
    %1098 = vmatprep.subr.bf16.mxu0 0
    %1099 = vmatpush1.bf16.msra.mxu0 0
    %1100 = vmatprep.subr.bf16.mxu0 0
    %1101 = vmatpush1.bf16.msra.mxu0 0
    %1102 = vmatprep.subr.bf16.mxu0 0
    %1103 = vmatpush1.bf16.msra.mxu0 0
    %1104 = vmatprep.subr.bf16.mxu0 0
    %1105 = vmatpush1.bf16.msra.mxu0 0
    %1106 = vmatprep.subr.bf16.mxu0 0
    %1107 = vmatpush1.bf16.msra.mxu0 0
    %1108 = vmatprep.mubr.bf16.mxu0 0
    %1109 = vmatmul.mubr.bf16.gmra.mrb[0].mxu0 %v1074
    %v1110 = vpop.f32.mrb[0].mxu0
    %v1111 = vadd.f32 0.0, %v1110
    %v1112 = vpop.f32.mrb[0].mxu0
    %v1113 = vpop.f32.mrb[0].mxu0
    %v1114 = vadd.f32 0.0, %v1113
    %v1115 = vpop.f32.mrb[0].mxu0
    %1116 = vdwg.mxu0
    %v1118 = vsel %vm554, %v1072, 0
    %1120 = vmatprep.subr.bf16.mxu0 0
    %1121 = vmatpush1.bf16.msra.mxu0 %v453
    %1122 = vmatprep.subr.bf16.mxu0 0
    %1123 = vmatpush1.bf16.msra.mxu0 0
    %1124 = vmatprep.subr.bf16.mxu0 0
    %1125 = vmatpush1.bf16.msra.mxu0 0
    %1126 = vmatprep.subr.bf16.mxu0 0
    %1127 = vmatpush1.bf16.msra.mxu0 0
    %1128 = vmatprep.subr.bf16.mxu0 0
    %1129 = vmatpush1.bf16.msra.mxu0 0
    %1130 = vmatprep.subr.bf16.mxu0 0
    %1131 = vmatpush1.bf16.msra.mxu0 0
    %1132 = vmatprep.subr.bf16.mxu0 0
    %1133 = vmatpush1.bf16.msra.mxu0 0
    %1134 = vmatprep.subr.bf16.mxu0 0
    %1135 = vmatpush1.bf16.msra.mxu0 0
    %1136 = vmatprep.subr.bf16.mxu0 0
    %1137 = vmatpush1.bf16.msra.mxu0 0
    %1138 = vmatprep.subr.bf16.mxu0 0
    %1139 = vmatpush1.bf16.msra.mxu0 0
    %1140 = vmatprep.subr.bf16.mxu0 0
    %1141 = vmatpush1.bf16.msra.mxu0 0
    %1142 = vmatprep.subr.bf16.mxu0 0
    %1143 = vmatpush1.bf16.msra.mxu0 0
    %1144 = vmatprep.subr.bf16.mxu0 0
    %1145 = vmatpush1.bf16.msra.mxu0 0
    %1146 = vmatprep.subr.bf16.mxu0 0
    %1147 = vmatpush1.bf16.msra.mxu0 0
    %1148 = vmatprep.subr.bf16.mxu0 0
    %1149 = vmatpush1.bf16.msra.mxu0 0
    %1150 = vmatprep.subr.bf16.mxu0 0
    %1151 = vmatpush1.bf16.msra.mxu0 0
    %1152 = vmatprep.mubr.bf16.mxu0 0
    %1153 = vmatmul.mubr.bf16.gmra.mrb[0].mxu0 %v1118
    %v1154 = vpop.f32.mrb[0].mxu0
    %v1155 = vadd.f32 0.0, %v1154
    %v1156 = vpop.f32.mrb[0].mxu0
    %v1157 = vpop.f32.mrb[0].mxu0
    %v1158 = vadd.f32 0.0, %v1157
    %v1159 = vpop.f32.mrb[0].mxu0
    %1160 = vdwg.mxu0
    %v1161 = vmul.f32 %v1111, %v241
    %v1162 = vmul.f32 %v1114, %v241
    %v1163 = vmul.f32 %v1155, %v241
    %v1164 = vmul.f32 %v1158, %v241
    %v1165 = vadd.f32 %v929, %v1161
    %v1166 = vadd.f32 %v930, %v1162
    %v1167 = vadd.f32 %v931, %v1163
    %v1168 = vadd.f32 %v932, %v1164
    %v1169 = vmul.f32 %v446, %v246
    %v1170 = vmul.f32 %v447, %v246
    %v1171 = vmul.f32 %v448, %v246
    %v1172 = vmul.f32 %v449, %v246
    %v1173 = vpack.c.bf16 %v1170, %v1169
    %v1174 = vpack.c.bf16 %v1172, %v1171
    %v1176 = vsel %vm262, %v1173, 0
    %1178 = vmatprep.subr.bf16.mxu0 0
    %1179 = vmatpush1.bf16.xpose.msra.mxu0 %v464
    %1180 = vmatprep.subr.bf16.mxu0 0
    %1181 = vmatpush1.bf16.xpose.msra.mxu0 0
    %1182 = vmatprep.subr.bf16.mxu0 0
    %1183 = vmatpush1.bf16.xpose.msra.mxu0 0
    %1184 = vmatprep.subr.bf16.mxu0 0
    %1185 = vmatpush1.bf16.xpose.msra.mxu0 0
    %1186 = vmatprep.subr.bf16.mxu0 0
    %1187 = vmatpush1.bf16.xpose.msra.mxu0 0
    %1188 = vmatprep.subr.bf16.mxu0 0
    %1189 = vmatpush1.bf16.xpose.msra.mxu0 0
    %1190 = vmatprep.subr.bf16.mxu0 0
    %1191 = vmatpush1.bf16.xpose.msra.mxu0 0
    %1192 = vmatprep.subr.bf16.mxu0 0
    %1193 = vmatpush1.bf16.xpose.msra.mxu0 0
    %1194 = vmatprep.subr.bf16.mxu0 0
    %1195 = vmatpush1.bf16.xpose.msra.mxu0 0
    %1196 = vmatprep.subr.bf16.mxu0 0
    %1197 = vmatpush1.bf16.xpose.msra.mxu0 0
    %1198 = vmatprep.subr.bf16.mxu0 0
    %1199 = vmatpush1.bf16.xpose.msra.mxu0 0
    %1200 = vmatprep.subr.bf16.mxu0 0
    %1201 = vmatpush1.bf16.xpose.msra.mxu0 0
    %1202 = vmatprep.subr.bf16.mxu0 0
    %1203 = vmatpush1.bf16.xpose.msra.mxu0 0
    %1204 = vmatprep.subr.bf16.mxu0 0
    %1205 = vmatpush1.bf16.xpose.msra.mxu0 0
    %1206 = vmatprep.subr.bf16.mxu0 0
    %1207 = vmatpush1.bf16.xpose.msra.mxu0 0
    %1208 = vmatprep.subr.bf16.mxu0 0
    %1209 = vmatpush1.bf16.xpose.msra.mxu0 0
    %1210 = vmatprep.mubr.bf16.mxu0 0
    %1211 = vmatmul.mubr.bf16.gmra.mrb[0].mxu0 %v1176
    %v1212 = vpop.f32.mrb[0].mxu0
    %v1213 = vadd.f32 0.0, %v1212
    %v1214 = vpop.f32.mrb[0].mxu0
    %v1215 = vpop.f32.mrb[0].mxu0
    %v1216 = vadd.f32 0.0, %v1215
    %v1217 = vpop.f32.mrb[0].mxu0
    %1218 = vdwg.mxu0
    %v1220 = vsel %vm262, %v1174, 0
    %1222 = vmatprep.subr.bf16.mxu0 0
    %1223 = vmatpush1.bf16.xpose.msra.mxu0 %v511
    %1224 = vmatprep.subr.bf16.mxu0 0
    %1225 = vmatpush1.bf16.xpose.msra.mxu0 0
    %1226 = vmatprep.subr.bf16.mxu0 0
    %1227 = vmatpush1.bf16.xpose.msra.mxu0 0
    %1228 = vmatprep.subr.bf16.mxu0 0
    %1229 = vmatpush1.bf16.xpose.msra.mxu0 0
    %1230 = vmatprep.subr.bf16.mxu0 0
    %1231 = vmatpush1.bf16.xpose.msra.mxu0 0
    %1232 = vmatprep.subr.bf16.mxu0 0
    %1233 = vmatpush1.bf16.xpose.msra.mxu0 0
    %1234 = vmatprep.subr.bf16.mxu0 0
    %1235 = vmatpush1.bf16.xpose.msra.mxu0 0
    %1236 = vmatprep.subr.bf16.mxu0 0
    %1237 = vmatpush1.bf16.xpose.msra.mxu0 0
    %1238 = vmatprep.subr.bf16.mxu0 0
    %1239 = vmatpush1.bf16.xpose.msra.mxu0 0
    %1240 = vmatprep.subr.bf16.mxu0 0
    %1241 = vmatpush1.bf16.xpose.msra.mxu0 0
    %1242 = vmatprep.subr.bf16.mxu0 0
    %1243 = vmatpush1.bf16.xpose.msra.mxu0 0
    %1244 = vmatprep.subr.bf16.mxu0 0
    %1245 = vmatpush1.bf16.xpose.msra.mxu0 0
    %1246 = vmatprep.subr.bf16.mxu0 0
    %1247 = vmatpush1.bf16.xpose.msra.mxu0 0
    %1248 = vmatprep.subr.bf16.mxu0 0
    %1249 = vmatpush1.bf16.xpose.msra.mxu0 0
    %1250 = vmatprep.subr.bf16.mxu0 0
    %1251 = vmatpush1.bf16.xpose.msra.mxu0 0
    %1252 = vmatprep.subr.bf16.mxu0 0
    %1253 = vmatpush1.bf16.xpose.msra.mxu0 0
    %1254 = vmatprep.mubr.bf16.mxu0 0
    %1255 = vmatmul.mubr.bf16.gmra.mrb[0].mxu0 %v1220
    %v1256 = vpop.f32.mrb[0].mxu0
    %v1257 = vadd.f32 0.0, %v1256
    %v1258 = vpop.f32.mrb[0].mxu0
    %v1259 = vpop.f32.mrb[0].mxu0
    %v1260 = vadd.f32 0.0, %v1259
    %v1261 = vpop.f32.mrb[0].mxu0
    %1262 = vdwg.mxu0
    %v1263 = vsel %vm554, %v1213, -inf
    %1264 = vmax.xlane.f32.xlu0 %v1263
    %v1265 = vpop.xlane.xlu0 %1264
    %v1266 = vsel %vm554, %v1216, -inf
    %1267 = vmax.xlane.f32.xlu0 %v1266
    %v1268 = vpop.xlane.xlu0 %1267
    %v1269 = vsel %vm554, %v1257, -inf
    %1270 = vmax.xlane.f32.xlu0 %v1269
    %v1271 = vpop.xlane.xlu0 %1270
    %v1272 = vsel %vm554, %v1260, -inf
    %1273 = vmax.xlane.f32.xlu0 %v1272
    %v1274 = vpop.xlane.xlu0 %1273
    %v1275 = vsub.f32 %v1213, %v1265
    %v1276 = vsub.f32 %v1216, %v1268
    %v1277 = vsub.f32 %v1257, %v1271
    %v1278 = vsub.f32 %v1260, %v1274
    %v1279 = vmul.f32 %v1275, 1.442695
    %v1280 = vpow.pop %v1279
    %v1281 = vmul.f32 %v1276, 1.442695
    %v1282 = vpow.pop %v1281
    %v1283 = vmul.f32 %v1277, 1.442695
    %v1284 = vpow.pop %v1283
    %v1285 = vmul.f32 %v1278, 1.442695
    %v1286 = vpow.pop %v1285
    %v1287 = vsel %vm554, %v1280, 0.0
    %1288 = vadd.xlane.f32.xlu0 %v1287
    %v1289 = vpop.xlane.xlu0 %1288
    %v1290 = vsel %vm554, %v1282, 0.0
    %1291 = vadd.xlane.f32.xlu0 %v1290
    %v1292 = vpop.xlane.xlu0 %1291
    %v1293 = vsel %vm554, %v1284, 0.0
    %1294 = vadd.xlane.f32.xlu0 %v1293
    %v1295 = vpop.xlane.xlu0 %1294
    %v1296 = vsel %vm554, %v1286, 0.0
    %1297 = vadd.xlane.f32.xlu0 %v1296
    %v1298 = vpop.xlane.xlu0 %1297
    %v1299 = vrcp.pop %v1289
    %v1300 = vmul.f32 %v1280, %v1299
    %v1301 = vrcp.pop %v1292
    %v1302 = vmul.f32 %v1282, %v1301
    %v1303 = vrcp.pop %v1295
    %v1304 = vmul.f32 %v1284, %v1303
    %v1305 = vrcp.pop %v1298
    %v1306 = vmul.f32 %v1286, %v1305
    %v1307 = vpack.c.bf16 %v1302, %v1300
    %v1308 = vpack.c.bf16 %v1306, %v1304
    %v1310 = vsel %vm554, %v1307, 0
    %1312 = vmatprep.subr.bf16.mxu0 0
    %1313 = vmatpush1.bf16.msra.mxu0 %v452
    %1314 = vmatprep.subr.bf16.mxu0 0
    %1315 = vmatpush1.bf16.msra.mxu0 0
    %1316 = vmatprep.subr.bf16.mxu0 0
    %1317 = vmatpush1.bf16.msra.mxu0 0
    %1318 = vmatprep.subr.bf16.mxu0 0
    %1319 = vmatpush1.bf16.msra.mxu0 0
    %1320 = vmatprep.subr.bf16.mxu0 0
    %1321 = vmatpush1.bf16.msra.mxu0 0
    %1322 = vmatprep.subr.bf16.mxu0 0
    %1323 = vmatpush1.bf16.msra.mxu0 0
    %1324 = vmatprep.subr.bf16.mxu0 0
    %1325 = vmatpush1.bf16.msra.mxu0 0
    %1326 = vmatprep.subr.bf16.mxu0 0
    %1327 = vmatpush1.bf16.msra.mxu0 0
    %1328 = vmatprep.subr.bf16.mxu0 0
    %1329 = vmatpush1.bf16.msra.mxu0 0
    %1330 = vmatprep.subr.bf16.mxu0 0
    %1331 = vmatpush1.bf16.msra.mxu0 0
    %1332 = vmatprep.subr.bf16.mxu0 0
    %1333 = vmatpush1.bf16.msra.mxu0 0
    %1334 = vmatprep.subr.bf16.mxu0 0
    %1335 = vmatpush1.bf16.msra.mxu0 0
    %1336 = vmatprep.subr.bf16.mxu0 0
    %1337 = vmatpush1.bf16.msra.mxu0 0
    %1338 = vmatprep.subr.bf16.mxu0 0
    %1339 = vmatpush1.bf16.msra.mxu0 0
    %1340 = vmatprep.subr.bf16.mxu0 0
    %1341 = vmatpush1.bf16.msra.mxu0 0
    %1342 = vmatprep.subr.bf16.mxu0 0
    %1343 = vmatpush1.bf16.msra.mxu0 0
    %1344 = vmatprep.mubr.bf16.mxu0 0
    %1345 = vmatmul.mubr.bf16.gmra.mrb[0].mxu0 %v1310
    %v1346 = vpop.f32.mrb[0].mxu0
    %v1347 = vadd.f32 0.0, %v1346
    %v1348 = vpop.f32.mrb[0].mxu0
    %v1349 = vpop.f32.mrb[0].mxu0
    %v1350 = vadd.f32 0.0, %v1349
    %v1351 = vpop.f32.mrb[0].mxu0
    %1352 = vdwg.mxu0
    %v1354 = vsel %vm554, %v1308, 0
    %1356 = vmatprep.subr.bf16.mxu0 0
    %1357 = vmatpush1.bf16.msra.mxu0 %v453
    %1358 = vmatprep.subr.bf16.mxu0 0
    %1359 = vmatpush1.bf16.msra.mxu0 0
    %1360 = vmatprep.subr.bf16.mxu0 0
    %1361 = vmatpush1.bf16.msra.mxu0 0
    %1362 = vmatprep.subr.bf16.mxu0 0
    %1363 = vmatpush1.bf16.msra.mxu0 0
    %1364 = vmatprep.subr.bf16.mxu0 0
    %1365 = vmatpush1.bf16.msra.mxu0 0
    %1366 = vmatprep.subr.bf16.mxu0 0
    %1367 = vmatpush1.bf16.msra.mxu0 0
    %1368 = vmatprep.subr.bf16.mxu0 0
    %1369 = vmatpush1.bf16.msra.mxu0 0
    %1370 = vmatprep.subr.bf16.mxu0 0
    %1371 = vmatpush1.bf16.msra.mxu0 0
    %1372 = vmatprep.subr.bf16.mxu0 0
    %1373 = vmatpush1.bf16.msra.mxu0 0
    %1374 = vmatprep.subr.bf16.mxu0 0
    %1375 = vmatpush1.bf16.msra.mxu0 0
    %1376 = vmatprep.subr.bf16.mxu0 0
    %1377 = vmatpush1.bf16.msra.mxu0 0
    %1378 = vmatprep.subr.bf16.mxu0 0
    %1379 = vmatpush1.bf16.msra.mxu0 0
    %1380 = vmatprep.subr.bf16.mxu0 0
    %1381 = vmatpush1.bf16.msra.mxu0 0
    %1382 = vmatprep.subr.bf16.mxu0 0
    %1383 = vmatpush1.bf16.msra.mxu0 0
    %1384 = vmatprep.subr.bf16.mxu0 0
    %1385 = vmatpush1.bf16.msra.mxu0 0
    %1386 = vmatprep.subr.bf16.mxu0 0
    %1387 = vmatpush1.bf16.msra.mxu0 0
    %1388 = vmatprep.mubr.bf16.mxu0 0
    %1389 = vmatmul.mubr.bf16.gmra.mrb[0].mxu0 %v1354
    %v1390 = vpop.f32.mrb[0].mxu0
    %v1391 = vadd.f32 0.0, %v1390
    %v1392 = vpop.f32.mrb[0].mxu0
    %v1393 = vpop.f32.mrb[0].mxu0
    %v1394 = vadd.f32 0.0, %v1393
    %v1395 = vpop.f32.mrb[0].mxu0
    %1396 = vdwg.mxu0
    %v1397 = vmul.f32 %v1347, %v246
    %v1398 = vmul.f32 %v1350, %v246
    %v1399 = vmul.f32 %v1391, %v246
    %v1400 = vmul.f32 %v1394, %v246
    %v1401 = vadd.f32 %v1165, %v1397
    %v1402 = vadd.f32 %v1166, %v1398
    %v1403 = vadd.f32 %v1167, %v1399
    %v1404 = vadd.f32 %v1168, %v1400
    %v1405 = vpack.c.bf16 %v1402, %v1401
    %v1406 = vpack.c.bf16 %v1404, %v1403
    %v1407 = vld [vmem:[%s4] sm:$0xff]
    %v1408 = vld [vmem:[%s4 + $0x8] sm:$0xff]
    %v1409 = vld [vmem:[%s4 + $0x10] sm:$0xff]
    %v1410 = vld [vmem:[%s4 + $0x18] sm:$0xff]
    %v1411 = vpack.c.bf16 %v1408, %v1407
    %v1412 = vpack.c.bf16 %v1410, %v1409
    %v1413 = vld [vmem:[#allocation3] sm:$0x1]
    %v1415 = vlaneseq
    %v1416 = vshrl.u32 %v1415, 7
    %v1417 = vsub.s32 0, %v1416
    %v1418 = vrot.slane %v1413, %v1417
    %v1421 = vsel %vm262, %v1405, 0
    %v1424 = vsel %vm262, %v1406, 0
    %1426 = vmatprep.subr.bf16.mxu0 0
    %1427 = vmatpush1.bf16.msra.mxu0 %v1411
    %1428 = vmatprep.subr.bf16.mxu0 0
    %1429 = vmatpush1.bf16.msra.mxu0 %v1412
    %1430 = vmatprep.subr.bf16.mxu0 0
    %1431 = vmatpush1.bf16.msra.mxu0 0
    %1432 = vmatprep.subr.bf16.mxu0 0
    %1433 = vmatpush1.bf16.msra.mxu0 0
    %1434 = vmatprep.subr.bf16.mxu0 0
    %1435 = vmatpush1.bf16.msra.mxu0 0
    %1436 = vmatprep.subr.bf16.mxu0 0
    %1437 = vmatpush1.bf16.msra.mxu0 0
    %1438 = vmatprep.subr.bf16.mxu0 0
    %1439 = vmatpush1.bf16.msra.mxu0 0
    %1440 = vmatprep.subr.bf16.mxu0 0
    %1441 = vmatpush1.bf16.msra.mxu0 0
    %1442 = vmatprep.subr.bf16.mxu0 0
    %1443 = vmatpush1.bf16.msra.mxu0 0
    %1444 = vmatprep.subr.bf16.mxu0 0
    %1445 = vmatpush1.bf16.msra.mxu0 0
    %1446 = vmatprep.subr.bf16.mxu0 0
    %1447 = vmatpush1.bf16.msra.mxu0 0
    %1448 = vmatprep.subr.bf16.mxu0 0
    %1449 = vmatpush1.bf16.msra.mxu0 0
    %1450 = vmatprep.subr.bf16.mxu0 0
    %1451 = vmatpush1.bf16.msra.mxu0 0
    %1452 = vmatprep.subr.bf16.mxu0 0
    %1453 = vmatpush1.bf16.msra.mxu0 0
    %1454 = vmatprep.subr.bf16.mxu0 0
    %1455 = vmatpush1.bf16.msra.mxu0 0
    %1456 = vmatprep.subr.bf16.mxu0 0
    %1457 = vmatpush1.bf16.msra.mxu0 0
    %1458 = vmatprep.mubr.bf16.mxu0 0
    %1459 = vmatmul.mubr.bf16.gmra.mrb[0].mxu0 %v1421
    %v1460 = vpop.f32.mrb[0].mxu0
    %v1461 = vadd.f32 %v1418, %v1460
    %v1462 = vpop.f32.mrb[0].mxu0
    %v1463 = vpop.f32.mrb[0].mxu0
    %v1464 = vadd.f32 %v1418, %v1463
    %v1465 = vpop.f32.mrb[0].mxu0
    %1466 = vmatprep.mubr.bf16.mxu0 0
    %1467 = vmatmul.mubr.bf16.gmra.mrb[0].mxu0 %v1424
    %v1468 = vpop.f32.mrb[0].mxu0
    %v1469 = vadd.f32 %v1418, %v1468
    %v1470 = vpop.f32.mrb[0].mxu0
    %v1471 = vpop.f32.mrb[0].mxu0
    %v1472 = vadd.f32 %v1418, %v1471
    %v1473 = vpop.f32.mrb[0].mxu0
    %1474 = vdwg.mxu0
    %v1475 = vadd.f32 %v221, %v1461
    %v1476 = vadd.f32 %v222, %v1464
    %v1477 = vadd.f32 %v223, %v1469
    %v1478 = vadd.f32 %v224, %v1472
    %v1479 = vld [vmem:[#allocation5] sm:$0x1]
    %v1480 = vld [vmem:[#allocation7] sm:$0x1]
    %v1481 = vsel %vm262, %v1475, 0.0
    %1482 = vadd.xlane.f32.xlu0 %v1481
    %v1483 = vpop.xlane.xlu0 %1482
    %v1484 = vsel %vm262, %v1476, 0.0
    %1485 = vadd.xlane.f32.xlu0 %v1484
    %v1486 = vpop.xlane.xlu0 %1485
    %v1487 = vsel %vm262, %v1477, 0.0
    %1488 = vadd.xlane.f32.xlu0 %v1487
    %v1489 = vpop.xlane.xlu0 %1488
    %v1490 = vsel %vm262, %v1478, 0.0
    %1491 = vadd.xlane.f32.xlu0 %v1490
    %v1492 = vpop.xlane.xlu0 %1491
    %v1493 = vrcp.pop 32.0
    %v1494 = vmul.f32 %v1483, %v1493
    %v1495 = vmul.f32 %v1486, %v1493
    %v1496 = vmul.f32 %v1489, %v1493
    %v1497 = vmul.f32 %v1492, %v1493
    %v1498 = vsub.f32 %v1475, %v1494
    %v1499 = vsub.f32 %v1476, %v1495
    %v1500 = vsub.f32 %v1477, %v1496
    %v1501 = vsub.f32 %v1478, %v1497
    %v1502 = vmul.f32 %v1498, %v1498
    %v1503 = vmul.f32 %v1499, %v1499
    %v1504 = vmul.f32 %v1500, %v1500
    %v1505 = vmul.f32 %v1501, %v1501
    %v1506 = vsel %vm262, %v1502, 0.0
    %1507 = vadd.xlane.f32.xlu0 %v1506
    %v1508 = vpop.xlane.xlu0 %1507
    %v1509 = vsel %vm262, %v1503, 0.0
    %1510 = vadd.xlane.f32.xlu0 %v1509
    %v1511 = vpop.xlane.xlu0 %1510
    %v1512 = vsel %vm262, %v1504, 0.0
    %1513 = vadd.xlane.f32.xlu0 %v1512
    %v1514 = vpop.xlane.xlu0 %1513
    %v1515 = vsel %vm262, %v1505, 0.0
    %1516 = vadd.xlane.f32.xlu0 %v1515
    %v1517 = vpop.xlane.xlu0 %1516
    %v1518 = vmul.f32 %v1508, %v1493
    %v1519 = vmul.f32 %v1511, %v1493
    %v1520 = vmul.f32 %v1514, %v1493
    %v1521 = vmul.f32 %v1517, %v1493
    %v1522 = vadd.f32 %v1518, 1e-05
    %v1523 = vadd.f32 %v1519, 1e-05
    %v1524 = vadd.f32 %v1520, 1e-05
    %v1525 = vadd.f32 %v1521, 1e-05
    %v1526 = vrsqrt.pop %v1522
    %v1527 = vrsqrt.pop %v1523
    %v1528 = vrsqrt.pop %v1524
    %v1529 = vrsqrt.pop %v1525
    %v1530 = vmul.f32 %v1498, %v1526
    %v1531 = vmul.f32 %v1499, %v1527
    %v1532 = vmul.f32 %v1500, %v1528
    %v1533 = vmul.f32 %v1501, %v1529
    %v1535 = vlaneseq
    %v1536 = vshrl.u32 %v1535, 7
    %v1537 = vsub.s32 0, %v1536
    %v1538 = vrot.slane %v1479, %v1537
    %v1540 = vmul.f32 %v1530, %v1538
    %v1541 = vmul.f32 %v1531, %v1538
    %v1542 = vmul.f32 %v1532, %v1538
    %v1543 = vmul.f32 %v1533, %v1538
    %v1545 = vlaneseq
    %v1546 = vshrl.u32 %v1545, 7
    %v1547 = vsub.s32 0, %v1546
    %v1548 = vrot.slane %v1480, %v1547
    %v1550 = vadd.f32 %v1540, %v1548
    %v1551 = vadd.f32 %v1541, %v1548
    %v1552 = vadd.f32 %v1542, %v1548
    %v1553 = vadd.f32 %v1543, %v1548
    %v1554 = vpack.c.bf16 %v1551, %v1550
    %v1555 = vpack.c.bf16 %v1553, %v1552
    %v1556 = vld [vmem:[%s8] sm:$0xff]
    %v1557 = vld [vmem:[%s8 + $0x8] sm:$0xff]
    %v1558 = vld [vmem:[%s8 + $0x10] sm:$0xff]
    %v1559 = vld [vmem:[%s8 + $0x18] sm:$0xff]
    %v1560 = vpack.c.bf16 %v1557, %v1556
    %v1561 = vpack.c.bf16 %v1559, %v1558
    %v1562 = vld [vmem:[#allocation8] sm:$0x1]
    %v1564 = vlaneseq
    %v1565 = vshrl.u32 %v1564, 7
    %v1566 = vsub.s32 0, %v1565
    %v1567 = vrot.slane %v1562, %v1566
    %v1570 = vsel %vm262, %v1554, 0
    %v1573 = vsel %vm262, %v1555, 0
    %1575 = vmatprep.subr.bf16.mxu0 0
    %1576 = vmatpush1.bf16.msra.mxu0 %v1560
    %1577 = vmatprep.subr.bf16.mxu0 0
    %1578 = vmatpush1.bf16.msra.mxu0 %v1561
    %1579 = vmatprep.subr.bf16.mxu0 0
    %1580 = vmatpush1.bf16.msra.mxu0 0
    %1581 = vmatprep.subr.bf16.mxu0 0
    %1582 = vmatpush1.bf16.msra.mxu0 0
    %1583 = vmatprep.subr.bf16.mxu0 0
    %1584 = vmatpush1.bf16.msra.mxu0 0
    %1585 = vmatprep.subr.bf16.mxu0 0
    %1586 = vmatpush1.bf16.msra.mxu0 0
    %1587 = vmatprep.subr.bf16.mxu0 0
    %1588 = vmatpush1.bf16.msra.mxu0 0
    %1589 = vmatprep.subr.bf16.mxu0 0
    %1590 = vmatpush1.bf16.msra.mxu0 0
    %1591 = vmatprep.subr.bf16.mxu0 0
    %1592 = vmatpush1.bf16.msra.mxu0 0
    %1593 = vmatprep.subr.bf16.mxu0 0
    %1594 = vmatpush1.bf16.msra.mxu0 0
    %1595 = vmatprep.subr.bf16.mxu0 0
    %1596 = vmatpush1.bf16.msra.mxu0 0
    %1597 = vmatprep.subr.bf16.mxu0 0
    %1598 = vmatpush1.bf16.msra.mxu0 0
    %1599 = vmatprep.subr.bf16.mxu0 0
    %1600 = vmatpush1.bf16.msra.mxu0 0
    %1601 = vmatprep.subr.bf16.mxu0 0
    %1602 = vmatpush1.bf16.msra.mxu0 0
    %1603 = vmatprep.subr.bf16.mxu0 0
    %1604 = vmatpush1.bf16.msra.mxu0 0
    %1605 = vmatprep.subr.bf16.mxu0 0
    %1606 = vmatpush1.bf16.msra.mxu0 0
    %1607 = vmatprep.mubr.bf16.mxu0 0
    %1608 = vmatmul.mubr.bf16.gmra.mrb[0].mxu0 %v1570
    %v1609 = vpop.f32.mrb[0].mxu0
    %v1610 = vadd.f32 %v1567, %v1609
    %v1611 = vpop.f32.mrb[0].mxu0
    %v1612 = vpop.f32.mrb[0].mxu0
    %v1613 = vadd.f32 %v1567, %v1612
    %v1614 = vpop.f32.mrb[0].mxu0
    %1615 = vmatprep.mubr.bf16.mxu0 0
    %1616 = vmatmul.mubr.bf16.gmra.mrb[0].mxu0 %v1573
    %v1617 = vpop.f32.mrb[0].mxu0
    %v1618 = vadd.f32 %v1567, %v1617
    %v1619 = vpop.f32.mrb[0].mxu0
    %v1620 = vpop.f32.mrb[0].mxu0
    %v1621 = vadd.f32 %v1567, %v1620
    %v1622 = vpop.f32.mrb[0].mxu0
    %1623 = vdwg.mxu0
    %v1624 = vmul.f32 %v1610, %v1610
    %v1625 = vmul.f32 %v1613, %v1613
    %v1626 = vmul.f32 %v1618, %v1618
    %v1627 = vmul.f32 %v1621, %v1621
    %v1628 = vmul.f32 %v1610, %v1624
    %v1629 = vmul.f32 %v1613, %v1625
    %v1630 = vmul.f32 %v1618, %v1626
    %v1631 = vmul.f32 %v1621, %v1627
    %v1632 = vmul.f32 %v1628, 0.044715
    %v1633 = vmul.f32 %v1629, 0.044715
    %v1634 = vmul.f32 %v1630, 0.044715
    %v1635 = vmul.f32 %v1631, 0.044715
    %v1636 = vadd.f32 %v1610, %v1632
    %v1637 = vadd.f32 %v1613, %v1633
    %v1638 = vadd.f32 %v1618, %v1634
    %v1639 = vadd.f32 %v1621, %v1635
    %v1640 = vmul.f32 %v1636, 0.7978846
    %v1641 = vmul.f32 %v1637, 0.7978846
    %v1642 = vmul.f32 %v1638, 0.7978846
    %v1643 = vmul.f32 %v1639, 0.7978846
    %v1644 = vtanh.pop %v1640
    %v1645 = vtanh.pop %v1641
    %v1646 = vtanh.pop %v1642
    %v1647 = vtanh.pop %v1643
    %v1648 = vadd.f32 %v1644, 1.0
    %v1649 = vadd.f32 %v1645, 1.0
    %v1650 = vadd.f32 %v1646, 1.0
    %v1651 = vadd.f32 %v1647, 1.0
    %v1652 = vmul.f32 %v1648, 0.5
    %v1653 = vmul.f32 %v1649, 0.5
    %v1654 = vmul.f32 %v1650, 0.5
    %v1655 = vmul.f32 %v1651, 0.5
    %v1656 = vmul.f32 %v1610, %v1652
    %v1657 = vmul.f32 %v1613, %v1653
    %v1658 = vmul.f32 %v1618, %v1654
    %v1659 = vmul.f32 %v1621, %v1655
    %v1660 = vpack.c.bf16 %v1657, %v1656
    %v1661 = vpack.c.bf16 %v1659, %v1658
    %v1662 = vld [vmem:[%s10] sm:$0xff]
    %v1663 = vld [vmem:[%s10 + $0x8] sm:$0xff]
    %v1664 = vld [vmem:[%s10 + $0x10] sm:$0xff]
    %v1665 = vld [vmem:[%s10 + $0x18] sm:$0xff]
    %v1666 = vld [vmem:[%s10 + $0x20] sm:$0xff]
    %v1667 = vld [vmem:[%s10 + $0x28] sm:$0xff]
    %v1668 = vld [vmem:[%s10 + $0x30] sm:$0xff]
    %v1669 = vld [vmem:[%s10 + $0x38] sm:$0xff]
    %v1670 = vpack.c.bf16 %v1663, %v1662
    %v1671 = vpack.c.bf16 %v1665, %v1664
    %v1672 = vpack.c.bf16 %v1667, %v1666
    %v1673 = vpack.c.bf16 %v1669, %v1668
    %v1674 = vld [vmem:[#allocation10] sm:$0x1]
    %v1676 = vlaneseq
    %v1677 = vshrl.u32 %v1676, 7
    %v1678 = vsub.s32 0, %v1677
    %v1679 = vrot.slane %v1674, %v1678
    %vm1681 = vcmask 523264
    %v1683 = vsel %vm1681, %v1660, 0
    %v1686 = vsel %vm1681, %v1661, 0
    %1688 = vmatprep.subr.bf16.mxu0 0
    %1689 = vmatpush1.bf16.msra.mxu0 %v1670
    %1690 = vmatprep.subr.bf16.mxu0 0
    %1691 = vmatpush1.bf16.msra.mxu0 %v1671
    %1692 = vmatprep.subr.bf16.mxu0 0
    %1693 = vmatpush1.bf16.msra.mxu0 %v1672
    %1694 = vmatprep.subr.bf16.mxu0 0
    %1695 = vmatpush1.bf16.msra.mxu0 %v1673
    %1696 = vmatprep.subr.bf16.mxu0 0
    %1697 = vmatpush1.bf16.msra.mxu0 0
    %1698 = vmatprep.subr.bf16.mxu0 0
    %1699 = vmatpush1.bf16.msra.mxu0 0
    %1700 = vmatprep.subr.bf16.mxu0 0
    %1701 = vmatpush1.bf16.msra.mxu0 0
    %1702 = vmatprep.subr.bf16.mxu0 0
    %1703 = vmatpush1.bf16.msra.mxu0 0
    %1704 = vmatprep.subr.bf16.mxu0 0
    %1705 = vmatpush1.bf16.msra.mxu0 0
    %1706 = vmatprep.subr.bf16.mxu0 0
    %1707 = vmatpush1.bf16.msra.mxu0 0
    %1708 = vmatprep.subr.bf16.mxu0 0
    %1709 = vmatpush1.bf16.msra.mxu0 0
    %1710 = vmatprep.subr.bf16.mxu0 0
    %1711 = vmatpush1.bf16.msra.mxu0 0
    %1712 = vmatprep.subr.bf16.mxu0 0
    %1713 = vmatpush1.bf16.msra.mxu0 0
    %1714 = vmatprep.subr.bf16.mxu0 0
    %1715 = vmatpush1.bf16.msra.mxu0 0
    %1716 = vmatprep.subr.bf16.mxu0 0
    %1717 = vmatpush1.bf16.msra.mxu0 0
    %1718 = vmatprep.subr.bf16.mxu0 0
    %1719 = vmatpush1.bf16.msra.mxu0 0
    %1720 = vmatprep.mubr.bf16.mxu0 0
    %1721 = vmatmul.mubr.bf16.gmra.mrb[0].mxu0 %v1683
    %v1722 = vpop.f32.mrb[0].mxu0
    %v1723 = vadd.f32 %v1679, %v1722
    %v1724 = vpop.f32.mrb[0].mxu0
    %v1725 = vpop.f32.mrb[0].mxu0
    %v1726 = vadd.f32 %v1679, %v1725
    %v1727 = vpop.f32.mrb[0].mxu0
    %1728 = vmatprep.mubr.bf16.mxu0 0
    %1729 = vmatmul.mubr.bf16.gmra.mrb[0].mxu0 %v1686
    %v1730 = vpop.f32.mrb[0].mxu0
    %v1731 = vadd.f32 %v1679, %v1730
    %v1732 = vpop.f32.mrb[0].mxu0
    %v1733 = vpop.f32.mrb[0].mxu0
    %v1734 = vadd.f32 %v1679, %v1733
    %v1735 = vpop.f32.mrb[0].mxu0
    %1736 = vdwg.mxu0
    %v1737 = vadd.f32 %v1550, %v1723
    %v1738 = vadd.f32 %v1551, %v1726
    %v1739 = vadd.f32 %v1552, %v1731
    %v1740 = vadd.f32 %v1553, %v1734
    %v1741 = vld [vmem:[#allocation11] sm:$0x1]
    %v1742 = vld [vmem:[#allocation13] sm:$0x1]
    %v1743 = vsel %vm262, %v1737, 0.0
    %1744 = vadd.xlane.f32.xlu0 %v1743
    %v1745 = vpop.xlane.xlu0 %1744
    %v1746 = vsel %vm262, %v1738, 0.0
    %1747 = vadd.xlane.f32.xlu0 %v1746
    %v1748 = vpop.xlane.xlu0 %1747
    %v1749 = vsel %vm262, %v1739, 0.0
    %1750 = vadd.xlane.f32.xlu0 %v1749
    %v1751 = vpop.xlane.xlu0 %1750
    %v1752 = vsel %vm262, %v1740, 0.0
    %1753 = vadd.xlane.f32.xlu0 %v1752
    %v1754 = vpop.xlane.xlu0 %1753
    %v1755 = vmul.f32 %v1745, %v1493
    %v1756 = vmul.f32 %v1748, %v1493
    %v1757 = vmul.f32 %v1751, %v1493
    %v1758 = vmul.f32 %v1754, %v1493
    %v1759 = vsub.f32 %v1737, %v1755
    %v1760 = vsub.f32 %v1738, %v1756
    %v1761 = vsub.f32 %v1739, %v1757
    %v1762 = vsub.f32 %v1740, %v1758
    %v1763 = vmul.f32 %v1759, %v1759
    %v1764 = vmul.f32 %v1760, %v1760
    %v1765 = vmul.f32 %v1761, %v1761
    %v1766 = vmul.f32 %v1762, %v1762
    %v1767 = vsel %vm262, %v1763, 0.0
    %1768 = vadd.xlane.f32.xlu0 %v1767
    %v1769 = vpop.xlane.xlu0 %1768
    %v1770 = vsel %vm262, %v1764, 0.0
    %1771 = vadd.xlane.f32.xlu0 %v1770
    %v1772 = vpop.xlane.xlu0 %1771
    %v1773 = vsel %vm262, %v1765, 0.0
    %1774 = vadd.xlane.f32.xlu0 %v1773
    %v1775 = vpop.xlane.xlu0 %1774
    %v1776 = vsel %vm262, %v1766, 0.0
    %1777 = vadd.xlane.f32.xlu0 %v1776
    %v1778 = vpop.xlane.xlu0 %1777
    %v1779 = vmul.f32 %v1769, %v1493
    %v1780 = vmul.f32 %v1772, %v1493
    %v1781 = vmul.f32 %v1775, %v1493
    %v1782 = vmul.f32 %v1778, %v1493
    %v1783 = vadd.f32 %v1779, 1e-05
    %v1784 = vadd.f32 %v1780, 1e-05
    %v1785 = vadd.f32 %v1781, 1e-05
    %v1786 = vadd.f32 %v1782, 1e-05
    %v1787 = vrsqrt.pop %v1783
    %v1788 = vrsqrt.pop %v1784
    %v1789 = vrsqrt.pop %v1785
    %v1790 = vrsqrt.pop %v1786
    %v1791 = vmul.f32 %v1759, %v1787
    %v1792 = vmul.f32 %v1760, %v1788
    %v1793 = vmul.f32 %v1761, %v1789
    %v1794 = vmul.f32 %v1762, %v1790
    %v1796 = vlaneseq
    %v1797 = vshrl.u32 %v1796, 7
    %v1798 = vsub.s32 0, %v1797
    %v1799 = vrot.slane %v1741, %v1798
    %v1801 = vmul.f32 %v1791, %v1799
    %v1802 = vmul.f32 %v1792, %v1799
    %v1803 = vmul.f32 %v1793, %v1799
    %v1804 = vmul.f32 %v1794, %v1799
    %v1806 = vlaneseq
    %v1807 = vshrl.u32 %v1806, 7
    %v1808 = vsub.s32 0, %v1807
    %v1809 = vrot.slane %v1742, %v1808
    %v1811 = vadd.f32 %v1801, %v1809
    %v1812 = vadd.f32 %v1802, %v1809
    %v1813 = vadd.f32 %v1803, %v1809
    %v1814 = vadd.f32 %v1804, %v1809
    %v1815 = vpack.c.bf16 %v1812, %v1811
    %v1816 = vpack.c.bf16 %v1814, %v1813
    %s1817 = scalar_lea.vmem %s2, 96
    %v1818 = vld [vmem:[%s1817] sm:$0xff]
    %v1819 = vld [vmem:[%s1817 + $0x8] sm:$0xff]
    %v1820 = vld [vmem:[%s1817 + $0x10] sm:$0xff]
    %v1821 = vld [vmem:[%s1817 + $0x18] sm:$0xff]
    %v1822 = vpack.c.bf16 %v1819, %v1818
    %v1823 = vpack.c.bf16 %v1821, %v1820
    %s1824 = scalar_lea.vmem %s3, 3
    %v1825 = vld [vmem:[%s1824] sm:$0x1]
    %v1827 = vlaneseq
    %v1828 = vshrl.u32 %v1827, 7
    %v1829 = vsub.s32 0, %v1828
    %v1830 = vrot.slane %v1825, %v1829
    %v1833 = vsel %vm262, %v1815, 0
    %v1836 = vsel %vm262, %v1816, 0
    %1838 = vmatprep.subr.bf16.mxu0 0
    %1839 = vmatpush1.bf16.msra.mxu0 %v1822
    %1840 = vmatprep.subr.bf16.mxu0 0
    %1841 = vmatpush1.bf16.msra.mxu0 %v1823
    %1842 = vmatprep.subr.bf16.mxu0 0
    %1843 = vmatpush1.bf16.msra.mxu0 0
    %1844 = vmatprep.subr.bf16.mxu0 0
    %1845 = vmatpush1.bf16.msra.mxu0 0
    %1846 = vmatprep.subr.bf16.mxu0 0
    %1847 = vmatpush1.bf16.msra.mxu0 0
    %1848 = vmatprep.subr.bf16.mxu0 0
    %1849 = vmatpush1.bf16.msra.mxu0 0
    %1850 = vmatprep.subr.bf16.mxu0 0
    %1851 = vmatpush1.bf16.msra.mxu0 0
    %1852 = vmatprep.subr.bf16.mxu0 0
    %1853 = vmatpush1.bf16.msra.mxu0 0
    %1854 = vmatprep.subr.bf16.mxu0 0
    %1855 = vmatpush1.bf16.msra.mxu0 0
    %1856 = vmatprep.subr.bf16.mxu0 0
    %1857 = vmatpush1.bf16.msra.mxu0 0
    %1858 = vmatprep.subr.bf16.mxu0 0
    %1859 = vmatpush1.bf16.msra.mxu0 0
    %1860 = vmatprep.subr.bf16.mxu0 0
    %1861 = vmatpush1.bf16.msra.mxu0 0
    %1862 = vmatprep.subr.bf16.mxu0 0
    %1863 = vmatpush1.bf16.msra.mxu0 0
    %1864 = vmatprep.subr.bf16.mxu0 0
    %1865 = vmatpush1.bf16.msra.mxu0 0
    %1866 = vmatprep.subr.bf16.mxu0 0
    %1867 = vmatpush1.bf16.msra.mxu0 0
    %1868 = vmatprep.subr.bf16.mxu0 0
    %1869 = vmatpush1.bf16.msra.mxu0 0
    %1870 = vmatprep.mubr.bf16.mxu0 0
    %1871 = vmatmul.mubr.bf16.gmra.mrb[0].mxu0 %v1833
    %v1872 = vpop.f32.mrb[0].mxu0
    %v1873 = vadd.f32 %v1830, %v1872
    %v1874 = vpop.f32.mrb[0].mxu0
    %v1875 = vpop.f32.mrb[0].mxu0
    %v1876 = vadd.f32 %v1830, %v1875
    %v1877 = vpop.f32.mrb[0].mxu0
    %1878 = vmatprep.mubr.bf16.mxu0 0
    %1879 = vmatmul.mubr.bf16.gmra.mrb[0].mxu0 %v1836
    %v1880 = vpop.f32.mrb[0].mxu0
    %v1881 = vadd.f32 %v1830, %v1880
    %v1882 = vpop.f32.mrb[0].mxu0
    %v1883 = vpop.f32.mrb[0].mxu0
    %v1884 = vadd.f32 %v1830, %v1883
    %v1885 = vpop.f32.mrb[0].mxu0
    %1886 = vdwg.mxu0
    %s1887 = scalar_lea.vmem %s2, 128
    %v1888 = vld [vmem:[%s1887] sm:$0xff]
    %v1889 = vld [vmem:[%s1887 + $0x8] sm:$0xff]
    %v1890 = vld [vmem:[%s1887 + $0x10] sm:$0xff]
    %v1891 = vld [vmem:[%s1887 + $0x18] sm:$0xff]
    %v1892 = vpack.c.bf16 %v1889, %v1888
    %v1893 = vpack.c.bf16 %v1891, %v1890
    %s1894 = scalar_lea.vmem %s3, 4
    %v1895 = vld [vmem:[%s1894] sm:$0x1]
    %v1897 = vlaneseq
    %v1898 = vshrl.u32 %v1897, 7
    %v1899 = vsub.s32 0, %v1898
    %v1900 = vrot.slane %v1895, %v1899
    %1902 = vmatprep.subr.bf16.mxu0 0
    %1903 = vmatpush1.bf16.msra.mxu0 %v1892
    %1904 = vmatprep.subr.bf16.mxu0 0
    %1905 = vmatpush1.bf16.msra.mxu0 %v1893
    %1906 = vmatprep.subr.bf16.mxu0 0
    %1907 = vmatpush1.bf16.msra.mxu0 0
    %1908 = vmatprep.subr.bf16.mxu0 0
    %1909 = vmatpush1.bf16.msra.mxu0 0
    %1910 = vmatprep.subr.bf16.mxu0 0
    %1911 = vmatpush1.bf16.msra.mxu0 0
    %1912 = vmatprep.subr.bf16.mxu0 0
    %1913 = vmatpush1.bf16.msra.mxu0 0
    %1914 = vmatprep.subr.bf16.mxu0 0
    %1915 = vmatpush1.bf16.msra.mxu0 0
    %1916 = vmatprep.subr.bf16.mxu0 0
    %1917 = vmatpush1.bf16.msra.mxu0 0
    %1918 = vmatprep.subr.bf16.mxu0 0
    %1919 = vmatpush1.bf16.msra.mxu0 0
    %1920 = vmatprep.subr.bf16.mxu0 0
    %1921 = vmatpush1.bf16.msra.mxu0 0
    %1922 = vmatprep.subr.bf16.mxu0 0
    %1923 = vmatpush1.bf16.msra.mxu0 0
    %1924 = vmatprep.subr.bf16.mxu0 0
    %1925 = vmatpush1.bf16.msra.mxu0 0
    %1926 = vmatprep.subr.bf16.mxu0 0
    %1927 = vmatpush1.bf16.msra.mxu0 0
    %1928 = vmatprep.subr.bf16.mxu0 0
    %1929 = vmatpush1.bf16.msra.mxu0 0
    %1930 = vmatprep.subr.bf16.mxu0 0
    %1931 = vmatpush1.bf16.msra.mxu0 0
    %1932 = vmatprep.subr.bf16.mxu0 0
    %1933 = vmatpush1.bf16.msra.mxu0 0
    %1934 = vmatprep.mubr.bf16.mxu0 0
    %1935 = vmatmul.mubr.bf16.gmra.mrb[0].mxu0 %v1833
    %v1936 = vpop.f32.mrb[0].mxu0
    %v1937 = vadd.f32 %v1900, %v1936
    %v1938 = vpop.f32.mrb[0].mxu0
    %v1939 = vpop.f32.mrb[0].mxu0
    %v1940 = vadd.f32 %v1900, %v1939
    %v1941 = vpop.f32.mrb[0].mxu0
    %1942 = vmatprep.mubr.bf16.mxu0 0
    %1943 = vmatmul.mubr.bf16.gmra.mrb[0].mxu0 %v1836
    %v1944 = vpop.f32.mrb[0].mxu0
    %v1945 = vadd.f32 %v1900, %v1944
    %v1946 = vpop.f32.mrb[0].mxu0
    %v1947 = vpop.f32.mrb[0].mxu0
    %v1948 = vadd.f32 %v1900, %v1947
    %v1949 = vpop.f32.mrb[0].mxu0
    %1950 = vdwg.mxu0
    %s1951 = scalar_lea.vmem %s2, 160
    %v1952 = vld [vmem:[%s1951] sm:$0xff]
    %v1953 = vld [vmem:[%s1951 + $0x8] sm:$0xff]
    %v1954 = vld [vmem:[%s1951 + $0x10] sm:$0xff]
    %v1955 = vld [vmem:[%s1951 + $0x18] sm:$0xff]
    %v1956 = vpack.c.bf16 %v1953, %v1952
    %v1957 = vpack.c.bf16 %v1955, %v1954
    %s1958 = scalar_lea.vmem %s3, 5
    %v1959 = vld [vmem:[%s1958] sm:$0x1]
    %v1961 = vlaneseq
    %v1962 = vshrl.u32 %v1961, 7
    %v1963 = vsub.s32 0, %v1962
    %v1964 = vrot.slane %v1959, %v1963
    %1966 = vmatprep.subr.bf16.mxu0 0
    %1967 = vmatpush1.bf16.msra.mxu0 %v1956
    %1968 = vmatprep.subr.bf16.mxu0 0
    %1969 = vmatpush1.bf16.msra.mxu0 %v1957
    %1970 = vmatprep.subr.bf16.mxu0 0
    %1971 = vmatpush1.bf16.msra.mxu0 0
    %1972 = vmatprep.subr.bf16.mxu0 0
    %1973 = vmatpush1.bf16.msra.mxu0 0
    %1974 = vmatprep.subr.bf16.mxu0 0
    %1975 = vmatpush1.bf16.msra.mxu0 0
    %1976 = vmatprep.subr.bf16.mxu0 0
    %1977 = vmatpush1.bf16.msra.mxu0 0
    %1978 = vmatprep.subr.bf16.mxu0 0
    %1979 = vmatpush1.bf16.msra.mxu0 0
    %1980 = vmatprep.subr.bf16.mxu0 0
    %1981 = vmatpush1.bf16.msra.mxu0 0
    %1982 = vmatprep.subr.bf16.mxu0 0
    %1983 = vmatpush1.bf16.msra.mxu0 0
    %1984 = vmatprep.subr.bf16.mxu0 0
    %1985 = vmatpush1.bf16.msra.mxu0 0
    %1986 = vmatprep.subr.bf16.mxu0 0
    %1987 = vmatpush1.bf16.msra.mxu0 0
    %1988 = vmatprep.subr.bf16.mxu0 0
    %1989 = vmatpush1.bf16.msra.mxu0 0
    %1990 = vmatprep.subr.bf16.mxu0 0
    %1991 = vmatpush1.bf16.msra.mxu0 0
    %1992 = vmatprep.subr.bf16.mxu0 0
    %1993 = vmatpush1.bf16.msra.mxu0 0
    %1994 = vmatprep.subr.bf16.mxu0 0
    %1995 = vmatpush1.bf16.msra.mxu0 0
    %1996 = vmatprep.subr.bf16.mxu0 0
    %1997 = vmatpush1.bf16.msra.mxu0 0
    %1998 = vmatprep.mubr.bf16.mxu0 0
    %1999 = vmatmul.mubr.bf16.gmra.mrb[0].mxu0 %v1833
    %v2000 = vpop.f32.mrb[0].mxu0
    %v2001 = vadd.f32 %v1964, %v2000
    %v2002 = vpop.f32.mrb[0].mxu0
    %v2003 = vpop.f32.mrb[0].mxu0
    %v2004 = vadd.f32 %v1964, %v2003
    %v2005 = vpop.f32.mrb[0].mxu0
    %2006 = vmatprep.mubr.bf16.mxu0 0
    %2007 = vmatmul.mubr.bf16.gmra.mrb[0].mxu0 %v1836
    %v2008 = vpop.f32.mrb[0].mxu0
    %v2009 = vadd.f32 %v1964, %v2008
    %v2010 = vpop.f32.mrb[0].mxu0
    %v2011 = vpop.f32.mrb[0].mxu0
    %v2012 = vadd.f32 %v1964, %v2011
    %v2013 = vpop.f32.mrb[0].mxu0
    %2014 = vdwg.mxu0
    %v2015 = vmul.f32 %v1873, 0.35355338
    %v2016 = vmul.f32 %v1876, 0.35355338
    %v2017 = vmul.f32 %v1881, 0.35355338
    %v2018 = vmul.f32 %v1884, 0.35355338
    %v2019 = vpack.c.bf16 %v1940, %v1937
    %v2020 = vpack.c.bf16 %v1948, %v1945
    %v2021 = vpack.c.bf16 %v2004, %v2001
    %v2022 = vpack.c.bf16 %v2012, %v2009
    %v2023 = vmul.f32 %v2015, %v231
    %v2024 = vmul.f32 %v2016, %v231
    %v2025 = vmul.f32 %v2017, %v231
    %v2026 = vmul.f32 %v2018, %v231
    %v2027 = vpack.c.bf16 %v2024, %v2023
    %v2028 = vpack.c.bf16 %v2026, %v2025
    %v2030 = vsel %vm262, %v2027, 0
    %v2033 = vsel %vm262, %v2019, 0
    %2035 = vmatprep.subr.bf16.mxu0 0
    %2036 = vmatpush1.bf16.xpose.msra.mxu0 %v2033
    %2037 = vmatprep.subr.bf16.mxu0 0
    %2038 = vmatpush1.bf16.xpose.msra.mxu0 0
    %2039 = vmatprep.subr.bf16.mxu0 0
    %2040 = vmatpush1.bf16.xpose.msra.mxu0 0
    %2041 = vmatprep.subr.bf16.mxu0 0
    %2042 = vmatpush1.bf16.xpose.msra.mxu0 0
    %2043 = vmatprep.subr.bf16.mxu0 0
    %2044 = vmatpush1.bf16.xpose.msra.mxu0 0
    %2045 = vmatprep.subr.bf16.mxu0 0
    %2046 = vmatpush1.bf16.xpose.msra.mxu0 0
    %2047 = vmatprep.subr.bf16.mxu0 0
    %2048 = vmatpush1.bf16.xpose.msra.mxu0 0
    %2049 = vmatprep.subr.bf16.mxu0 0
    %2050 = vmatpush1.bf16.xpose.msra.mxu0 0
    %2051 = vmatprep.subr.bf16.mxu0 0
    %2052 = vmatpush1.bf16.xpose.msra.mxu0 0
    %2053 = vmatprep.subr.bf16.mxu0 0
    %2054 = vmatpush1.bf16.xpose.msra.mxu0 0
    %2055 = vmatprep.subr.bf16.mxu0 0
    %2056 = vmatpush1.bf16.xpose.msra.mxu0 0
    %2057 = vmatprep.subr.bf16.mxu0 0
    %2058 = vmatpush1.bf16.xpose.msra.mxu0 0
    %2059 = vmatprep.subr.bf16.mxu0 0
    %2060 = vmatpush1.bf16.xpose.msra.mxu0 0
    %2061 = vmatprep.subr.bf16.mxu0 0
    %2062 = vmatpush1.bf16.xpose.msra.mxu0 0
    %2063 = vmatprep.subr.bf16.mxu0 0
    %2064 = vmatpush1.bf16.xpose.msra.mxu0 0
    %2065 = vmatprep.subr.bf16.mxu0 0
    %2066 = vmatpush1.bf16.xpose.msra.mxu0 0
    %2067 = vmatprep.mubr.bf16.mxu0 0
    %2068 = vmatmul.mubr.bf16.gmra.mrb[0].mxu0 %v2030
    %v2069 = vpop.f32.mrb[0].mxu0
    %v2070 = vadd.f32 0.0, %v2069
    %v2071 = vpop.f32.mrb[0].mxu0
    %v2072 = vpop.f32.mrb[0].mxu0
    %v2073 = vadd.f32 0.0, %v2072
    %v2074 = vpop.f32.mrb[0].mxu0
    %2075 = vdwg.mxu0
    %v2077 = vsel %vm262, %v2028, 0
    %v2080 = vsel %vm262, %v2020, 0
    %2082 = vmatprep.subr.bf16.mxu0 0
    %2083 = vmatpush1.bf16.xpose.msra.mxu0 %v2080
    %2084 = vmatprep.subr.bf16.mxu0 0
    %2085 = vmatpush1.bf16.xpose.msra.mxu0 0
    %2086 = vmatprep.subr.bf16.mxu0 0
    %2087 = vmatpush1.bf16.xpose.msra.mxu0 0
    %2088 = vmatprep.subr.bf16.mxu0 0
    %2089 = vmatpush1.bf16.xpose.msra.mxu0 0
    %2090 = vmatprep.subr.bf16.mxu0 0
    %2091 = vmatpush1.bf16.xpose.msra.mxu0 0
    %2092 = vmatprep.subr.bf16.mxu0 0
    %2093 = vmatpush1.bf16.xpose.msra.mxu0 0
    %2094 = vmatprep.subr.bf16.mxu0 0
    %2095 = vmatpush1.bf16.xpose.msra.mxu0 0
    %2096 = vmatprep.subr.bf16.mxu0 0
    %2097 = vmatpush1.bf16.xpose.msra.mxu0 0
    %2098 = vmatprep.subr.bf16.mxu0 0
    %2099 = vmatpush1.bf16.xpose.msra.mxu0 0
    %2100 = vmatprep.subr.bf16.mxu0 0
    %2101 = vmatpush1.bf16.xpose.msra.mxu0 0
    %2102 = vmatprep.subr.bf16.mxu0 0
    %2103 = vmatpush1.bf16.xpose.msra.mxu0 0
    %2104 = vmatprep.subr.bf16.mxu0 0
    %2105 = vmatpush1.bf16.xpose.msra.mxu0 0
    %2106 = vmatprep.subr.bf16.mxu0 0
    %2107 = vmatpush1.bf16.xpose.msra.mxu0 0
    %2108 = vmatprep.subr.bf16.mxu0 0
    %2109 = vmatpush1.bf16.xpose.msra.mxu0 0
    %2110 = vmatprep.subr.bf16.mxu0 0
    %2111 = vmatpush1.bf16.xpose.msra.mxu0 0
    %2112 = vmatprep.subr.bf16.mxu0 0
    %2113 = vmatpush1.bf16.xpose.msra.mxu0 0
    %2114 = vmatprep.mubr.bf16.mxu0 0
    %2115 = vmatmul.mubr.bf16.gmra.mrb[0].mxu0 %v2077
    %v2116 = vpop.f32.mrb[0].mxu0
    %v2117 = vadd.f32 0.0, %v2116
    %v2118 = vpop.f32.mrb[0].mxu0
    %v2119 = vpop.f32.mrb[0].mxu0
    %v2120 = vadd.f32 0.0, %v2119
    %v2121 = vpop.f32.mrb[0].mxu0
    %2122 = vdwg.mxu0
    %v2123 = vsel %vm554, %v2070, -inf
    %2124 = vmax.xlane.f32.xlu0 %v2123
    %v2125 = vpop.xlane.xlu0 %2124
    %v2126 = vsel %vm554, %v2073, -inf
    %2127 = vmax.xlane.f32.xlu0 %v2126
    %v2128 = vpop.xlane.xlu0 %2127
    %v2129 = vsel %vm554, %v2117, -inf
    %2130 = vmax.xlane.f32.xlu0 %v2129
    %v2131 = vpop.xlane.xlu0 %2130
    %v2132 = vsel %vm554, %v2120, -inf
    %2133 = vmax.xlane.f32.xlu0 %v2132
    %v2134 = vpop.xlane.xlu0 %2133
    %v2135 = vsub.f32 %v2070, %v2125
    %v2136 = vsub.f32 %v2073, %v2128
    %v2137 = vsub.f32 %v2117, %v2131
    %v2138 = vsub.f32 %v2120, %v2134
    %v2139 = vmul.f32 %v2135, 1.442695
    %v2140 = vpow.pop %v2139
    %v2141 = vmul.f32 %v2136, 1.442695
    %v2142 = vpow.pop %v2141
    %v2143 = vmul.f32 %v2137, 1.442695
    %v2144 = vpow.pop %v2143
    %v2145 = vmul.f32 %v2138, 1.442695
    %v2146 = vpow.pop %v2145
    %v2147 = vsel %vm554, %v2140, 0.0
    %2148 = vadd.xlane.f32.xlu0 %v2147
    %v2149 = vpop.xlane.xlu0 %2148
    %v2150 = vsel %vm554, %v2142, 0.0
    %2151 = vadd.xlane.f32.xlu0 %v2150
    %v2152 = vpop.xlane.xlu0 %2151
    %v2153 = vsel %vm554, %v2144, 0.0
    %2154 = vadd.xlane.f32.xlu0 %v2153
    %v2155 = vpop.xlane.xlu0 %2154
    %v2156 = vsel %vm554, %v2146, 0.0
    %2157 = vadd.xlane.f32.xlu0 %v2156
    %v2158 = vpop.xlane.xlu0 %2157
    %v2159 = vrcp.pop %v2149
    %v2160 = vmul.f32 %v2140, %v2159
    %v2161 = vrcp.pop %v2152
    %v2162 = vmul.f32 %v2142, %v2161
    %v2163 = vrcp.pop %v2155
    %v2164 = vmul.f32 %v2144, %v2163
    %v2165 = vrcp.pop %v2158
    %v2166 = vmul.f32 %v2146, %v2165
    %v2167 = vpack.c.bf16 %v2162, %v2160
    %v2168 = vpack.c.bf16 %v2166, %v2164
    %v2170 = vsel %vm554, %v2167, 0
    %2172 = vmatprep.subr.bf16.mxu0 0
    %2173 = vmatpush1.bf16.msra.mxu0 %v2021
    %2174 = vmatprep.subr.bf16.mxu0 0
    %2175 = vmatpush1.bf16.msra.mxu0 0
    %2176 = vmatprep.subr.bf16.mxu0 0
    %2177 = vmatpush1.bf16.msra.mxu0 0
    %2178 = vmatprep.subr.bf16.mxu0 0
    %2179 = vmatpush1.bf16.msra.mxu0 0
    %2180 = vmatprep.subr.bf16.mxu0 0
    %2181 = vmatpush1.bf16.msra.mxu0 0
    %2182 = vmatprep.subr.bf16.mxu0 0
    %2183 = vmatpush1.bf16.msra.mxu0 0
    %2184 = vmatprep.subr.bf16.mxu0 0
    %2185 = vmatpush1.bf16.msra.mxu0 0
    %2186 = vmatprep.subr.bf16.mxu0 0
    %2187 = vmatpush1.bf16.msra.mxu0 0
    %2188 = vmatprep.subr.bf16.mxu0 0
    %2189 = vmatpush1.bf16.msra.mxu0 0
    %2190 = vmatprep.subr.bf16.mxu0 0
    %2191 = vmatpush1.bf16.msra.mxu0 0
    %2192 = vmatprep.subr.bf16.mxu0 0
    %2193 = vmatpush1.bf16.msra.mxu0 0
    %2194 = vmatprep.subr.bf16.mxu0 0
    %2195 = vmatpush1.bf16.msra.mxu0 0
    %2196 = vmatprep.subr.bf16.mxu0 0
    %2197 = vmatpush1.bf16.msra.mxu0 0
    %2198 = vmatprep.subr.bf16.mxu0 0
    %2199 = vmatpush1.bf16.msra.mxu0 0
    %2200 = vmatprep.subr.bf16.mxu0 0
    %2201 = vmatpush1.bf16.msra.mxu0 0
    %2202 = vmatprep.subr.bf16.mxu0 0
    %2203 = vmatpush1.bf16.msra.mxu0 0
    %2204 = vmatprep.mubr.bf16.mxu0 0
    %2205 = vmatmul.mubr.bf16.gmra.mrb[0].mxu0 %v2170
    %v2206 = vpop.f32.mrb[0].mxu0
    %v2207 = vadd.f32 0.0, %v2206
    %v2208 = vpop.f32.mrb[0].mxu0
    %v2209 = vpop.f32.mrb[0].mxu0
    %v2210 = vadd.f32 0.0, %v2209
    %v2211 = vpop.f32.mrb[0].mxu0
    %2212 = vdwg.mxu0
    %v2214 = vsel %vm554, %v2168, 0
    %2216 = vmatprep.subr.bf16.mxu0 0
    %2217 = vmatpush1.bf16.msra.mxu0 %v2022
    %2218 = vmatprep.subr.bf16.mxu0 0
    %2219 = vmatpush1.bf16.msra.mxu0 0
    %2220 = vmatprep.subr.bf16.mxu0 0
    %2221 = vmatpush1.bf16.msra.mxu0 0
    %2222 = vmatprep.subr.bf16.mxu0 0
    %2223 = vmatpush1.bf16.msra.mxu0 0
    %2224 = vmatprep.subr.bf16.mxu0 0
    %2225 = vmatpush1.bf16.msra.mxu0 0
    %2226 = vmatprep.subr.bf16.mxu0 0
    %2227 = vmatpush1.bf16.msra.mxu0 0
    %2228 = vmatprep.subr.bf16.mxu0 0
    %2229 = vmatpush1.bf16.msra.mxu0 0
    %2230 = vmatprep.subr.bf16.mxu0 0
    %2231 = vmatpush1.bf16.msra.mxu0 0
    %2232 = vmatprep.subr.bf16.mxu0 0
    %2233 = vmatpush1.bf16.msra.mxu0 0
    %2234 = vmatprep.subr.bf16.mxu0 0
    %2235 = vmatpush1.bf16.msra.mxu0 0
    %2236 = vmatprep.subr.bf16.mxu0 0
    %2237 = vmatpush1.bf16.msra.mxu0 0
    %2238 = vmatprep.subr.bf16.mxu0 0
    %2239 = vmatpush1.bf16.msra.mxu0 0
    %2240 = vmatprep.subr.bf16.mxu0 0
    %2241 = vmatpush1.bf16.msra.mxu0 0
    %2242 = vmatprep.subr.bf16.mxu0 0
    %2243 = vmatpush1.bf16.msra.mxu0 0
    %2244 = vmatprep.subr.bf16.mxu0 0
    %2245 = vmatpush1.bf16.msra.mxu0 0
    %2246 = vmatprep.subr.bf16.mxu0 0
    %2247 = vmatpush1.bf16.msra.mxu0 0
    %2248 = vmatprep.mubr.bf16.mxu0 0
    %2249 = vmatmul.mubr.bf16.gmra.mrb[0].mxu0 %v2214
    %v2250 = vpop.f32.mrb[0].mxu0
    %v2251 = vadd.f32 0.0, %v2250
    %v2252 = vpop.f32.mrb[0].mxu0
    %v2253 = vpop.f32.mrb[0].mxu0
    %v2254 = vadd.f32 0.0, %v2253
    %v2255 = vpop.f32.mrb[0].mxu0
    %2256 = vdwg.mxu0
    %v2257 = vmul.f32 %v2207, %v231
    %v2258 = vmul.f32 %v2210, %v231
    %v2259 = vmul.f32 %v2251, %v231
    %v2260 = vmul.f32 %v2254, %v231
    %v2261 = vadd.f32 %v2257, 0.0
    %v2262 = vadd.f32 %v2258, 0.0
    %v2263 = vadd.f32 %v2259, 0.0
    %v2264 = vadd.f32 %v2260, 0.0
    %v2265 = vmul.f32 %v2015, %v236
    %v2266 = vmul.f32 %v2016, %v236
    %v2267 = vmul.f32 %v2017, %v236
    %v2268 = vmul.f32 %v2018, %v236
    %v2269 = vpack.c.bf16 %v2266, %v2265
    %v2270 = vpack.c.bf16 %v2268, %v2267
    %v2272 = vsel %vm262, %v2269, 0
    %2274 = vmatprep.subr.bf16.mxu0 0
    %2275 = vmatpush1.bf16.xpose.msra.mxu0 %v2033
    %2276 = vmatprep.subr.bf16.mxu0 0
    %2277 = vmatpush1.bf16.xpose.msra.mxu0 0
    %2278 = vmatprep.subr.bf16.mxu0 0
    %2279 = vmatpush1.bf16.xpose.msra.mxu0 0
    %2280 = vmatprep.subr.bf16.mxu0 0
    %2281 = vmatpush1.bf16.xpose.msra.mxu0 0
    %2282 = vmatprep.subr.bf16.mxu0 0
    %2283 = vmatpush1.bf16.xpose.msra.mxu0 0
    %2284 = vmatprep.subr.bf16.mxu0 0
    %2285 = vmatpush1.bf16.xpose.msra.mxu0 0
    %2286 = vmatprep.subr.bf16.mxu0 0
    %2287 = vmatpush1.bf16.xpose.msra.mxu0 0
    %2288 = vmatprep.subr.bf16.mxu0 0
    %2289 = vmatpush1.bf16.xpose.msra.mxu0 0
    %2290 = vmatprep.subr.bf16.mxu0 0
    %2291 = vmatpush1.bf16.xpose.msra.mxu0 0
    %2292 = vmatprep.subr.bf16.mxu0 0
    %2293 = vmatpush1.bf16.xpose.msra.mxu0 0
    %2294 = vmatprep.subr.bf16.mxu0 0
    %2295 = vmatpush1.bf16.xpose.msra.mxu0 0
    %2296 = vmatprep.subr.bf16.mxu0 0
    %2297 = vmatpush1.bf16.xpose.msra.mxu0 0
    %2298 = vmatprep.subr.bf16.mxu0 0
    %2299 = vmatpush1.bf16.xpose.msra.mxu0 0
    %2300 = vmatprep.subr.bf16.mxu0 0
    %2301 = vmatpush1.bf16.xpose.msra.mxu0 0
    %2302 = vmatprep.subr.bf16.mxu0 0
    %2303 = vmatpush1.bf16.xpose.msra.mxu0 0
    %2304 = vmatprep.subr.bf16.mxu0 0
    %2305 = vmatpush1.bf16.xpose.msra.mxu0 0
    %2306 = vmatprep.mubr.bf16.mxu0 0
    %2307 = vmatmul.mubr.bf16.gmra.mrb[0].mxu0 %v2272
    %v2308 = vpop.f32.mrb[0].mxu0
    %v2309 = vadd.f32 0.0, %v2308
    %v2310 = vpop.f32.mrb[0].mxu0
    %v2311 = vpop.f32.mrb[0].mxu0
    %v2312 = vadd.f32 0.0, %v2311
    %v2313 = vpop.f32.mrb[0].mxu0
    %2314 = vdwg.mxu0
    %v2316 = vsel %vm262, %v2270, 0
    %2318 = vmatprep.subr.bf16.mxu0 0
    %2319 = vmatpush1.bf16.xpose.msra.mxu0 %v2080
    %2320 = vmatprep.subr.bf16.mxu0 0
    %2321 = vmatpush1.bf16.xpose.msra.mxu0 0
    %2322 = vmatprep.subr.bf16.mxu0 0
    %2323 = vmatpush1.bf16.xpose.msra.mxu0 0
    %2324 = vmatprep.subr.bf16.mxu0 0
    %2325 = vmatpush1.bf16.xpose.msra.mxu0 0
    %2326 = vmatprep.subr.bf16.mxu0 0
    %2327 = vmatpush1.bf16.xpose.msra.mxu0 0
    %2328 = vmatprep.subr.bf16.mxu0 0
    %2329 = vmatpush1.bf16.xpose.msra.mxu0 0
    %2330 = vmatprep.subr.bf16.mxu0 0
    %2331 = vmatpush1.bf16.xpose.msra.mxu0 0
    %2332 = vmatprep.subr.bf16.mxu0 0
    %2333 = vmatpush1.bf16.xpose.msra.mxu0 0
    %2334 = vmatprep.subr.bf16.mxu0 0
    %2335 = vmatpush1.bf16.xpose.msra.mxu0 0
    %2336 = vmatprep.subr.bf16.mxu0 0
    %2337 = vmatpush1.bf16.xpose.msra.mxu0 0
    %2338 = vmatprep.subr.bf16.mxu0 0
    %2339 = vmatpush1.bf16.xpose.msra.mxu0 0
    %2340 = vmatprep.subr.bf16.mxu0 0
    %2341 = vmatpush1.bf16.xpose.msra.mxu0 0
    %2342 = vmatprep.subr.bf16.mxu0 0
    %2343 = vmatpush1.bf16.xpose.msra.mxu0 0
    %2344 = vmatprep.subr.bf16.mxu0 0
    %2345 = vmatpush1.bf16.xpose.msra.mxu0 0
    %2346 = vmatprep.subr.bf16.mxu0 0
    %2347 = vmatpush1.bf16.xpose.msra.mxu0 0
    %2348 = vmatprep.subr.bf16.mxu0 0
    %2349 = vmatpush1.bf16.xpose.msra.mxu0 0
    %2350 = vmatprep.mubr.bf16.mxu0 0
    %2351 = vmatmul.mubr.bf16.gmra.mrb[0].mxu0 %v2316
    %v2352 = vpop.f32.mrb[0].mxu0
    %v2353 = vadd.f32 0.0, %v2352
    %v2354 = vpop.f32.mrb[0].mxu0
    %v2355 = vpop.f32.mrb[0].mxu0
    %v2356 = vadd.f32 0.0, %v2355
    %v2357 = vpop.f32.mrb[0].mxu0
    %2358 = vdwg.mxu0
    %v2359 = vsel %vm554, %v2309, -inf
    %2360 = vmax.xlane.f32.xlu0 %v2359
    %v2361 = vpop.xlane.xlu0 %2360
    %v2362 = vsel %vm554, %v2312, -inf
    %2363 = vmax.xlane.f32.xlu0 %v2362
    %v2364 = vpop.xlane.xlu0 %2363
    %v2365 = vsel %vm554, %v2353, -inf
    %2366 = vmax.xlane.f32.xlu0 %v2365
    %v2367 = vpop.xlane.xlu0 %2366
    %v2368 = vsel %vm554, %v2356, -inf
    %2369 = vmax.xlane.f32.xlu0 %v2368
    %v2370 = vpop.xlane.xlu0 %2369
    %v2371 = vsub.f32 %v2309, %v2361
    %v2372 = vsub.f32 %v2312, %v2364
    %v2373 = vsub.f32 %v2353, %v2367
    %v2374 = vsub.f32 %v2356, %v2370
    %v2375 = vmul.f32 %v2371, 1.442695
    %v2376 = vpow.pop %v2375
    %v2377 = vmul.f32 %v2372, 1.442695
    %v2378 = vpow.pop %v2377
    %v2379 = vmul.f32 %v2373, 1.442695
    %v2380 = vpow.pop %v2379
    %v2381 = vmul.f32 %v2374, 1.442695
    %v2382 = vpow.pop %v2381
    %v2383 = vsel %vm554, %v2376, 0.0
    %2384 = vadd.xlane.f32.xlu0 %v2383
    %v2385 = vpop.xlane.xlu0 %2384
    %v2386 = vsel %vm554, %v2378, 0.0
    %2387 = vadd.xlane.f32.xlu0 %v2386
    %v2388 = vpop.xlane.xlu0 %2387
    %v2389 = vsel %vm554, %v2380, 0.0
    %2390 = vadd.xlane.f32.xlu0 %v2389
    %v2391 = vpop.xlane.xlu0 %2390
    %v2392 = vsel %vm554, %v2382, 0.0
    %2393 = vadd.xlane.f32.xlu0 %v2392
    %v2394 = vpop.xlane.xlu0 %2393
    %v2395 = vrcp.pop %v2385
    %v2396 = vmul.f32 %v2376, %v2395
    %v2397 = vrcp.pop %v2388
    %v2398 = vmul.f32 %v2378, %v2397
    %v2399 = vrcp.pop %v2391
    %v2400 = vmul.f32 %v2380, %v2399
    %v2401 = vrcp.pop %v2394
    %v2402 = vmul.f32 %v2382, %v2401
    %v2403 = vpack.c.bf16 %v2398, %v2396
    %v2404 = vpack.c.bf16 %v2402, %v2400
    %v2406 = vsel %vm554, %v2403, 0
    %2408 = vmatprep.subr.bf16.mxu0 0
    %2409 = vmatpush1.bf16.msra.mxu0 %v2021
    %2410 = vmatprep.subr.bf16.mxu0 0
    %2411 = vmatpush1.bf16.msra.mxu0 0
    %2412 = vmatprep.subr.bf16.mxu0 0
    %2413 = vmatpush1.bf16.msra.mxu0 0
    %2414 = vmatprep.subr.bf16.mxu0 0
    %2415 = vmatpush1.bf16.msra.mxu0 0
    %2416 = vmatprep.subr.bf16.mxu0 0
    %2417 = vmatpush1.bf16.msra.mxu0 0
    %2418 = vmatprep.subr.bf16.mxu0 0
    %2419 = vmatpush1.bf16.msra.mxu0 0
    %2420 = vmatprep.subr.bf16.mxu0 0
    %2421 = vmatpush1.bf16.msra.mxu0 0
    %2422 = vmatprep.subr.bf16.mxu0 0
    %2423 = vmatpush1.bf16.msra.mxu0 0
    %2424 = vmatprep.subr.bf16.mxu0 0
    %2425 = vmatpush1.bf16.msra.mxu0 0
    %2426 = vmatprep.subr.bf16.mxu0 0
    %2427 = vmatpush1.bf16.msra.mxu0 0
    %2428 = vmatprep.subr.bf16.mxu0 0
    %2429 = vmatpush1.bf16.msra.mxu0 0
    %2430 = vmatprep.subr.bf16.mxu0 0
    %2431 = vmatpush1.bf16.msra.mxu0 0
    %2432 = vmatprep.subr.bf16.mxu0 0
    %2433 = vmatpush1.bf16.msra.mxu0 0
    %2434 = vmatprep.subr.bf16.mxu0 0
    %2435 = vmatpush1.bf16.msra.mxu0 0
    %2436 = vmatprep.subr.bf16.mxu0 0
    %2437 = vmatpush1.bf16.msra.mxu0 0
    %2438 = vmatprep.subr.bf16.mxu0 0
    %2439 = vmatpush1.bf16.msra.mxu0 0
    %2440 = vmatprep.mubr.bf16.mxu0 0
    %2441 = vmatmul.mubr.bf16.gmra.mrb[0].mxu0 %v2406
    %v2442 = vpop.f32.mrb[0].mxu0
    %v2443 = vadd.f32 0.0, %v2442
    %v2444 = vpop.f32.mrb[0].mxu0
    %v2445 = vpop.f32.mrb[0].mxu0
    %v2446 = vadd.f32 0.0, %v2445
    %v2447 = vpop.f32.mrb[0].mxu0
    %2448 = vdwg.mxu0
    %v2450 = vsel %vm554, %v2404, 0
    %2452 = vmatprep.subr.bf16.mxu0 0
    %2453 = vmatpush1.bf16.msra.mxu0 %v2022
    %2454 = vmatprep.subr.bf16.mxu0 0
    %2455 = vmatpush1.bf16.msra.mxu0 0
    %2456 = vmatprep.subr.bf16.mxu0 0
    %2457 = vmatpush1.bf16.msra.mxu0 0
    %2458 = vmatprep.subr.bf16.mxu0 0
    %2459 = vmatpush1.bf16.msra.mxu0 0
    %2460 = vmatprep.subr.bf16.mxu0 0
    %2461 = vmatpush1.bf16.msra.mxu0 0
    %2462 = vmatprep.subr.bf16.mxu0 0
    %2463 = vmatpush1.bf16.msra.mxu0 0
    %2464 = vmatprep.subr.bf16.mxu0 0
    %2465 = vmatpush1.bf16.msra.mxu0 0
    %2466 = vmatprep.subr.bf16.mxu0 0
    %2467 = vmatpush1.bf16.msra.mxu0 0
    %2468 = vmatprep.subr.bf16.mxu0 0
    %2469 = vmatpush1.bf16.msra.mxu0 0
    %2470 = vmatprep.subr.bf16.mxu0 0
    %2471 = vmatpush1.bf16.msra.mxu0 0
    %2472 = vmatprep.subr.bf16.mxu0 0
    %2473 = vmatpush1.bf16.msra.mxu0 0
    %2474 = vmatprep.subr.bf16.mxu0 0
    %2475 = vmatpush1.bf16.msra.mxu0 0
    %2476 = vmatprep.subr.bf16.mxu0 0
    %2477 = vmatpush1.bf16.msra.mxu0 0
    %2478 = vmatprep.subr.bf16.mxu0 0
    %2479 = vmatpush1.bf16.msra.mxu0 0
    %2480 = vmatprep.subr.bf16.mxu0 0
    %2481 = vmatpush1.bf16.msra.mxu0 0
    %2482 = vmatprep.subr.bf16.mxu0 0
    %2483 = vmatpush1.bf16.msra.mxu0 0
    %2484 = vmatprep.mubr.bf16.mxu0 0
    %2485 = vmatmul.mubr.bf16.gmra.mrb[0].mxu0 %v2450
    %v2486 = vpop.f32.mrb[0].mxu0
    %v2487 = vadd.f32 0.0, %v2486
    %v2488 = vpop.f32.mrb[0].mxu0
    %v2489 = vpop.f32.mrb[0].mxu0
    %v2490 = vadd.f32 0.0, %v2489
    %v2491 = vpop.f32.mrb[0].mxu0
    %2492 = vdwg.mxu0
    %v2493 = vmul.f32 %v2443, %v236
    %v2494 = vmul.f32 %v2446, %v236
    %v2495 = vmul.f32 %v2487, %v236
    %v2496 = vmul.f32 %v2490, %v236
    %v2497 = vadd.f32 %v2261, %v2493
    %v2498 = vadd.f32 %v2262, %v2494
    %v2499 = vadd.f32 %v2263, %v2495
    %v2500 = vadd.f32 %v2264, %v2496
    %v2501 = vmul.f32 %v2015, %v241
    %v2502 = vmul.f32 %v2016, %v241
    %v2503 = vmul.f32 %v2017, %v241
    %v2504 = vmul.f32 %v2018, %v241
    %v2505 = vpack.c.bf16 %v2502, %v2501
    %v2506 = vpack.c.bf16 %v2504, %v2503
    %v2508 = vsel %vm262, %v2505, 0
    %2510 = vmatprep.subr.bf16.mxu0 0
    %2511 = vmatpush1.bf16.xpose.msra.mxu0 %v2033
    %2512 = vmatprep.subr.bf16.mxu0 0
    %2513 = vmatpush1.bf16.xpose.msra.mxu0 0
    %2514 = vmatprep.subr.bf16.mxu0 0
    %2515 = vmatpush1.bf16.xpose.msra.mxu0 0
    %2516 = vmatprep.subr.bf16.mxu0 0
    %2517 = vmatpush1.bf16.xpose.msra.mxu0 0
    %2518 = vmatprep.subr.bf16.mxu0 0
    %2519 = vmatpush1.bf16.xpose.msra.mxu0 0
    %2520 = vmatprep.subr.bf16.mxu0 0
    %2521 = vmatpush1.bf16.xpose.msra.mxu0 0
    %2522 = vmatprep.subr.bf16.mxu0 0
    %2523 = vmatpush1.bf16.xpose.msra.mxu0 0
    %2524 = vmatprep.subr.bf16.mxu0 0
    %2525 = vmatpush1.bf16.xpose.msra.mxu0 0
    %2526 = vmatprep.subr.bf16.mxu0 0
    %2527 = vmatpush1.bf16.xpose.msra.mxu0 0
    %2528 = vmatprep.subr.bf16.mxu0 0
    %2529 = vmatpush1.bf16.xpose.msra.mxu0 0
    %2530 = vmatprep.subr.bf16.mxu0 0
    %2531 = vmatpush1.bf16.xpose.msra.mxu0 0
    %2532 = vmatprep.subr.bf16.mxu0 0
    %2533 = vmatpush1.bf16.xpose.msra.mxu0 0
    %2534 = vmatprep.subr.bf16.mxu0 0
    %2535 = vmatpush1.bf16.xpose.msra.mxu0 0
    %2536 = vmatprep.subr.bf16.mxu0 0
    %2537 = vmatpush1.bf16.xpose.msra.mxu0 0
    %2538 = vmatprep.subr.bf16.mxu0 0
    %2539 = vmatpush1.bf16.xpose.msra.mxu0 0
    %2540 = vmatprep.subr.bf16.mxu0 0
    %2541 = vmatpush1.bf16.xpose.msra.mxu0 0
    %2542 = vmatprep.mubr.bf16.mxu0 0
    %2543 = vmatmul.mubr.bf16.gmra.mrb[0].mxu0 %v2508
    %v2544 = vpop.f32.mrb[0].mxu0
    %v2545 = vadd.f32 0.0, %v2544
    %v2546 = vpop.f32.mrb[0].mxu0
    %v2547 = vpop.f32.mrb[0].mxu0
    %v2548 = vadd.f32 0.0, %v2547
    %v2549 = vpop.f32.mrb[0].mxu0
    %2550 = vdwg.mxu0
    %v2552 = vsel %vm262, %v2506, 0
    %2554 = vmatprep.subr.bf16.mxu0 0
    %2555 = vmatpush1.bf16.xpose.msra.mxu0 %v2080
    %2556 = vmatprep.subr.bf16.mxu0 0
    %2557 = vmatpush1.bf16.xpose.msra.mxu0 0
    %2558 = vmatprep.subr.bf16.mxu0 0
    %2559 = vmatpush1.bf16.xpose.msra.mxu0 0
    %2560 = vmatprep.subr.bf16.mxu0 0
    %2561 = vmatpush1.bf16.xpose.msra.mxu0 0
    %2562 = vmatprep.subr.bf16.mxu0 0
    %2563 = vmatpush1.bf16.xpose.msra.mxu0 0
    %2564 = vmatprep.subr.bf16.mxu0 0
    %2565 = vmatpush1.bf16.xpose.msra.mxu0 0
    %2566 = vmatprep.subr.bf16.mxu0 0
    %2567 = vmatpush1.bf16.xpose.msra.mxu0 0
    %2568 = vmatprep.subr.bf16.mxu0 0
    %2569 = vmatpush1.bf16.xpose.msra.mxu0 0
    %2570 = vmatprep.subr.bf16.mxu0 0
    %2571 = vmatpush1.bf16.xpose.msra.mxu0 0
    %2572 = vmatprep.subr.bf16.mxu0 0
    %2573 = vmatpush1.bf16.xpose.msra.mxu0 0
    %2574 = vmatprep.subr.bf16.mxu0 0
    %2575 = vmatpush1.bf16.xpose.msra.mxu0 0
    %2576 = vmatprep.subr.bf16.mxu0 0
    %2577 = vmatpush1.bf16.xpose.msra.mxu0 0
    %2578 = vmatprep.subr.bf16.mxu0 0
    %2579 = vmatpush1.bf16.xpose.msra.mxu0 0
    %2580 = vmatprep.subr.bf16.mxu0 0
    %2581 = vmatpush1.bf16.xpose.msra.mxu0 0
    %2582 = vmatprep.subr.bf16.mxu0 0
    %2583 = vmatpush1.bf16.xpose.msra.mxu0 0
    %2584 = vmatprep.subr.bf16.mxu0 0
    %2585 = vmatpush1.bf16.xpose.msra.mxu0 0
    %2586 = vmatprep.mubr.bf16.mxu0 0
    %2587 = vmatmul.mubr.bf16.gmra.mrb[0].mxu0 %v2552
    %v2588 = vpop.f32.mrb[0].mxu0
    %v2589 = vadd.f32 0.0, %v2588
    %v2590 = vpop.f32.mrb[0].mxu0
    %v2591 = vpop.f32.mrb[0].mxu0
    %v2592 = vadd.f32 0.0, %v2591
    %v2593 = vpop.f32.mrb[0].mxu0
    %2594 = vdwg.mxu0
    %v2595 = vsel %vm554, %v2545, -inf
    %2596 = vmax.xlane.f32.xlu0 %v2595
    %v2597 = vpop.xlane.xlu0 %2596
    %v2598 = vsel %vm554, %v2548, -inf
    %2599 = vmax.xlane.f32.xlu0 %v2598
    %v2600 = vpop.xlane.xlu0 %2599
    %v2601 = vsel %vm554, %v2589, -inf
    %2602 = vmax.xlane.f32.xlu0 %v2601
    %v2603 = vpop.xlane.xlu0 %2602
    %v2604 = vsel %vm554, %v2592, -inf
    %2605 = vmax.xlane.f32.xlu0 %v2604
    %v2606 = vpop.xlane.xlu0 %2605
    %v2607 = vsub.f32 %v2545, %v2597
    %v2608 = vsub.f32 %v2548, %v2600
    %v2609 = vsub.f32 %v2589, %v2603
    %v2610 = vsub.f32 %v2592, %v2606
    %v2611 = vmul.f32 %v2607, 1.442695
    %v2612 = vpow.pop %v2611
    %v2613 = vmul.f32 %v2608, 1.442695
    %v2614 = vpow.pop %v2613
    %v2615 = vmul.f32 %v2609, 1.442695
    %v2616 = vpow.pop %v2615
    %v2617 = vmul.f32 %v2610, 1.442695
    %v2618 = vpow.pop %v2617
    %v2619 = vsel %vm554, %v2612, 0.0
    %2620 = vadd.xlane.f32.xlu0 %v2619
    %v2621 = vpop.xlane.xlu0 %2620
    %v2622 = vsel %vm554, %v2614, 0.0
    %2623 = vadd.xlane.f32.xlu0 %v2622
    %v2624 = vpop.xlane.xlu0 %2623
    %v2625 = vsel %vm554, %v2616, 0.0
    %2626 = vadd.xlane.f32.xlu0 %v2625
    %v2627 = vpop.xlane.xlu0 %2626
    %v2628 = vsel %vm554, %v2618, 0.0
    %2629 = vadd.xlane.f32.xlu0 %v2628
    %v2630 = vpop.xlane.xlu0 %2629
    %v2631 = vrcp.pop %v2621
    %v2632 = vmul.f32 %v2612, %v2631
    %v2633 = vrcp.pop %v2624
    %v2634 = vmul.f32 %v2614, %v2633
    %v2635 = vrcp.pop %v2627
    %v2636 = vmul.f32 %v2616, %v2635
    %v2637 = vrcp.pop %v2630
    %v2638 = vmul.f32 %v2618, %v2637
    %v2639 = vpack.c.bf16 %v2634, %v2632
    %v2640 = vpack.c.bf16 %v2638, %v2636
    %v2642 = vsel %vm554, %v2639, 0
    %2644 = vmatprep.subr.bf16.mxu0 0
    %2645 = vmatpush1.bf16.msra.mxu0 %v2021
    %2646 = vmatprep.subr.bf16.mxu0 0
    %2647 = vmatpush1.bf16.msra.mxu0 0
    %2648 = vmatprep.subr.bf16.mxu0 0
    %2649 = vmatpush1.bf16.msra.mxu0 0
    %2650 = vmatprep.subr.bf16.mxu0 0
    %2651 = vmatpush1.bf16.msra.mxu0 0
    %2652 = vmatprep.subr.bf16.mxu0 0
    %2653 = vmatpush1.bf16.msra.mxu0 0
    %2654 = vmatprep.subr.bf16.mxu0 0
    %2655 = vmatpush1.bf16.msra.mxu0 0
    %2656 = vmatprep.subr.bf16.mxu0 0
    %2657 = vmatpush1.bf16.msra.mxu0 0
    %2658 = vmatprep.subr.bf16.mxu0 0
    %2659 = vmatpush1.bf16.msra.mxu0 0
    %2660 = vmatprep.subr.bf16.mxu0 0
    %2661 = vmatpush1.bf16.msra.mxu0 0
    %2662 = vmatprep.subr.bf16.mxu0 0
    %2663 = vmatpush1.bf16.msra.mxu0 0
    %2664 = vmatprep.subr.bf16.mxu0 0
    %2665 = vmatpush1.bf16.msra.mxu0 0
    %2666 = vmatprep.subr.bf16.mxu0 0
    %2667 = vmatpush1.bf16.msra.mxu0 0
    %2668 = vmatprep.subr.bf16.mxu0 0
    %2669 = vmatpush1.bf16.msra.mxu0 0
    %2670 = vmatprep.subr.bf16.mxu0 0
    %2671 = vmatpush1.bf16.msra.mxu0 0
    %2672 = vmatprep.subr.bf16.mxu0 0
    %2673 = vmatpush1.bf16.msra.mxu0 0
    %2674 = vmatprep.subr.bf16.mxu0 0
    %2675 = vmatpush1.bf16.msra.mxu0 0
    %2676 = vmatprep.mubr.bf16.mxu0 0
    %2677 = vmatmul.mubr.bf16.gmra.mrb[0].mxu0 %v2642
    %v2678 = vpop.f32.mrb[0].mxu0
    %v2679 = vadd.f32 0.0, %v2678
    %v2680 = vpop.f32.mrb[0].mxu0
    %v2681 = vpop.f32.mrb[0].mxu0
    %v2682 = vadd.f32 0.0, %v2681
    %v2683 = vpop.f32.mrb[0].mxu0
    %2684 = vdwg.mxu0
    %v2686 = vsel %vm554, %v2640, 0
    %2688 = vmatprep.subr.bf16.mxu0 0
    %2689 = vmatpush1.bf16.msra.mxu0 %v2022
    %2690 = vmatprep.subr.bf16.mxu0 0
    %2691 = vmatpush1.bf16.msra.mxu0 0
    %2692 = vmatprep.subr.bf16.mxu0 0
    %2693 = vmatpush1.bf16.msra.mxu0 0
    %2694 = vmatprep.subr.bf16.mxu0 0
    %2695 = vmatpush1.bf16.msra.mxu0 0
    %2696 = vmatprep.subr.bf16.mxu0 0
    %2697 = vmatpush1.bf16.msra.mxu0 0
    %2698 = vmatprep.subr.bf16.mxu0 0
    %2699 = vmatpush1.bf16.msra.mxu0 0
    %2700 = vmatprep.subr.bf16.mxu0 0
    %2701 = vmatpush1.bf16.msra.mxu0 0
    %2702 = vmatprep.subr.bf16.mxu0 0
    %2703 = vmatpush1.bf16.msra.mxu0 0
    %2704 = vmatprep.subr.bf16.mxu0 0
    %2705 = vmatpush1.bf16.msra.mxu0 0
    %2706 = vmatprep.subr.bf16.mxu0 0
    %2707 = vmatpush1.bf16.msra.mxu0 0
    %2708 = vmatprep.subr.bf16.mxu0 0
    %2709 = vmatpush1.bf16.msra.mxu0 0
    %2710 = vmatprep.subr.bf16.mxu0 0
    %2711 = vmatpush1.bf16.msra.mxu0 0
    %2712 = vmatprep.subr.bf16.mxu0 0
    %2713 = vmatpush1.bf16.msra.mxu0 0
    %2714 = vmatprep.subr.bf16.mxu0 0
    %2715 = vmatpush1.bf16.msra.mxu0 0
    %2716 = vmatprep.subr.bf16.mxu0 0
    %2717 = vmatpush1.bf16.msra.mxu0 0
    %2718 = vmatprep.subr.bf16.mxu0 0
    %2719 = vmatpush1.bf16.msra.mxu0 0
    %2720 = vmatprep.mubr.bf16.mxu0 0
    %2721 = vmatmul.mubr.bf16.gmra.mrb[0].mxu0 %v2686
    %v2722 = vpop.f32.mrb[0].mxu0
    %v2723 = vadd.f32 0.0, %v2722
    %v2724 = vpop.f32.mrb[0].mxu0
    %v2725 = vpop.f32.mrb[0].mxu0
    %v2726 = vadd.f32 0.0, %v2725
    %v2727 = vpop.f32.mrb[0].mxu0
    %2728 = vdwg.mxu0
    %v2729 = vmul.f32 %v2679, %v241
    %v2730 = vmul.f32 %v2682, %v241
    %v2731 = vmul.f32 %v2723, %v241
    %v2732 = vmul.f32 %v2726, %v241
    %v2733 = vadd.f32 %v2497, %v2729
    %v2734 = vadd.f32 %v2498, %v2730
    %v2735 = vadd.f32 %v2499, %v2731
    %v2736 = vadd.f32 %v2500, %v2732
    %v2737 = vmul.f32 %v2015, %v246
    %v2738 = vmul.f32 %v2016, %v246
    %v2739 = vmul.f32 %v2017, %v246
    %v2740 = vmul.f32 %v2018, %v246
    %v2741 = vpack.c.bf16 %v2738, %v2737
    %v2742 = vpack.c.bf16 %v2740, %v2739
    %v2744 = vsel %vm262, %v2741, 0
    %2746 = vmatprep.subr.bf16.mxu0 0
    %2747 = vmatpush1.bf16.xpose.msra.mxu0 %v2033
    %2748 = vmatprep.subr.bf16.mxu0 0
    %2749 = vmatpush1.bf16.xpose.msra.mxu0 0
    %2750 = vmatprep.subr.bf16.mxu0 0
    %2751 = vmatpush1.bf16.xpose.msra.mxu0 0
    %2752 = vmatprep.subr.bf16.mxu0 0
    %2753 = vmatpush1.bf16.xpose.msra.mxu0 0
    %2754 = vmatprep.subr.bf16.mxu0 0
    %2755 = vmatpush1.bf16.xpose.msra.mxu0 0
    %2756 = vmatprep.subr.bf16.mxu0 0
    %2757 = vmatpush1.bf16.xpose.msra.mxu0 0
    %2758 = vmatprep.subr.bf16.mxu0 0
    %2759 = vmatpush1.bf16.xpose.msra.mxu0 0
    %2760 = vmatprep.subr.bf16.mxu0 0
    %2761 = vmatpush1.bf16.xpose.msra.mxu0 0
    %2762 = vmatprep.subr.bf16.mxu0 0
    %2763 = vmatpush1.bf16.xpose.msra.mxu0 0
    %2764 = vmatprep.subr.bf16.mxu0 0
    %2765 = vmatpush1.bf16.xpose.msra.mxu0 0
    %2766 = vmatprep.subr.bf16.mxu0 0
    %2767 = vmatpush1.bf16.xpose.msra.mxu0 0
    %2768 = vmatprep.subr.bf16.mxu0 0
    %2769 = vmatpush1.bf16.xpose.msra.mxu0 0
    %2770 = vmatprep.subr.bf16.mxu0 0
    %2771 = vmatpush1.bf16.xpose.msra.mxu0 0
    %2772 = vmatprep.subr.bf16.mxu0 0
    %2773 = vmatpush1.bf16.xpose.msra.mxu0 0
    %2774 = vmatprep.subr.bf16.mxu0 0
    %2775 = vmatpush1.bf16.xpose.msra.mxu0 0
    %2776 = vmatprep.subr.bf16.mxu0 0
    %2777 = vmatpush1.bf16.xpose.msra.mxu0 0
    %2778 = vmatprep.mubr.bf16.mxu0 0
    %2779 = vmatmul.mubr.bf16.gmra.mrb[0].mxu0 %v2744
    %v2780 = vpop.f32.mrb[0].mxu0
    %v2781 = vadd.f32 0.0, %v2780
    %v2782 = vpop.f32.mrb[0].mxu0
    %v2783 = vpop.f32.mrb[0].mxu0
    %v2784 = vadd.f32 0.0, %v2783
    %v2785 = vpop.f32.mrb[0].mxu0
    %2786 = vdwg.mxu0
    %v2788 = vsel %vm262, %v2742, 0
    %2790 = vmatprep.subr.bf16.mxu0 0
    %2791 = vmatpush1.bf16.xpose.msra.mxu0 %v2080
    %2792 = vmatprep.subr.bf16.mxu0 0
    %2793 = vmatpush1.bf16.xpose.msra.mxu0 0
    %2794 = vmatprep.subr.bf16.mxu0 0
    %2795 = vmatpush1.bf16.xpose.msra.mxu0 0
    %2796 = vmatprep.subr.bf16.mxu0 0
    %2797 = vmatpush1.bf16.xpose.msra.mxu0 0
    %2798 = vmatprep.subr.bf16.mxu0 0
    %2799 = vmatpush1.bf16.xpose.msra.mxu0 0
    %2800 = vmatprep.subr.bf16.mxu0 0
    %2801 = vmatpush1.bf16.xpose.msra.mxu0 0
    %2802 = vmatprep.subr.bf16.mxu0 0
    %2803 = vmatpush1.bf16.xpose.msra.mxu0 0
    %2804 = vmatprep.subr.bf16.mxu0 0
    %2805 = vmatpush1.bf16.xpose.msra.mxu0 0
    %2806 = vmatprep.subr.bf16.mxu0 0
    %2807 = vmatpush1.bf16.xpose.msra.mxu0 0
    %2808 = vmatprep.subr.bf16.mxu0 0
    %2809 = vmatpush1.bf16.xpose.msra.mxu0 0
    %2810 = vmatprep.subr.bf16.mxu0 0
    %2811 = vmatpush1.bf16.xpose.msra.mxu0 0
    %2812 = vmatprep.subr.bf16.mxu0 0
    %2813 = vmatpush1.bf16.xpose.msra.mxu0 0
    %2814 = vmatprep.subr.bf16.mxu0 0
    %2815 = vmatpush1.bf16.xpose.msra.mxu0 0
    %2816 = vmatprep.subr.bf16.mxu0 0
    %2817 = vmatpush1.bf16.xpose.msra.mxu0 0
    %2818 = vmatprep.subr.bf16.mxu0 0
    %2819 = vmatpush1.bf16.xpose.msra.mxu0 0
    %2820 = vmatprep.subr.bf16.mxu0 0
    %2821 = vmatpush1.bf16.xpose.msra.mxu0 0
    %2822 = vmatprep.mubr.bf16.mxu0 0
    %2823 = vmatmul.mubr.bf16.gmra.mrb[0].mxu0 %v2788
    %v2824 = vpop.f32.mrb[0].mxu0
    %v2825 = vadd.f32 0.0, %v2824
    %v2826 = vpop.f32.mrb[0].mxu0
    %v2827 = vpop.f32.mrb[0].mxu0
    %v2828 = vadd.f32 0.0, %v2827
    %v2829 = vpop.f32.mrb[0].mxu0
    %2830 = vdwg.mxu0
    %v2831 = vsel %vm554, %v2781, -inf
    %2832 = vmax.xlane.f32.xlu0 %v2831
    %v2833 = vpop.xlane.xlu0 %2832
    %v2834 = vsel %vm554, %v2784, -inf
    %2835 = vmax.xlane.f32.xlu0 %v2834
    %v2836 = vpop.xlane.xlu0 %2835
    %v2837 = vsel %vm554, %v2825, -inf
    %2838 = vmax.xlane.f32.xlu0 %v2837
    %v2839 = vpop.xlane.xlu0 %2838
    %v2840 = vsel %vm554, %v2828, -inf
    %2841 = vmax.xlane.f32.xlu0 %v2840
    %v2842 = vpop.xlane.xlu0 %2841
    %v2843 = vsub.f32 %v2781, %v2833
    %v2844 = vsub.f32 %v2784, %v2836
    %v2845 = vsub.f32 %v2825, %v2839
    %v2846 = vsub.f32 %v2828, %v2842
    %v2847 = vmul.f32 %v2843, 1.442695
    %v2848 = vpow.pop %v2847
    %v2849 = vmul.f32 %v2844, 1.442695
    %v2850 = vpow.pop %v2849
    %v2851 = vmul.f32 %v2845, 1.442695
    %v2852 = vpow.pop %v2851
    %v2853 = vmul.f32 %v2846, 1.442695
    %v2854 = vpow.pop %v2853
    %v2855 = vsel %vm554, %v2848, 0.0
    %2856 = vadd.xlane.f32.xlu0 %v2855
    %v2857 = vpop.xlane.xlu0 %2856
    %v2858 = vsel %vm554, %v2850, 0.0
    %2859 = vadd.xlane.f32.xlu0 %v2858
    %v2860 = vpop.xlane.xlu0 %2859
    %v2861 = vsel %vm554, %v2852, 0.0
    %2862 = vadd.xlane.f32.xlu0 %v2861
    %v2863 = vpop.xlane.xlu0 %2862
    %v2864 = vsel %vm554, %v2854, 0.0
    %2865 = vadd.xlane.f32.xlu0 %v2864
    %v2866 = vpop.xlane.xlu0 %2865
    %v2867 = vrcp.pop %v2857
    %v2868 = vmul.f32 %v2848, %v2867
    %v2869 = vrcp.pop %v2860
    %v2870 = vmul.f32 %v2850, %v2869
    %v2871 = vrcp.pop %v2863
    %v2872 = vmul.f32 %v2852, %v2871
    %v2873 = vrcp.pop %v2866
    %v2874 = vmul.f32 %v2854, %v2873
    %v2875 = vpack.c.bf16 %v2870, %v2868
    %v2876 = vpack.c.bf16 %v2874, %v2872
    %v2878 = vsel %vm554, %v2875, 0
    %2880 = vmatprep.subr.bf16.mxu0 0
    %2881 = vmatpush1.bf16.msra.mxu0 %v2021
    %2882 = vmatprep.subr.bf16.mxu0 0
    %2883 = vmatpush1.bf16.msra.mxu0 0
    %2884 = vmatprep.subr.bf16.mxu0 0
    %2885 = vmatpush1.bf16.msra.mxu0 0
    %2886 = vmatprep.subr.bf16.mxu0 0
    %2887 = vmatpush1.bf16.msra.mxu0 0
    %2888 = vmatprep.subr.bf16.mxu0 0
    %2889 = vmatpush1.bf16.msra.mxu0 0
    %2890 = vmatprep.subr.bf16.mxu0 0
    %2891 = vmatpush1.bf16.msra.mxu0 0
    %2892 = vmatprep.subr.bf16.mxu0 0
    %2893 = vmatpush1.bf16.msra.mxu0 0
    %2894 = vmatprep.subr.bf16.mxu0 0
    %2895 = vmatpush1.bf16.msra.mxu0 0
    %2896 = vmatprep.subr.bf16.mxu0 0
    %2897 = vmatpush1.bf16.msra.mxu0 0
    %2898 = vmatprep.subr.bf16.mxu0 0
    %2899 = vmatpush1.bf16.msra.mxu0 0
    %2900 = vmatprep.subr.bf16.mxu0 0
    %2901 = vmatpush1.bf16.msra.mxu0 0
    %2902 = vmatprep.subr.bf16.mxu0 0
    %2903 = vmatpush1.bf16.msra.mxu0 0
    %2904 = vmatprep.subr.bf16.mxu0 0
    %2905 = vmatpush1.bf16.msra.mxu0 0
    %2906 = vmatprep.subr.bf16.mxu0 0
    %2907 = vmatpush1.bf16.msra.mxu0 0
    %2908 = vmatprep.subr.bf16.mxu0 0
    %2909 = vmatpush1.bf16.msra.mxu0 0
    %2910 = vmatprep.subr.bf16.mxu0 0
    %2911 = vmatpush1.bf16.msra.mxu0 0
    %2912 = vmatprep.mubr.bf16.mxu0 0
    %2913 = vmatmul.mubr.bf16.gmra.mrb[0].mxu0 %v2878
    %v2914 = vpop.f32.mrb[0].mxu0
    %v2915 = vadd.f32 0.0, %v2914
    %v2916 = vpop.f32.mrb[0].mxu0
    %v2917 = vpop.f32.mrb[0].mxu0
    %v2918 = vadd.f32 0.0, %v2917
    %v2919 = vpop.f32.mrb[0].mxu0
    %2920 = vdwg.mxu0
    %v2922 = vsel %vm554, %v2876, 0
    %2924 = vmatprep.subr.bf16.mxu0 0
    %2925 = vmatpush1.bf16.msra.mxu0 %v2022
    %2926 = vmatprep.subr.bf16.mxu0 0
    %2927 = vmatpush1.bf16.msra.mxu0 0
    %2928 = vmatprep.subr.bf16.mxu0 0
    %2929 = vmatpush1.bf16.msra.mxu0 0
    %2930 = vmatprep.subr.bf16.mxu0 0
    %2931 = vmatpush1.bf16.msra.mxu0 0
    %2932 = vmatprep.subr.bf16.mxu0 0
    %2933 = vmatpush1.bf16.msra.mxu0 0
    %2934 = vmatprep.subr.bf16.mxu0 0
    %2935 = vmatpush1.bf16.msra.mxu0 0
    %2936 = vmatprep.subr.bf16.mxu0 0
    %2937 = vmatpush1.bf16.msra.mxu0 0
    %2938 = vmatprep.subr.bf16.mxu0 0
    %2939 = vmatpush1.bf16.msra.mxu0 0
    %2940 = vmatprep.subr.bf16.mxu0 0
    %2941 = vmatpush1.bf16.msra.mxu0 0
    %2942 = vmatprep.subr.bf16.mxu0 0
    %2943 = vmatpush1.bf16.msra.mxu0 0
    %2944 = vmatprep.subr.bf16.mxu0 0
    %2945 = vmatpush1.bf16.msra.mxu0 0
    %2946 = vmatprep.subr.bf16.mxu0 0
    %2947 = vmatpush1.bf16.msra.mxu0 0
    %2948 = vmatprep.subr.bf16.mxu0 0
    %2949 = vmatpush1.bf16.msra.mxu0 0
    %2950 = vmatprep.subr.bf16.mxu0 0
    %2951 = vmatpush1.bf16.msra.mxu0 0
    %2952 = vmatprep.subr.bf16.mxu0 0
    %2953 = vmatpush1.bf16.msra.mxu0 0
    %2954 = vmatprep.subr.bf16.mxu0 0
    %2955 = vmatpush1.bf16.msra.mxu0 0
    %2956 = vmatprep.mubr.bf16.mxu0 0
    %2957 = vmatmul.mubr.bf16.gmra.mrb[0].mxu0 %v2922
    %v2958 = vpop.f32.mrb[0].mxu0
    %v2959 = vadd.f32 0.0, %v2958
    %v2960 = vpop.f32.mrb[0].mxu0
    %v2961 = vpop.f32.mrb[0].mxu0
    %v2962 = vadd.f32 0.0, %v2961
    %v2963 = vpop.f32.mrb[0].mxu0
    %2964 = vdwg.mxu0
    %v2965 = vmul.f32 %v2915, %v246
    %v2966 = vmul.f32 %v2918, %v246
    %v2967 = vmul.f32 %v2959, %v246
    %v2968 = vmul.f32 %v2962, %v246
    %v2969 = vadd.f32 %v2733, %v2965
    %v2970 = vadd.f32 %v2734, %v2966
    %v2971 = vadd.f32 %v2735, %v2967
    %v2972 = vadd.f32 %v2736, %v2968
    %v2973 = vpack.c.bf16 %v2970, %v2969
    %v2974 = vpack.c.bf16 %v2972, %v2971
    %s2975 = scalar_lea.vmem %s4, 32
    %v2976 = vld [vmem:[%s2975] sm:$0xff]
    %v2977 = vld [vmem:[%s2975 + $0x8] sm:$0xff]
    %v2978 = vld [vmem:[%s2975 + $0x10] sm:$0xff]
    %v2979 = vld [vmem:[%s2975 + $0x18] sm:$0xff]
    %v2980 = vpack.c.bf16 %v2977, %v2976
    %v2981 = vpack.c.bf16 %v2979, %v2978
    %s2982 = scalar_lea.vmem [#allocation3], 1
    %v2983 = vld [vmem:[%s2982] sm:$0x1]
    %v2985 = vlaneseq
    %v2986 = vshrl.u32 %v2985, 7
    %v2987 = vsub.s32 0, %v2986
    %v2988 = vrot.slane %v2983, %v2987
    %v2991 = vsel %vm262, %v2973, 0
    %v2994 = vsel %vm262, %v2974, 0
    %2996 = vmatprep.subr.bf16.mxu0 0
    %2997 = vmatpush1.bf16.msra.mxu0 %v2980
    %2998 = vmatprep.subr.bf16.mxu0 0
    %2999 = vmatpush1.bf16.msra.mxu0 %v2981
    %3000 = vmatprep.subr.bf16.mxu0 0
    %3001 = vmatpush1.bf16.msra.mxu0 0
    %3002 = vmatprep.subr.bf16.mxu0 0
    %3003 = vmatpush1.bf16.msra.mxu0 0
    %3004 = vmatprep.subr.bf16.mxu0 0
    %3005 = vmatpush1.bf16.msra.mxu0 0
    %3006 = vmatprep.subr.bf16.mxu0 0
    %3007 = vmatpush1.bf16.msra.mxu0 0
    %3008 = vmatprep.subr.bf16.mxu0 0
    %3009 = vmatpush1.bf16.msra.mxu0 0
    %3010 = vmatprep.subr.bf16.mxu0 0
    %3011 = vmatpush1.bf16.msra.mxu0 0
    %3012 = vmatprep.subr.bf16.mxu0 0
    %3013 = vmatpush1.bf16.msra.mxu0 0
    %3014 = vmatprep.subr.bf16.mxu0 0
    %3015 = vmatpush1.bf16.msra.mxu0 0
    %3016 = vmatprep.subr.bf16.mxu0 0
    %3017 = vmatpush1.bf16.msra.mxu0 0
    %3018 = vmatprep.subr.bf16.mxu0 0
    %3019 = vmatpush1.bf16.msra.mxu0 0
    %3020 = vmatprep.subr.bf16.mxu0 0
    %3021 = vmatpush1.bf16.msra.mxu0 0
    %3022 = vmatprep.subr.bf16.mxu0 0
    %3023 = vmatpush1.bf16.msra.mxu0 0
    %3024 = vmatprep.subr.bf16.mxu0 0
    %3025 = vmatpush1.bf16.msra.mxu0 0
    %3026 = vmatprep.subr.bf16.mxu0 0
    %3027 = vmatpush1.bf16.msra.mxu0 0
    %3028 = vmatprep.mubr.bf16.mxu0 0
    %3029 = vmatmul.mubr.bf16.gmra.mrb[0].mxu0 %v2991
    %v3030 = vpop.f32.mrb[0].mxu0
    %v3031 = vadd.f32 %v2988, %v3030
    %v3032 = vpop.f32.mrb[0].mxu0
    %v3033 = vpop.f32.mrb[0].mxu0
    %v3034 = vadd.f32 %v2988, %v3033
    %v3035 = vpop.f32.mrb[0].mxu0
    %3036 = vmatprep.mubr.bf16.mxu0 0
    %3037 = vmatmul.mubr.bf16.gmra.mrb[0].mxu0 %v2994
    %v3038 = vpop.f32.mrb[0].mxu0
    %v3039 = vadd.f32 %v2988, %v3038
    %v3040 = vpop.f32.mrb[0].mxu0
    %v3041 = vpop.f32.mrb[0].mxu0
    %v3042 = vadd.f32 %v2988, %v3041
    %v3043 = vpop.f32.mrb[0].mxu0
    %3044 = vdwg.mxu0
    %v3045 = vadd.f32 %v1811, %v3031
    %v3046 = vadd.f32 %v1812, %v3034
    %v3047 = vadd.f32 %v1813, %v3039
    %v3048 = vadd.f32 %v1814, %v3042
    %s3049 = scalar_lea.vmem [#allocation5], 1
    %v3050 = vld [vmem:[%s3049] sm:$0x1]
    %s3051 = scalar_lea.vmem [#allocation7], 1
    %v3052 = vld [vmem:[%s3051] sm:$0x1]
    %v3053 = vsel %vm262, %v3045, 0.0
    %3054 = vadd.xlane.f32.xlu0 %v3053
    %v3055 = vpop.xlane.xlu0 %3054
    %v3056 = vsel %vm262, %v3046, 0.0
    %3057 = vadd.xlane.f32.xlu0 %v3056
    %v3058 = vpop.xlane.xlu0 %3057
    %v3059 = vsel %vm262, %v3047, 0.0
    %3060 = vadd.xlane.f32.xlu0 %v3059
    %v3061 = vpop.xlane.xlu0 %3060
    %v3062 = vsel %vm262, %v3048, 0.0
    %3063 = vadd.xlane.f32.xlu0 %v3062
    %v3064 = vpop.xlane.xlu0 %3063
    %v3065 = vmul.f32 %v3055, %v1493
    %v3066 = vmul.f32 %v3058, %v1493
    %v3067 = vmul.f32 %v3061, %v1493
    %v3068 = vmul.f32 %v3064, %v1493
    %v3069 = vsub.f32 %v3045, %v3065
    %v3070 = vsub.f32 %v3046, %v3066
    %v3071 = vsub.f32 %v3047, %v3067
    %v3072 = vsub.f32 %v3048, %v3068
    %v3073 = vmul.f32 %v3069, %v3069
    %v3074 = vmul.f32 %v3070, %v3070
    %v3075 = vmul.f32 %v3071, %v3071
    %v3076 = vmul.f32 %v3072, %v3072
    %v3077 = vsel %vm262, %v3073, 0.0
    %3078 = vadd.xlane.f32.xlu0 %v3077
    %v3079 = vpop.xlane.xlu0 %3078
    %v3080 = vsel %vm262, %v3074, 0.0
    %3081 = vadd.xlane.f32.xlu0 %v3080
    %v3082 = vpop.xlane.xlu0 %3081
    %v3083 = vsel %vm262, %v3075, 0.0
    %3084 = vadd.xlane.f32.xlu0 %v3083
    %v3085 = vpop.xlane.xlu0 %3084
    %v3086 = vsel %vm262, %v3076, 0.0
    %3087 = vadd.xlane.f32.xlu0 %v3086
    %v3088 = vpop.xlane.xlu0 %3087
    %v3089 = vmul.f32 %v3079, %v1493
    %v3090 = vmul.f32 %v3082, %v1493
    %v3091 = vmul.f32 %v3085, %v1493
    %v3092 = vmul.f32 %v3088, %v1493
    %v3093 = vadd.f32 %v3089, 1e-05
    %v3094 = vadd.f32 %v3090, 1e-05
    %v3095 = vadd.f32 %v3091, 1e-05
    %v3096 = vadd.f32 %v3092, 1e-05
    %v3097 = vrsqrt.pop %v3093
    %v3098 = vrsqrt.pop %v3094
    %v3099 = vrsqrt.pop %v3095
    %v3100 = vrsqrt.pop %v3096
    %v3101 = vmul.f32 %v3069, %v3097
    %v3102 = vmul.f32 %v3070, %v3098
    %v3103 = vmul.f32 %v3071, %v3099
    %v3104 = vmul.f32 %v3072, %v3100
    %v3106 = vlaneseq
    %v3107 = vshrl.u32 %v3106, 7
    %v3108 = vsub.s32 0, %v3107
    %v3109 = vrot.slane %v3050, %v3108
    %v3111 = vmul.f32 %v3101, %v3109
    %v3112 = vmul.f32 %v3102, %v3109
    %v3113 = vmul.f32 %v3103, %v3109
    %v3114 = vmul.f32 %v3104, %v3109
    %v3116 = vlaneseq
    %v3117 = vshrl.u32 %v3116, 7
    %v3118 = vsub.s32 0, %v3117
    %v3119 = vrot.slane %v3052, %v3118
    %v3121 = vadd.f32 %v3111, %v3119
    %v3122 = vadd.f32 %v3112, %v3119
    %v3123 = vadd.f32 %v3113, %v3119
    %v3124 = vadd.f32 %v3114, %v3119
    %v3125 = vpack.c.bf16 %v3122, %v3121
    %v3126 = vpack.c.bf16 %v3124, %v3123
    %s3127 = scalar_lea.vmem %s8, 32
    %v3128 = vld [vmem:[%s3127] sm:$0xff]
    %v3129 = vld [vmem:[%s3127 + $0x8] sm:$0xff]
    %v3130 = vld [vmem:[%s3127 + $0x10] sm:$0xff]
    %v3131 = vld [vmem:[%s3127 + $0x18] sm:$0xff]
    %v3132 = vpack.c.bf16 %v3129, %v3128
    %v3133 = vpack.c.bf16 %v3131, %v3130
    %s3134 = scalar_lea.vmem [#allocation8], 1
    %v3135 = vld [vmem:[%s3134] sm:$0x1]
    %v3137 = vlaneseq
    %v3138 = vshrl.u32 %v3137, 7
    %v3139 = vsub.s32 0, %v3138
    %v3140 = vrot.slane %v3135, %v3139
    %v3143 = vsel %vm262, %v3125, 0
    %v3146 = vsel %vm262, %v3126, 0
    %3148 = vmatprep.subr.bf16.mxu0 0
    %3149 = vmatpush1.bf16.msra.mxu0 %v3132
    %3150 = vmatprep.subr.bf16.mxu0 0
    %3151 = vmatpush1.bf16.msra.mxu0 %v3133
    %3152 = vmatprep.subr.bf16.mxu0 0
    %3153 = vmatpush1.bf16.msra.mxu0 0
    %3154 = vmatprep.subr.bf16.mxu0 0
    %3155 = vmatpush1.bf16.msra.mxu0 0
    %3156 = vmatprep.subr.bf16.mxu0 0
    %3157 = vmatpush1.bf16.msra.mxu0 0
    %3158 = vmatprep.subr.bf16.mxu0 0
    %3159 = vmatpush1.bf16.msra.mxu0 0
    %3160 = vmatprep.subr.bf16.mxu0 0
    %3161 = vmatpush1.bf16.msra.mxu0 0
    %3162 = vmatprep.subr.bf16.mxu0 0
    %3163 = vmatpush1.bf16.msra.mxu0 0
    %3164 = vmatprep.subr.bf16.mxu0 0
    %3165 = vmatpush1.bf16.msra.mxu0 0
    %3166 = vmatprep.subr.bf16.mxu0 0
    %3167 = vmatpush1.bf16.msra.mxu0 0
    %3168 = vmatprep.subr.bf16.mxu0 0
    %3169 = vmatpush1.bf16.msra.mxu0 0
    %3170 = vmatprep.subr.bf16.mxu0 0
    %3171 = vmatpush1.bf16.msra.mxu0 0
    %3172 = vmatprep.subr.bf16.mxu0 0
    %3173 = vmatpush1.bf16.msra.mxu0 0
    %3174 = vmatprep.subr.bf16.mxu0 0
    %3175 = vmatpush1.bf16.msra.mxu0 0
    %3176 = vmatprep.subr.bf16.mxu0 0
    %3177 = vmatpush1.bf16.msra.mxu0 0
    %3178 = vmatprep.subr.bf16.mxu0 0
    %3179 = vmatpush1.bf16.msra.mxu0 0
    %3180 = vmatprep.mubr.bf16.mxu0 0
    %3181 = vmatmul.mubr.bf16.gmra.mrb[0].mxu0 %v3143
    %v3182 = vpop.f32.mrb[0].mxu0
    %v3183 = vadd.f32 %v3140, %v3182
    %v3184 = vpop.f32.mrb[0].mxu0
    %v3185 = vpop.f32.mrb[0].mxu0
    %v3186 = vadd.f32 %v3140, %v3185
    %v3187 = vpop.f32.mrb[0].mxu0
    %3188 = vmatprep.mubr.bf16.mxu0 0
    %3189 = vmatmul.mubr.bf16.gmra.mrb[0].mxu0 %v3146
    %v3190 = vpop.f32.mrb[0].mxu0
    %v3191 = vadd.f32 %v3140, %v3190
    %v3192 = vpop.f32.mrb[0].mxu0
    %v3193 = vpop.f32.mrb[0].mxu0
    %v3194 = vadd.f32 %v3140, %v3193
    %v3195 = vpop.f32.mrb[0].mxu0
    %3196 = vdwg.mxu0
    %v3197 = vmul.f32 %v3183, %v3183
    %v3198 = vmul.f32 %v3186, %v3186
    %v3199 = vmul.f32 %v3191, %v3191
    %v3200 = vmul.f32 %v3194, %v3194
    %v3201 = vmul.f32 %v3183, %v3197
    %v3202 = vmul.f32 %v3186, %v3198
    %v3203 = vmul.f32 %v3191, %v3199
    %v3204 = vmul.f32 %v3194, %v3200
    %v3205 = vmul.f32 %v3201, 0.044715
    %v3206 = vmul.f32 %v3202, 0.044715
    %v3207 = vmul.f32 %v3203, 0.044715
    %v3208 = vmul.f32 %v3204, 0.044715
    %v3209 = vadd.f32 %v3183, %v3205
    %v3210 = vadd.f32 %v3186, %v3206
    %v3211 = vadd.f32 %v3191, %v3207
    %v3212 = vadd.f32 %v3194, %v3208
    %v3213 = vmul.f32 %v3209, 0.7978846
    %v3214 = vmul.f32 %v3210, 0.7978846
    %v3215 = vmul.f32 %v3211, 0.7978846
    %v3216 = vmul.f32 %v3212, 0.7978846
    %v3217 = vtanh.pop %v3213
    %v3218 = vtanh.pop %v3214
    %v3219 = vtanh.pop %v3215
    %v3220 = vtanh.pop %v3216
    %v3221 = vadd.f32 %v3217, 1.0
    %v3222 = vadd.f32 %v3218, 1.0
    %v3223 = vadd.f32 %v3219, 1.0
    %v3224 = vadd.f32 %v3220, 1.0
    %v3225 = vmul.f32 %v3221, 0.5
    %v3226 = vmul.f32 %v3222, 0.5
    %v3227 = vmul.f32 %v3223, 0.5
    %v3228 = vmul.f32 %v3224, 0.5
    %v3229 = vmul.f32 %v3183, %v3225
    %v3230 = vmul.f32 %v3186, %v3226
    %v3231 = vmul.f32 %v3191, %v3227
    %v3232 = vmul.f32 %v3194, %v3228
    %v3233 = vpack.c.bf16 %v3230, %v3229
    %v3234 = vpack.c.bf16 %v3232, %v3231
    %s3235 = scalar_lea.vmem %s10, 64
    %v3236 = vld [vmem:[%s3235] sm:$0xff]
    %v3237 = vld [vmem:[%s3235 + $0x8] sm:$0xff]
    %v3238 = vld [vmem:[%s3235 + $0x10] sm:$0xff]
    %v3239 = vld [vmem:[%s3235 + $0x18] sm:$0xff]
    %v3240 = vld [vmem:[%s3235 + $0x20] sm:$0xff]
    %v3241 = vld [vmem:[%s3235 + $0x28] sm:$0xff]
    %v3242 = vld [vmem:[%s3235 + $0x30] sm:$0xff]
    %v3243 = vld [vmem:[%s3235 + $0x38] sm:$0xff]
    %v3244 = vpack.c.bf16 %v3237, %v3236
    %v3245 = vpack.c.bf16 %v3239, %v3238
    %v3246 = vpack.c.bf16 %v3241, %v3240
    %v3247 = vpack.c.bf16 %v3243, %v3242
    %s3248 = scalar_lea.vmem [#allocation10], 1
    %v3249 = vld [vmem:[%s3248] sm:$0x1]
    %v3251 = vlaneseq
    %v3252 = vshrl.u32 %v3251, 7
    %v3253 = vsub.s32 0, %v3252
    %v3254 = vrot.slane %v3249, %v3253
    %v3257 = vsel %vm1681, %v3233, 0
    %v3260 = vsel %vm1681, %v3234, 0
    %3262 = vmatprep.subr.bf16.mxu0 0
    %3263 = vmatpush1.bf16.msra.mxu0 %v3244
    %3264 = vmatprep.subr.bf16.mxu0 0
    %3265 = vmatpush1.bf16.msra.mxu0 %v3245
    %3266 = vmatprep.subr.bf16.mxu0 0
    %3267 = vmatpush1.bf16.msra.mxu0 %v3246
    %3268 = vmatprep.subr.bf16.mxu0 0
    %3269 = vmatpush1.bf16.msra.mxu0 %v3247
    %3270 = vmatprep.subr.bf16.mxu0 0
    %3271 = vmatpush1.bf16.msra.mxu0 0
    %3272 = vmatprep.subr.bf16.mxu0 0
    %3273 = vmatpush1.bf16.msra.mxu0 0
    %3274 = vmatprep.subr.bf16.mxu0 0
    %3275 = vmatpush1.bf16.msra.mxu0 0
    %3276 = vmatprep.subr.bf16.mxu0 0
    %3277 = vmatpush1.bf16.msra.mxu0 0
    %3278 = vmatprep.subr.bf16.mxu0 0
    %3279 = vmatpush1.bf16.msra.mxu0 0
    %3280 = vmatprep.subr.bf16.mxu0 0
    %3281 = vmatpush1.bf16.msra.mxu0 0
    %3282 = vmatprep.subr.bf16.mxu0 0
    %3283 = vmatpush1.bf16.msra.mxu0 0
    %3284 = vmatprep.subr.bf16.mxu0 0
    %3285 = vmatpush1.bf16.msra.mxu0 0
    %3286 = vmatprep.subr.bf16.mxu0 0
    %3287 = vmatpush1.bf16.msra.mxu0 0
    %3288 = vmatprep.subr.bf16.mxu0 0
    %3289 = vmatpush1.bf16.msra.mxu0 0
    %3290 = vmatprep.subr.bf16.mxu0 0
    %3291 = vmatpush1.bf16.msra.mxu0 0
    %3292 = vmatprep.subr.bf16.mxu0 0
    %3293 = vmatpush1.bf16.msra.mxu0 0
    %3294 = vmatprep.mubr.bf16.mxu0 0
    %3295 = vmatmul.mubr.bf16.gmra.mrb[0].mxu0 %v3257
    %v3296 = vpop.f32.mrb[0].mxu0
    %v3297 = vadd.f32 %v3254, %v3296
    %v3298 = vpop.f32.mrb[0].mxu0
    %v3299 = vpop.f32.mrb[0].mxu0
    %v3300 = vadd.f32 %v3254, %v3299
    %v3301 = vpop.f32.mrb[0].mxu0
    %3302 = vmatprep.mubr.bf16.mxu0 0
    %3303 = vmatmul.mubr.bf16.gmra.mrb[0].mxu0 %v3260
    %v3304 = vpop.f32.mrb[0].mxu0
    %v3305 = vadd.f32 %v3254, %v3304
    %v3306 = vpop.f32.mrb[0].mxu0
    %v3307 = vpop.f32.mrb[0].mxu0
    %v3308 = vadd.f32 %v3254, %v3307
    %v3309 = vpop.f32.mrb[0].mxu0
    %3310 = vdwg.mxu0
    %v3311 = vadd.f32 %v3121, %v3297
    %v3312 = vadd.f32 %v3122, %v3300
    %v3313 = vadd.f32 %v3123, %v3305
    %v3314 = vadd.f32 %v3124, %v3308
    %s3315 = scalar_lea.vmem [#allocation11], 1
    %v3316 = vld [vmem:[%s3315] sm:$0x1]
    %s3317 = scalar_lea.vmem [#allocation13], 1
    %v3318 = vld [vmem:[%s3317] sm:$0x1]
    %v3319 = vsel %vm262, %v3311, 0.0
    %3320 = vadd.xlane.f32.xlu0 %v3319
    %v3321 = vpop.xlane.xlu0 %3320
    %v3322 = vsel %vm262, %v3312, 0.0
    %3323 = vadd.xlane.f32.xlu0 %v3322
    %v3324 = vpop.xlane.xlu0 %3323
    %v3325 = vsel %vm262, %v3313, 0.0
    %3326 = vadd.xlane.f32.xlu0 %v3325
    %v3327 = vpop.xlane.xlu0 %3326
    %v3328 = vsel %vm262, %v3314, 0.0
    %3329 = vadd.xlane.f32.xlu0 %v3328
    %v3330 = vpop.xlane.xlu0 %3329
    %v3331 = vmul.f32 %v3321, %v1493
    %v3332 = vmul.f32 %v3324, %v1493
    %v3333 = vmul.f32 %v3327, %v1493
    %v3334 = vmul.f32 %v3330, %v1493
    %v3335 = vsub.f32 %v3311, %v3331
    %v3336 = vsub.f32 %v3312, %v3332
    %v3337 = vsub.f32 %v3313, %v3333
    %v3338 = vsub.f32 %v3314, %v3334
    %v3339 = vmul.f32 %v3335, %v3335
    %v3340 = vmul.f32 %v3336, %v3336
    %v3341 = vmul.f32 %v3337, %v3337
    %v3342 = vmul.f32 %v3338, %v3338
    %v3343 = vsel %vm262, %v3339, 0.0
    %3344 = vadd.xlane.f32.xlu0 %v3343
    %v3345 = vpop.xlane.xlu0 %3344
    %v3346 = vsel %vm262, %v3340, 0.0
    %3347 = vadd.xlane.f32.xlu0 %v3346
    %v3348 = vpop.xlane.xlu0 %3347
    %v3349 = vsel %vm262, %v3341, 0.0
    %3350 = vadd.xlane.f32.xlu0 %v3349
    %v3351 = vpop.xlane.xlu0 %3350
    %v3352 = vsel %vm262, %v3342, 0.0
    %3353 = vadd.xlane.f32.xlu0 %v3352
    %v3354 = vpop.xlane.xlu0 %3353
    %v3355 = vmul.f32 %v3345, %v1493
    %v3356 = vmul.f32 %v3348, %v1493
    %v3357 = vmul.f32 %v3351, %v1493
    %v3358 = vmul.f32 %v3354, %v1493
    %v3359 = vadd.f32 %v3355, 1e-05
    %v3360 = vadd.f32 %v3356, 1e-05
    %v3361 = vadd.f32 %v3357, 1e-05
    %v3362 = vadd.f32 %v3358, 1e-05
    %v3363 = vrsqrt.pop %v3359
    %v3364 = vrsqrt.pop %v3360
    %v3365 = vrsqrt.pop %v3361
    %v3366 = vrsqrt.pop %v3362
    %v3367 = vmul.f32 %v3335, %v3363
    %v3368 = vmul.f32 %v3336, %v3364
    %v3369 = vmul.f32 %v3337, %v3365
    %v3370 = vmul.f32 %v3338, %v3366
    %v3372 = vlaneseq
    %v3373 = vshrl.u32 %v3372, 7
    %v3374 = vsub.s32 0, %v3373
    %v3375 = vrot.slane %v3316, %v3374
    %v3377 = vmul.f32 %v3367, %v3375
    %v3378 = vmul.f32 %v3368, %v3375
    %v3379 = vmul.f32 %v3369, %v3375
    %v3380 = vmul.f32 %v3370, %v3375
    %v3382 = vlaneseq
    %v3383 = vshrl.u32 %v3382, 7
    %v3384 = vsub.s32 0, %v3383
    %v3385 = vrot.slane %v3318, %v3384
    %v3387 = vadd.f32 %v3377, %v3385
    %v3388 = vadd.f32 %v3378, %v3385
    %v3389 = vadd.f32 %v3379, %v3385
    %v3390 = vadd.f32 %v3380, %v3385
    %v3391 = vsel %vm262, %v3387, 0.0
    %v3392 = vsel %vm262, %v3388, 0.0
    %v3393 = vadd.f32 %v3391, %v3392
    %v3394 = vrot.slane %v3393, 4
    %v3395 = vadd.f32 %v3393, %v3394
    %v3396 = vrot.slane %v3395, 2
    %v3397 = vadd.f32 %v3395, %v3396
    %v3398 = vrot.slane %v3397, 1
    %v3399 = vadd.f32 %v3397, %v3398
    %v3400 = vsel %vm262, %v3389, 0.0
    %v3401 = vsel %vm262, %v3390, 0.0
    %v3402 = vadd.f32 %v3400, %v3401
    %v3403 = vrot.slane %v3402, 4
    %v3404 = vadd.f32 %v3402, %v3403
    %v3405 = vrot.slane %v3404, 2
    %v3406 = vadd.f32 %v3404, %v3405
    %v3407 = vrot.slane %v3406, 1
    %v3408 = vadd.f32 %v3406, %v3407
    %v3409 = vrcp.pop 16.0
    %v3410 = vmul.f32 %v3399, %v3409
    %v3411 = vmul.f32 %v3408, %v3409
    %v3412 = vld [vmem:[%s14] sm:$0x1]
    %v3413 = vld [vmem:[#allocation14] sm:$0x1]
    %vm3416 = vcmask 1041409
    %v3417 = vsel %vm3416, %v3411, %v3410
    %vm3419 = vcmask 254976
    %v3420 = vsel %vm3419, %v3417, 0.0
    %3421 = vadd.xlane.f32.xlu0 %v3420
    %v3422 = vpop.xlane.xlu0 %3421
    %v3423 = vmul.f32 %v3422, %v1493
    %v3425 = vrot.slane %v3423, 1
    %v3428 = vsub.f32 %v3410, %v3423
    %v3429 = vsub.f32 %v3411, %v3425
    %v3430 = vmul.f32 %v3428, %v3428
    %v3431 = vmul.f32 %v3429, %v3429
    %v3434 = vrot.slane %v3431, 7
    %v3435 = vsel %vm3416, %v3434, %v3430
    %v3437 = vsel %vm3419, %v3435, 0.0
    %3438 = vadd.xlane.f32.xlu0 %v3437
    %v3439 = vpop.xlane.xlu0 %3438
    %v3440 = vmul.f32 %v3439, %v1493
    %v3441 = vadd.f32 %v3440, 1e-05
    %v3442 = vrsqrt.pop %v3441
    %v3444 = vrot.slane %v3442, 1
    %v3447 = vmul.f32 %v3428, %v3442
    %v3448 = vmul.f32 %v3429, %v3444
    %v3450 = vlaneseq
    %v3451 = vshrl.u32 %v3450, 7
    %v3452 = vsub.s32 0, %v3451
    %v3453 = vrot.slane %v3412, %v3452
    %v3455 = vmul.f32 %v3447, %v3453
    %v3456 = vmul.f32 %v3448, %v3453
    %v3458 = vlaneseq
    %v3459 = vshrl.u32 %v3458, 7
    %v3460 = vsub.s32 0, %v3459
    %v3461 = vrot.slane %v3413, %v3460
    %v3463 = vadd.f32 %v3455, %v3461
    %v3464 = vadd.f32 %v3456, %v3461
    %v3465 = vld [vmem:[%s16] sm:$0xff]
    %v3466 = vld [vmem:[%s16 + $0x8] sm:$0xff]
    %v3467 = vld [vmem:[%s16 + $0x10] sm:$0xff]
    %v3468 = vld [vmem:[%s16 + $0x18] sm:$0xff]
    %v3469 = vld [vmem:[#allocation16] sm:$0x1]
    %v3471 = vlaneseq
    %v3472 = vshrl.u32 %v3471, 7
    %v3473 = vsub.s32 0, %v3472
    %v3474 = vrot.slane %v3469, %v3473
    %v3478 = vrot.slane %v3464, 7
    %v3479 = vsel %vm3416, %v3478, %v3463
    %v3480 = vsel %vm262, %v3479, 0
    %3482 = vmatprep.subr.mxu0 0.0
    %3483 = vmatpush1.msra.mxu0 %v3465
    %3484 = vmatprep.subr.mxu0 0.0
    %3485 = vmatpush1.msra.mxu0 %v3466
    %3486 = vmatprep.subr.mxu0 0.0
    %3487 = vmatpush1.msra.mxu0 %v3467
    %3488 = vmatprep.subr.mxu0 0.0
    %3489 = vmatpush1.msra.mxu0 %v3468
    %3490 = vmatprep.subr.mxu0 0.0
    %3491 = vmatpush1.msra.mxu0 0.0
    %3492 = vmatprep.subr.mxu0 0.0
    %3493 = vmatpush1.msra.mxu0 0.0
    %3494 = vmatprep.subr.mxu0 0.0
    %3495 = vmatpush1.msra.mxu0 0.0
    %3496 = vmatprep.subr.mxu0 0.0
    %3497 = vmatpush1.msra.mxu0 0.0
    %3498 = vmatprep.subr.mxu0 0.0
    %3499 = vmatpush1.msra.mxu0 0.0
    %3500 = vmatprep.subr.mxu0 0.0
    %3501 = vmatpush1.msra.mxu0 0.0
    %3502 = vmatprep.subr.mxu0 0.0
    %3503 = vmatpush1.msra.mxu0 0.0
    %3504 = vmatprep.subr.mxu0 0.0
    %3505 = vmatpush1.msra.mxu0 0.0
    %3506 = vmatprep.subr.mxu0 0.0
    %3507 = vmatpush1.msra.mxu0 0.0
    %3508 = vmatprep.subr.mxu0 0.0
    %3509 = vmatpush1.msra.mxu0 0.0
    %3510 = vmatprep.subr.mxu0 0.0
    %3511 = vmatpush1.msra.mxu0 0.0
    %3512 = vmatprep.subr.mxu0 0.0
    %3513 = vmatpush1.msra.mxu0 0.0
    %3514 = vmatprep.subr.mxu0 0.0
    %3515 = vmatpush1.msra.mxu0 0.0
    %3516 = vmatprep.subr.mxu0 0.0
    %3517 = vmatpush1.msra.mxu0 0.0
    %3518 = vmatprep.subr.mxu0 0.0
    %3519 = vmatpush1.msra.mxu0 0.0
    %3520 = vmatprep.subr.mxu0 0.0
    %3521 = vmatpush1.msra.mxu0 0.0
    %3522 = vmatprep.subr.mxu0 0.0
    %3523 = vmatpush1.msra.mxu0 0.0
    %3524 = vmatprep.subr.mxu0 0.0
    %3525 = vmatpush1.msra.mxu0 0.0
    %3526 = vmatprep.subr.mxu0 0.0
    %3527 = vmatpush1.msra.mxu0 0.0
    %3528 = vmatprep.subr.mxu0 0.0
    %3529 = vmatpush1.msra.mxu0 0.0
    %3530 = vmatprep.subr.mxu0 0.0
    %3531 = vmatpush1.msra.mxu0 0.0
    %3532 = vmatprep.subr.mxu0 0.0
    %3533 = vmatpush1.msra.mxu0 0.0
    %3534 = vmatprep.subr.mxu0 0.0
    %3535 = vmatpush1.msra.mxu0 0.0
    %3536 = vmatprep.subr.mxu0 0.0
    %3537 = vmatpush1.msra.mxu0 0.0
    %3538 = vmatprep.subr.mxu0 0.0
    %3539 = vmatpush1.msra.mxu0 0.0
    %3540 = vmatprep.subr.mxu0 0.0
    %3541 = vmatpush1.msra.mxu0 0.0
    %3542 = vmatprep.subr.mxu0 0.0
    %3543 = vmatpush1.msra.mxu0 0.0
    %3544 = vmatprep.subr.mxu0 0.0
    %3545 = vmatpush1.msra.mxu0 0.0
    %3546 = vmatprep.mubr.f32.mxu0 0.0
    %3547 = vmatmul.mubr.f32.gmra.mrb[0].mxu0 %v3480
    %v3548 = vpop.f32.mrb[0].mxu0
    %v3549 = vadd.f32 %v3474, %v3548
    %v3550 = vpop.f32.mrb[0].mxu0
    %3551 = vdwg.mxu0
    %v3552 = vxor.u32 %v3549, 2147483648
    %v3553 = vmul.f32 %v3552, 1.442695
    %v3554 = vpow.pop %v3553
    %v3555 = vadd.f32 %v3554, 1.0
    %v3556 = vrcp.pop %v3555
    %v3557 = vmul.f32 1.0, %v3556
    %v3558 = vmul.f32 %v3549, %v3557
    %v3559 = vld [vmem:[%s18] sm:$0xff]
    %v3560 = vld [vmem:[%s18 + $0x8] sm:$0xff]
    %v3561 = vld [vmem:[#allocation2] sm:$0x1]
    %v3563 = vlaneseq
    %v3564 = vshrl.u32 %v3563, 7
    %v3565 = vsub.s32 0, %v3564
    %v3566 = vrot.slane %v3561, %v3565
    %v3569 = vsel %vm554, %v3558, 0
    %3571 = vmatprep.subr.mxu0 0.0
    %3572 = vmatpush1.msra.mxu0 %v3559
    %3573 = vmatprep.subr.mxu0 0.0
    %3574 = vmatpush1.msra.mxu0 %v3560
    %3575 = vmatprep.subr.mxu0 0.0
    %3576 = vmatpush1.msra.mxu0 0.0
    %3577 = vmatprep.subr.mxu0 0.0
    %3578 = vmatpush1.msra.mxu0 0.0
    %3579 = vmatprep.subr.mxu0 0.0
    %3580 = vmatpush1.msra.mxu0 0.0
    %3581 = vmatprep.subr.mxu0 0.0
    %3582 = vmatpush1.msra.mxu0 0.0
    %3583 = vmatprep.subr.mxu0 0.0
    %3584 = vmatpush1.msra.mxu0 0.0
    %3585 = vmatprep.subr.mxu0 0.0
    %3586 = vmatpush1.msra.mxu0 0.0
    %3587 = vmatprep.subr.mxu0 0.0
    %3588 = vmatpush1.msra.mxu0 0.0
    %3589 = vmatprep.subr.mxu0 0.0
    %3590 = vmatpush1.msra.mxu0 0.0
    %3591 = vmatprep.subr.mxu0 0.0
    %3592 = vmatpush1.msra.mxu0 0.0
    %3593 = vmatprep.subr.mxu0 0.0
    %3594 = vmatpush1.msra.mxu0 0.0
    %3595 = vmatprep.subr.mxu0 0.0
    %3596 = vmatpush1.msra.mxu0 0.0
    %3597 = vmatprep.subr.mxu0 0.0
    %3598 = vmatpush1.msra.mxu0 0.0
    %3599 = vmatprep.subr.mxu0 0.0
    %3600 = vmatpush1.msra.mxu0 0.0
    %3601 = vmatprep.subr.mxu0 0.0
    %3602 = vmatpush1.msra.mxu0 0.0
    %3603 = vmatprep.subr.mxu0 0.0
    %3604 = vmatpush1.msra.mxu0 0.0
    %3605 = vmatprep.subr.mxu0 0.0
    %3606 = vmatpush1.msra.mxu0 0.0
    %3607 = vmatprep.subr.mxu0 0.0
    %3608 = vmatpush1.msra.mxu0 0.0
    %3609 = vmatprep.subr.mxu0 0.0
    %3610 = vmatpush1.msra.mxu0 0.0
    %3611 = vmatprep.subr.mxu0 0.0
    %3612 = vmatpush1.msra.mxu0 0.0
    %3613 = vmatprep.subr.mxu0 0.0
    %3614 = vmatpush1.msra.mxu0 0.0
    %3615 = vmatprep.subr.mxu0 0.0
    %3616 = vmatpush1.msra.mxu0 0.0
    %3617 = vmatprep.subr.mxu0 0.0
    %3618 = vmatpush1.msra.mxu0 0.0
    %3619 = vmatprep.subr.mxu0 0.0
    %3620 = vmatpush1.msra.mxu0 0.0
    %3621 = vmatprep.subr.mxu0 0.0
    %3622 = vmatpush1.msra.mxu0 0.0
    %3623 = vmatprep.subr.mxu0 0.0
    %3624 = vmatpush1.msra.mxu0 0.0
    %3625 = vmatprep.subr.mxu0 0.0
    %3626 = vmatpush1.msra.mxu0 0.0
    %3627 = vmatprep.subr.mxu0 0.0
    %3628 = vmatpush1.msra.mxu0 0.0
    %3629 = vmatprep.subr.mxu0 0.0
    %3630 = vmatpush1.msra.mxu0 0.0
    %3631 = vmatprep.subr.mxu0 0.0
    %3632 = vmatpush1.msra.mxu0 0.0
    %3633 = vmatprep.subr.mxu0 0.0
    %3634 = vmatpush1.msra.mxu0 0.0
    %3635 = vmatprep.mubr.f32.mxu0 0.0
    %3636 = vmatmul.mubr.f32.gmra.mrb[0].mxu0 %v3569
    %v3637 = vpop.f32.mrb[0].mxu0
    %v3638 = vadd.f32 %v3566, %v3637
    %v3639 = vpop.f32.mrb[0].mxu0
    %3640 = vdwg.mxu0
    %vm3641 = vcmask 1024
    %3642 = vst.msk [vmem:[%s20] sm:$0x3] %vm3641, %v3638
    // Predicated region
    $region118: #{wave_function_forward.1} parent=1 // pred_check
      _
    $region119: #{wave_function_forward.1} parent=1 // pred_check_branch
      %3644 = sbr.rel (0) target = $region121
    $region120: #{wave_function_forward.1} parent=1 // pred_region
      _
    $region121: #{wave_function_forward.1} parent=1 // pred_fallthru
      _
    // Predicated region
    $region122: #{wave_function_forward.1} parent=1 // pred_check
      _
    $region123: #{wave_function_forward.1} parent=1 // pred_check_branch
      %3646 = sbr.rel (0) target = $region125
    $region124: #{wave_function_forward.1} parent=1 // pred_region
      _
    $region125: #{wave_function_forward.1} parent=1 // pred_fallthru
      _
    %3647 = vsyncpa [#allocation4], 1
    %3648 = vsyncpa [#allocation6], 1
    %3649 = vsyncpa [#allocation9], 1
    %3650 = vsyncpa [#allocation12], 1
    %3651 = vsyncpa [#allocation15], 1

</llo_original>
